<compile_context>
chip_gen: v7x
topology: tpu7x:2x2x1
jax: 0.10.0
libtpu: 0.0.40
codegen_flags: <defaults>
</compile_context>

<pallas_src>
import functools

import jax
import jax.numpy as jnp
from jax import lax
from jax.experimental import pallas as pl
from jax.experimental.pallas import tpu as pltpu

_LANE = 128
_NEG = -1.0e30  # pre-ReLU pad value: relu(scale * _NEG + shift) == 0 exactly


def _round_up(x, m):
    return ((x + m - 1) // m) * m


def _conv_a_kernel(tk, kh_sz, kw_sz, h_out, w_out,
                   x_ref, w_ref, y_ref, st_ref):
    """Tx3x3 conv (dense stride-1, input pre-padded) for one (n, t) slab.

    x_ref : (T_pad, H_pad, W_pad, Cin_p)   f32, resident per batch element
    w_ref : (tk*kh*kw, Cin_p, Cout_p)      bf16, tap-major, x @ W layout
    y_ref : (h_out, w_out, Cout_p)         f32
    st_ref: (2, Cout_p)                    f32, per-block [sum, sum_sq]
    """
    t = pl.program_id(1)
    cout = y_ref.shape[-1]
    acc = jnp.zeros((h_out * w_out, cout), jnp.float32)
    for kt in range(tk):
        slab = x_ref[t + kt]                       # (H_pad, W_pad, Cin_p) f32
        for kh in range(kh_sz):
            for kw in range(kw_sz):
                patch = slab[kh:kh + h_out, kw:kw + w_out, :]
                patch = patch.reshape(h_out * w_out, -1).astype(jnp.bfloat16)
                tap = (kt * kh_sz + kh) * kw_sz + kw
                acc = acc + jnp.dot(patch, w_ref[tap],
                                    preferred_element_type=jnp.float32)
    y_ref[...] = acc.reshape(h_out, w_out, cout)
    st_ref[0:1, :] = jnp.sum(acc, axis=0, keepdims=True)
    st_ref[1:2, :] = jnp.sum(acc * acc, axis=0, keepdims=True)


def _bn_relu_conv_b_kernel(kh_sz, kw_sz, h_out, w_out,
                           y1_ref, s_ref, b_ref, w_ref, y_ref, st_ref):
    """Fused BN1-affine + ReLU + 1x3x3 conv for one (n, t) slab.

    y1_ref: (h_out+2ph, w_out+2pw, C_p) f32, spatial border pre-filled with
            _NEG so relu(scale*_NEG + shift) == 0 (== zero-pad after BN+ReLU).
    s_ref, b_ref: (1, C_p) f32  per-channel BN1 scale / shift
    w_ref : (kh*kw, C_p, C_p)   bf16
    """
    cp = y_ref.shape[-1]
    r = jnp.maximum(y1_ref[...] * s_ref[...] + b_ref[...], 0.0)   # BN1 + ReLU
    acc = jnp.zeros((h_out * w_out, cp), jnp.float32)
    for kh in range(kh_sz):
        for kw in range(kw_sz):
            patch = r[kh:kh + h_out, kw:kw + w_out, :]
            patch = patch.reshape(h_out * w_out, -1).astype(jnp.bfloat16)
            acc = acc + jnp.dot(patch, w_ref[kh * kw_sz + kw],
                                preferred_element_type=jnp.float32)
    y_ref[...] = acc.reshape(h_out, w_out, cp)
    st_ref[0:1, :] = jnp.sum(acc, axis=0, keepdims=True)
    st_ref[1:2, :] = jnp.sum(acc * acc, axis=0, keepdims=True)


def basic_transform_forward(x, w_a, w_b, temp_kernel_size, stride, eps=1e-5):
    """BasicTransform forward: x NCTHW f32, torch-layout weights, returns NCTHW."""
    N, Cin, T, H, W = x.shape
    Cout = w_a.shape[0]
    tk, ka_h, ka_w = w_a.shape[2], w_a.shape[3], w_a.shape[4]
    pad_t, pad_h, pad_w = tk // 2, ka_h // 2, ka_w // 2

    cin_p = _round_up(Cin, _LANE)
    cout_p = _round_up(Cout, _LANE)

    cparams = pltpu.CompilerParams(
        dimension_semantics=("parallel", "parallel"),
        vmem_limit_bytes=32 * 1024 * 1024)   # tiny tiles; safe on v5e/v6e/v7x

    # ------------------------- conv a -------------------------
    x_cl = jnp.transpose(x, (0, 2, 3, 4, 1))                 # (N,T,H,W,Cin)
    x_cl = jnp.pad(x_cl, ((0, 0), (pad_t, pad_t), (pad_h, pad_h),
                          (pad_w, pad_w), (0, cin_p - Cin)))
    T_pad, H_pad, W_pad = T + 2 * pad_t, H + 2 * pad_h, W + 2 * pad_w
    T1 = T_pad - tk + 1
    H1 = H_pad - ka_h + 1                                    # dense (stride-1)
    W1 = W_pad - ka_w + 1

    wa = jnp.transpose(w_a, (2, 3, 4, 1, 0)).reshape(tk * ka_h * ka_w, Cin, Cout)
    wa = jnp.pad(wa, ((0, 0), (0, cin_p - Cin), (0, cout_p - Cout)))
    wa = wa.astype(jnp.bfloat16)

    kernel_a = functools.partial(_conv_a_kernel, tk, ka_h, ka_w, H1, W1)
    y1, st1 = pl.pallas_call(
        kernel_a,
        grid=(N, T1),
        in_specs=[
            pl.BlockSpec((None, T_pad, H_pad, W_pad, cin_p),
                         lambda n, t: (n, 0, 0, 0, 0)),
            pl.BlockSpec((tk * ka_h * ka_w, cin_p, cout_p),
                         lambda n, t: (0, 0, 0)),
        ],
        out_specs=(
            pl.BlockSpec((None, None, H1, W1, cout_p),
                         lambda n, t: (n, t, 0, 0, 0)),
            pl.BlockSpec((None, None, 2, cout_p),
                         lambda n, t: (n, t, 0, 0)),
        ),
        out_shape=(
            jax.ShapeDtypeStruct((N, T1, H1, W1, cout_p), jnp.float32),
            jax.ShapeDtypeStruct((N, T1, 2, cout_p), jnp.float32),
        ),
        compiler_params=cparams,
    )(x_cl, wa)

    if stride > 1:
        # Stride-s conv == subsampled stride-1 conv (same padding). Stats must
        # then be over the strided grid, so recompute them here.
        # TODO(synk): move the stride into the kernel via strided tap slices
        # and emit strided stats directly instead of dense+subsample.
        y1 = y1[:, :, ::stride, ::stride, :]
        csum = jnp.sum(y1, axis=(0, 1, 2, 3))
        csq = jnp.sum(y1 * y1, axis=(0, 1, 2, 3))
    else:
        csum = jnp.sum(st1[:, :, 0, :], axis=(0, 1))
        csq = jnp.sum(st1[:, :, 1, :], axis=(0, 1))

    _, _, H2, W2, _ = y1.shape
    cnt1 = N * T1 * H2 * W2
    mean1 = csum / cnt1
    var1 = jnp.maximum(csq / cnt1 - mean1 * mean1, 0.0)     # biased (training BN)
    scale1 = lax.rsqrt(var1 + eps)                          # gamma = 1
    shift1 = -mean1 * scale1                                # beta  = 0

    # ------------------------- BN1 + ReLU + conv b -------------------------
    kb_h, kb_w = w_b.shape[3], w_b.shape[4]
    pb_h, pb_w = kb_h // 2, kb_w // 2
    y1_pad = jnp.pad(y1, ((0, 0), (0, 0), (pb_h, pb_h), (pb_w, pb_w), (0, 0)),
                     constant_values=_NEG)
    wb = jnp.transpose(w_b, (2, 3, 4, 1, 0)).reshape(kb_h * kb_w, Cout, Cout)
    wb = jnp.pad(wb, ((0, 0), (0, cout_p - Cout), (0, cout_p - Cout)))
    wb = wb.astype(jnp.bfloat16)

    kernel_b = functools.partial(_bn_relu_conv_b_kernel, kb_h, kb_w, H2, W2)
    y2, st2 = pl.pallas_call(
        kernel_b,
        grid=(N, T1),
        in_specs=[
            pl.BlockSpec((None, None, H2 + 2 * pb_h, W2 + 2 * pb_w, cout_p),
                         lambda n, t: (n, t, 0, 0, 0)),
            pl.BlockSpec((1, cout_p), lambda n, t: (0, 0)),
            pl.BlockSpec((1, cout_p), lambda n, t: (0, 0)),
            pl.BlockSpec((kb_h * kb_w, cout_p, cout_p), lambda n, t: (0, 0, 0)),
        ],
        out_specs=(
            pl.BlockSpec((None, None, H2, W2, cout_p),
                         lambda n, t: (n, t, 0, 0, 0)),
            pl.BlockSpec((None, None, 2, cout_p),
                         lambda n, t: (n, t, 0, 0)),
        ),
        out_shape=(
            jax.ShapeDtypeStruct((N, T1, H2, W2, cout_p), jnp.float32),
            jax.ShapeDtypeStruct((N, T1, 2, cout_p), jnp.float32),
        ),
        compiler_params=cparams,
    )(y1_pad, scale1.reshape(1, cout_p), shift1.reshape(1, cout_p), wb)

    # ---- BN2: finalize from kernel-emitted stats, apply as cheap JAX glue ----
    cnt2 = N * T1 * H2 * W2
    sum2 = jnp.sum(st2[:, :, 0, :], axis=(0, 1))
    sq2 = jnp.sum(st2[:, :, 1, :], axis=(0, 1))
    mean2 = sum2 / cnt2
    var2 = jnp.maximum(sq2 / cnt2 - mean2 * mean2, 0.0)
    scale2 = lax.rsqrt(var2 + eps)
    shift2 = -mean2 * scale2
    out = y2 * scale2 + shift2
    out = out[..., :Cout]                                    # drop channel pad
    return jnp.transpose(out, (0, 4, 1, 2, 3))               # back to NCTHW


# ----------------------------- plain-JAX reference -----------------------------
def _conv3d_ref(x, w, stride_thw, pad_thw):
    return lax.conv_general_dilated(
        x, w, window_strides=stride_thw,
        padding=[(p, p) for p in pad_thw],
        dimension_numbers=("NCDHW", "OIDHW", "NCDHW"))


def _bn_ref(y, eps):
    mean = jnp.mean(y, axis=(0, 2, 3, 4), keepdims=True)
    var = jnp.mean((y - mean) ** 2, axis=(0, 2, 3, 4), keepdims=True)
    return (y - mean) / jnp.sqrt(var + eps)


def basic_transform_reference(x, w_a, w_b, temp_kernel_size, stride, eps=1e-5):
    y = _conv3d_ref(x, w_a, (1, stride, stride), (temp_kernel_size // 2, 1, 1))
    y = jnp.maximum(_bn_ref(y, eps), 0.0)
    y = _conv3d_ref(y, w_b, (1, 1, 1), (0, 1, 1))
    return _bn_ref(y, eps)


if __name__ == "__main__":
    N, CIN, COUT, T, H, W = 2, 16, 32, 4, 8, 8
    TEMP_K, STRIDE = 3, 1

    key = jax.random.PRNGKey(0)
    kx, ka, kb = jax.random.split(key, 3)
    x = jax.random.normal(kx, (N, CIN, T, H, W), dtype=jnp.float32)
    w_a = 0.1 * jax.random.normal(ka, (COUT, CIN, TEMP_K, 3, 3), dtype=jnp.float32)
    w_b = 0.1 * jax.random.normal(kb, (COUT, COUT, 1, 3, 3), dtype=jnp.float32)

    out = basic_transform_forward(x, w_a, w_b, TEMP_K, STRIDE)
    out = jax.block_until_ready(out)

    ref = basic_transform_reference(x, w_a, w_b, TEMP_K, STRIDE)
    assert out.shape == ref.shape, (out.shape, ref.shape)
    max_err = float(jnp.max(jnp.abs(out - ref)))
    # bf16 MXU inputs with f32 accumulation on BN-normalized outputs -> ~1e-2 err
    assert jnp.allclose(out, ref, atol=5e-2, rtol=5e-2), (
        f"mismatch vs reference: max abs err {max_err}")
    print("KERNEL_OK")
</pallas_src>

<mosaic_0001>
module attributes {stable_mosaic.version = 11 : i64} {
  func.func @_conv_a_kernel(%arg0: i32, %arg1: i32, %arg2: memref<1x6x10x10x128xf32, #tpu.memory_space<vmem>>, %arg3: memref<27x128x128xbf16, #tpu.memory_space<vmem>>, %arg4: memref<1x1x8x8x128xf32, #tpu.memory_space<vmem>>, %arg5: memref<1x1x2x128xf32, #tpu.memory_space<vmem>>) attributes {dimension_semantics = [#tpu.dimension_semantics<parallel>, #tpu.dimension_semantics<parallel>], iteration_bounds = array<i64: 2, 4>, scalar_prefetch = 0 : i64, scratch_operands = 0 : i64, tpu.core_type = #tpu.core_type<tc>, window_params = [{transform_indices = @transform_0, window_bounds = array<i64: 1, 6, 10, 10, 128>}, {pipeline_mode = #tpu.pipeline_mode<synchronous>, transform_indices = @transform_1, window_bounds = array<i64: 27, 128, 128>}, {transform_indices = @transform_2, window_bounds = array<i64: 1, 1, 8, 8, 128>}, {transform_indices = @transform_3, window_bounds = array<i64: 1, 1, 2, 128>}]} {
    %cst = arith.constant 0.000000e+00 : f32
    %0 = vector.broadcast %cst : f32 to vector<64x128xf32>
    %c0_i32 = arith.constant 0 : i32
    %1 = arith.addi %arg1, %c0_i32 : i32
    %c0 = arith.constant 0 : index
    %2 = arith.index_cast %1 : i32 to index
    %c0_0 = arith.constant 0 : index
    %c0_1 = arith.constant 0 : index
    %c0_2 = arith.constant 0 : index
    %3 = vector.load %arg2[%c0, %2, %c0_0, %c0_1, %c0_2] : memref<1x6x10x10x128xf32, #tpu.memory_space<vmem>>, vector<1x1x10x10x128xf32>
    %4 = vector.shape_cast %3 : vector<1x1x10x10x128xf32> to vector<10x10x128xf32>
    %5 = vector.extract_strided_slice %4 {offsets = [0, 0, 0], sizes = [8, 8, 128], strides = [1, 1, 1]} : vector<10x10x128xf32> to vector<8x8x128xf32>
    %6 = vector.shape_cast %5 : vector<8x8x128xf32> to vector<64x128xf32>
    %7 = arith.truncf %6 : vector<64x128xf32> to vector<64x128xbf16>
    %c0_3 = arith.constant 0 : index
    %c0_4 = arith.constant 0 : index
    %c0_5 = arith.constant 0 : index
    %8 = vector.load %arg3[%c0_3, %c0_4, %c0_5] : memref<27x128x128xbf16, #tpu.memory_space<vmem>>, vector<1x128x128xbf16>
    %9 = vector.shape_cast %8 : vector<1x128x128xbf16> to vector<128x128xbf16>
    %cst_6 = arith.constant dense<0.000000e+00> : vector<64x128xf32>
    %10 = tpu.matmul %7, %9, %cst_6 {dimension_numbers = #tpu.dot_dimension_numbers<[1], [0], [0], [1], [0, 0, 1, 1], [], []>} : vector<64x128xbf16>, vector<128x128xbf16>, vector<64x128xf32> -> vector<64x128xf32>
    %11 = arith.addf %0, %10 : vector<64x128xf32>
    %12 = vector.extract_strided_slice %4 {offsets = [0, 1, 0], sizes = [8, 8, 128], strides = [1, 1, 1]} : vector<10x10x128xf32> to vector<8x8x128xf32>
    %13 = vector.shape_cast %12 : vector<8x8x128xf32> to vector<64x128xf32>
    %14 = arith.truncf %13 : vector<64x128xf32> to vector<64x128xbf16>
    %c1 = arith.constant 1 : index
    %c0_7 = arith.constant 0 : index
    %c0_8 = arith.constant 0 : index
    %15 = vector.load %arg3[%c1, %c0_7, %c0_8] : memref<27x128x128xbf16, #tpu.memory_space<vmem>>, vector<1x128x128xbf16>
    %16 = vector.shape_cast %15 : vector<1x128x128xbf16> to vector<128x128xbf16>
    %cst_9 = arith.constant dense<0.000000e+00> : vector<64x128xf32>
    %17 = tpu.matmul %14, %16, %cst_9 {dimension_numbers = #tpu.dot_dimension_numbers<[1], [0], [0], [1], [0, 0, 1, 1], [], []>} : vector<64x128xbf16>, vector<128x128xbf16>, vector<64x128xf32> -> vector<64x128xf32>
    %18 = arith.addf %11, %17 : vector<64x128xf32>
    %19 = vector.extract_strided_slice %4 {offsets = [0, 2, 0], sizes = [8, 8, 128], strides = [1, 1, 1]} : vector<10x10x128xf32> to vector<8x8x128xf32>
    %20 = vector.shape_cast %19 : vector<8x8x128xf32> to vector<64x128xf32>
    %21 = arith.truncf %20 : vector<64x128xf32> to vector<64x128xbf16>
    %c2 = arith.constant 2 : index
    %c0_10 = arith.constant 0 : index
    %c0_11 = arith.constant 0 : index
    %22 = vector.load %arg3[%c2, %c0_10, %c0_11] : memref<27x128x128xbf16, #tpu.memory_space<vmem>>, vector<1x128x128xbf16>
    %23 = vector.shape_cast %22 : vector<1x128x128xbf16> to vector<128x128xbf16>
    %cst_12 = arith.constant dense<0.000000e+00> : vector<64x128xf32>
    %24 = tpu.matmul %21, %23, %cst_12 {dimension_numbers = #tpu.dot_dimension_numbers<[1], [0], [0], [1], [0, 0, 1, 1], [], []>} : vector<64x128xbf16>, vector<128x128xbf16>, vector<64x128xf32> -> vector<64x128xf32>
    %25 = arith.addf %18, %24 : vector<64x128xf32>
    %26 = vector.extract_strided_slice %4 {offsets = [1, 0, 0], sizes = [8, 8, 128], strides = [1, 1, 1]} : vector<10x10x128xf32> to vector<8x8x128xf32>
    %27 = vector.shape_cast %26 : vector<8x8x128xf32> to vector<64x128xf32>
    %28 = arith.truncf %27 : vector<64x128xf32> to vector<64x128xbf16>
    %c3 = arith.constant 3 : index
    %c0_13 = arith.constant 0 : index
    %c0_14 = arith.constant 0 : index
    %29 = vector.load %arg3[%c3, %c0_13, %c0_14] : memref<27x128x128xbf16, #tpu.memory_space<vmem>>, vector<1x128x128xbf16>
    %30 = vector.shape_cast %29 : vector<1x128x128xbf16> to vector<128x128xbf16>
    %cst_15 = arith.constant dense<0.000000e+00> : vector<64x128xf32>
    %31 = tpu.matmul %28, %30, %cst_15 {dimension_numbers = #tpu.dot_dimension_numbers<[1], [0], [0], [1], [0, 0, 1, 1], [], []>} : vector<64x128xbf16>, vector<128x128xbf16>, vector<64x128xf32> -> vector<64x128xf32>
    %32 = arith.addf %25, %31 : vector<64x128xf32>
    %33 = vector.extract_strided_slice %4 {offsets = [1, 1, 0], sizes = [8, 8, 128], strides = [1, 1, 1]} : vector<10x10x128xf32> to vector<8x8x128xf32>
    %34 = vector.shape_cast %33 : vector<8x8x128xf32> to vector<64x128xf32>
    %35 = arith.truncf %34 : vector<64x128xf32> to vector<64x128xbf16>
    %c4 = arith.constant 4 : index
    %c0_16 = arith.constant 0 : index
    %c0_17 = arith.constant 0 : index
    %36 = vector.load %arg3[%c4, %c0_16, %c0_17] : memref<27x128x128xbf16, #tpu.memory_space<vmem>>, vector<1x128x128xbf16>
    %37 = vector.shape_cast %36 : vector<1x128x128xbf16> to vector<128x128xbf16>
    %cst_18 = arith.constant dense<0.000000e+00> : vector<64x128xf32>
    %38 = tpu.matmul %35, %37, %cst_18 {dimension_numbers = #tpu.dot_dimension_numbers<[1], [0], [0], [1], [0, 0, 1, 1], [], []>} : vector<64x128xbf16>, vector<128x128xbf16>, vector<64x128xf32> -> vector<64x128xf32>
    %39 = arith.addf %32, %38 : vector<64x128xf32>
    %40 = vector.extract_strided_slice %4 {offsets = [1, 2, 0], sizes = [8, 8, 128], strides = [1, 1, 1]} : vector<10x10x128xf32> to vector<8x8x128xf32>
    %41 = vector.shape_cast %40 : vector<8x8x128xf32> to vector<64x128xf32>
    %42 = arith.truncf %41 : vector<64x128xf32> to vector<64x128xbf16>
    %c5 = arith.constant 5 : index
    %c0_19 = arith.constant 0 : index
    %c0_20 = arith.constant 0 : index
    %43 = vector.load %arg3[%c5, %c0_19, %c0_20] : memref<27x128x128xbf16, #tpu.memory_space<vmem>>, vector<1x128x128xbf16>
    %44 = vector.shape_cast %43 : vector<1x128x128xbf16> to vector<128x128xbf16>
    %cst_21 = arith.constant dense<0.000000e+00> : vector<64x128xf32>
    %45 = tpu.matmul %42, %44, %cst_21 {dimension_numbers = #tpu.dot_dimension_numbers<[1], [0], [0], [1], [0, 0, 1, 1], [], []>} : vector<64x128xbf16>, vector<128x128xbf16>, vector<64x128xf32> -> vector<64x128xf32>
    %46 = arith.addf %39, %45 : vector<64x128xf32>
    %47 = vector.extract_strided_slice %4 {offsets = [2, 0, 0], sizes = [8, 8, 128], strides = [1, 1, 1]} : vector<10x10x128xf32> to vector<8x8x128xf32>
    %48 = vector.shape_cast %47 : vector<8x8x128xf32> to vector<64x128xf32>
    %49 = arith.truncf %48 : vector<64x128xf32> to vector<64x128xbf16>
    %c6 = arith.constant 6 : index
    %c0_22 = arith.constant 0 : index
    %c0_23 = arith.constant 0 : index
    %50 = vector.load %arg3[%c6, %c0_22, %c0_23] : memref<27x128x128xbf16, #tpu.memory_space<vmem>>, vector<1x128x128xbf16>
    %51 = vector.shape_cast %50 : vector<1x128x128xbf16> to vector<128x128xbf16>
    %cst_24 = arith.constant dense<0.000000e+00> : vector<64x128xf32>
    %52 = tpu.matmul %49, %51, %cst_24 {dimension_numbers = #tpu.dot_dimension_numbers<[1], [0], [0], [1], [0, 0, 1, 1], [], []>} : vector<64x128xbf16>, vector<128x128xbf16>, vector<64x128xf32> -> vector<64x128xf32>
    %53 = arith.addf %46, %52 : vector<64x128xf32>
    %54 = vector.extract_strided_slice %4 {offsets = [2, 1, 0], sizes = [8, 8, 128], strides = [1, 1, 1]} : vector<10x10x128xf32> to vector<8x8x128xf32>
    %55 = vector.shape_cast %54 : vector<8x8x128xf32> to vector<64x128xf32>
    %56 = arith.truncf %55 : vector<64x128xf32> to vector<64x128xbf16>
    %c7 = arith.constant 7 : index
    %c0_25 = arith.constant 0 : index
    %c0_26 = arith.constant 0 : index
    %57 = vector.load %arg3[%c7, %c0_25, %c0_26] : memref<27x128x128xbf16, #tpu.memory_space<vmem>>, vector<1x128x128xbf16>
    %58 = vector.shape_cast %57 : vector<1x128x128xbf16> to vector<128x128xbf16>
    %cst_27 = arith.constant dense<0.000000e+00> : vector<64x128xf32>
    %59 = tpu.matmul %56, %58, %cst_27 {dimension_numbers = #tpu.dot_dimension_numbers<[1], [0], [0], [1], [0, 0, 1, 1], [], []>} : vector<64x128xbf16>, vector<128x128xbf16>, vector<64x128xf32> -> vector<64x128xf32>
    %60 = arith.addf %53, %59 : vector<64x128xf32>
    %61 = vector.extract_strided_slice %4 {offsets = [2, 2, 0], sizes = [8, 8, 128], strides = [1, 1, 1]} : vector<10x10x128xf32> to vector<8x8x128xf32>
    %62 = vector.shape_cast %61 : vector<8x8x128xf32> to vector<64x128xf32>
    %63 = arith.truncf %62 : vector<64x128xf32> to vector<64x128xbf16>
    %c8 = arith.constant 8 : index
    %c0_28 = arith.constant 0 : index
    %c0_29 = arith.constant 0 : index
    %64 = vector.load %arg3[%c8, %c0_28, %c0_29] : memref<27x128x128xbf16, #tpu.memory_space<vmem>>, vector<1x128x128xbf16>
    %65 = vector.shape_cast %64 : vector<1x128x128xbf16> to vector<128x128xbf16>
    %cst_30 = arith.constant dense<0.000000e+00> : vector<64x128xf32>
    %66 = tpu.matmul %63, %65, %cst_30 {dimension_numbers = #tpu.dot_dimension_numbers<[1], [0], [0], [1], [0, 0, 1, 1], [], []>} : vector<64x128xbf16>, vector<128x128xbf16>, vector<64x128xf32> -> vector<64x128xf32>
    %67 = arith.addf %60, %66 : vector<64x128xf32>
    %c1_i32 = arith.constant 1 : i32
    %68 = arith.addi %arg1, %c1_i32 : i32
    %c0_31 = arith.constant 0 : index
    %69 = arith.index_cast %68 : i32 to index
    %c0_32 = arith.constant 0 : index
    %c0_33 = arith.constant 0 : index
    %c0_34 = arith.constant 0 : index
    %70 = vector.load %arg2[%c0_31, %69, %c0_32, %c0_33, %c0_34] : memref<1x6x10x10x128xf32, #tpu.memory_space<vmem>>, vector<1x1x10x10x128xf32>
    %71 = vector.shape_cast %70 : vector<1x1x10x10x128xf32> to vector<10x10x128xf32>
    %72 = vector.extract_strided_slice %71 {offsets = [0, 0, 0], sizes = [8, 8, 128], strides = [1, 1, 1]} : vector<10x10x128xf32> to vector<8x8x128xf32>
    %73 = vector.shape_cast %72 : vector<8x8x128xf32> to vector<64x128xf32>
    %74 = arith.truncf %73 : vector<64x128xf32> to vector<64x128xbf16>
    %c9 = arith.constant 9 : index
    %c0_35 = arith.constant 0 : index
    %c0_36 = arith.constant 0 : index
    %75 = vector.load %arg3[%c9, %c0_35, %c0_36] : memref<27x128x128xbf16, #tpu.memory_space<vmem>>, vector<1x128x128xbf16>
    %76 = vector.shape_cast %75 : vector<1x128x128xbf16> to vector<128x128xbf16>
    %cst_37 = arith.constant dense<0.000000e+00> : vector<64x128xf32>
    %77 = tpu.matmul %74, %76, %cst_37 {dimension_numbers = #tpu.dot_dimension_numbers<[1], [0], [0], [1], [0, 0, 1, 1], [], []>} : vector<64x128xbf16>, vector<128x128xbf16>, vector<64x128xf32> -> vector<64x128xf32>
    %78 = arith.addf %67, %77 : vector<64x128xf32>
    %79 = vector.extract_strided_slice %71 {offsets = [0, 1, 0], sizes = [8, 8, 128], strides = [1, 1, 1]} : vector<10x10x128xf32> to vector<8x8x128xf32>
    %80 = vector.shape_cast %79 : vector<8x8x128xf32> to vector<64x128xf32>
    %81 = arith.truncf %80 : vector<64x128xf32> to vector<64x128xbf16>
    %c10 = arith.constant 10 : index
    %c0_38 = arith.constant 0 : index
    %c0_39 = arith.constant 0 : index
    %82 = vector.load %arg3[%c10, %c0_38, %c0_39] : memref<27x128x128xbf16, #tpu.memory_space<vmem>>, vector<1x128x128xbf16>
    %83 = vector.shape_cast %82 : vector<1x128x128xbf16> to vector<128x128xbf16>
    %cst_40 = arith.constant dense<0.000000e+00> : vector<64x128xf32>
    %84 = tpu.matmul %81, %83, %cst_40 {dimension_numbers = #tpu.dot_dimension_numbers<[1], [0], [0], [1], [0, 0, 1, 1], [], []>} : vector<64x128xbf16>, vector<128x128xbf16>, vector<64x128xf32> -> vector<64x128xf32>
    %85 = arith.addf %78, %84 : vector<64x128xf32>
    %86 = vector.extract_strided_slice %71 {offsets = [0, 2, 0], sizes = [8, 8, 128], strides = [1, 1, 1]} : vector<10x10x128xf32> to vector<8x8x128xf32>
    %87 = vector.shape_cast %86 : vector<8x8x128xf32> to vector<64x128xf32>
    %88 = arith.truncf %87 : vector<64x128xf32> to vector<64x128xbf16>
    %c11 = arith.constant 11 : index
    %c0_41 = arith.constant 0 : index
    %c0_42 = arith.constant 0 : index
    %89 = vector.load %arg3[%c11, %c0_41, %c0_42] : memref<27x128x128xbf16, #tpu.memory_space<vmem>>, vector<1x128x128xbf16>
    %90 = vector.shape_cast %89 : vector<1x128x128xbf16> to vector<128x128xbf16>
    %cst_43 = arith.constant dense<0.000000e+00> : vector<64x128xf32>
    %91 = tpu.matmul %88, %90, %cst_43 {dimension_numbers = #tpu.dot_dimension_numbers<[1], [0], [0], [1], [0, 0, 1, 1], [], []>} : vector<64x128xbf16>, vector<128x128xbf16>, vector<64x128xf32> -> vector<64x128xf32>
    %92 = arith.addf %85, %91 : vector<64x128xf32>
    %93 = vector.extract_strided_slice %71 {offsets = [1, 0, 0], sizes = [8, 8, 128], strides = [1, 1, 1]} : vector<10x10x128xf32> to vector<8x8x128xf32>
    %94 = vector.shape_cast %93 : vector<8x8x128xf32> to vector<64x128xf32>
    %95 = arith.truncf %94 : vector<64x128xf32> to vector<64x128xbf16>
    %c12 = arith.constant 12 : index
    %c0_44 = arith.constant 0 : index
    %c0_45 = arith.constant 0 : index
    %96 = vector.load %arg3[%c12, %c0_44, %c0_45] : memref<27x128x128xbf16, #tpu.memory_space<vmem>>, vector<1x128x128xbf16>
    %97 = vector.shape_cast %96 : vector<1x128x128xbf16> to vector<128x128xbf16>
    %cst_46 = arith.constant dense<0.000000e+00> : vector<64x128xf32>
    %98 = tpu.matmul %95, %97, %cst_46 {dimension_numbers = #tpu.dot_dimension_numbers<[1], [0], [0], [1], [0, 0, 1, 1], [], []>} : vector<64x128xbf16>, vector<128x128xbf16>, vector<64x128xf32> -> vector<64x128xf32>
    %99 = arith.addf %92, %98 : vector<64x128xf32>
    %100 = vector.extract_strided_slice %71 {offsets = [1, 1, 0], sizes = [8, 8, 128], strides = [1, 1, 1]} : vector<10x10x128xf32> to vector<8x8x128xf32>
    %101 = vector.shape_cast %100 : vector<8x8x128xf32> to vector<64x128xf32>
    %102 = arith.truncf %101 : vector<64x128xf32> to vector<64x128xbf16>
    %c13 = arith.constant 13 : index
    %c0_47 = arith.constant 0 : index
    %c0_48 = arith.constant 0 : index
    %103 = vector.load %arg3[%c13, %c0_47, %c0_48] : memref<27x128x128xbf16, #tpu.memory_space<vmem>>, vector<1x128x128xbf16>
    %104 = vector.shape_cast %103 : vector<1x128x128xbf16> to vector<128x128xbf16>
    %cst_49 = arith.constant dense<0.000000e+00> : vector<64x128xf32>
    %105 = tpu.matmul %102, %104, %cst_49 {dimension_numbers = #tpu.dot_dimension_numbers<[1], [0], [0], [1], [0, 0, 1, 1], [], []>} : vector<64x128xbf16>, vector<128x128xbf16>, vector<64x128xf32> -> vector<64x128xf32>
    %106 = arith.addf %99, %105 : vector<64x128xf32>
    %107 = vector.extract_strided_slice %71 {offsets = [1, 2, 0], sizes = [8, 8, 128], strides = [1, 1, 1]} : vector<10x10x128xf32> to vector<8x8x128xf32>
    %108 = vector.shape_cast %107 : vector<8x8x128xf32> to vector<64x128xf32>
    %109 = arith.truncf %108 : vector<64x128xf32> to vector<64x128xbf16>
    %c14 = arith.constant 14 : index
    %c0_50 = arith.constant 0 : index
    %c0_51 = arith.constant 0 : index
    %110 = vector.load %arg3[%c14, %c0_50, %c0_51] : memref<27x128x128xbf16, #tpu.memory_space<vmem>>, vector<1x128x128xbf16>
    %111 = vector.shape_cast %110 : vector<1x128x128xbf16> to vector<128x128xbf16>
    %cst_52 = arith.constant dense<0.000000e+00> : vector<64x128xf32>
    %112 = tpu.matmul %109, %111, %cst_52 {dimension_numbers = #tpu.dot_dimension_numbers<[1], [0], [0], [1], [0, 0, 1, 1], [], []>} : vector<64x128xbf16>, vector<128x128xbf16>, vector<64x128xf32> -> vector<64x128xf32>
    %113 = arith.addf %106, %112 : vector<64x128xf32>
    %114 = vector.extract_strided_slice %71 {offsets = [2, 0, 0], sizes = [8, 8, 128], strides = [1, 1, 1]} : vector<10x10x128xf32> to vector<8x8x128xf32>
    %115 = vector.shape_cast %114 : vector<8x8x128xf32> to vector<64x128xf32>
    %116 = arith.truncf %115 : vector<64x128xf32> to vector<64x128xbf16>
    %c15 = arith.constant 15 : index
    %c0_53 = arith.constant 0 : index
    %c0_54 = arith.constant 0 : index
    %117 = vector.load %arg3[%c15, %c0_53, %c0_54] : memref<27x128x128xbf16, #tpu.memory_space<vmem>>, vector<1x128x128xbf16>
    %118 = vector.shape_cast %117 : vector<1x128x128xbf16> to vector<128x128xbf16>
    %cst_55 = arith.constant dense<0.000000e+00> : vector<64x128xf32>
    %119 = tpu.matmul %116, %118, %cst_55 {dimension_numbers = #tpu.dot_dimension_numbers<[1], [0], [0], [1], [0, 0, 1, 1], [], []>} : vector<64x128xbf16>, vector<128x128xbf16>, vector<64x128xf32> -> vector<64x128xf32>
    %120 = arith.addf %113, %119 : vector<64x128xf32>
    %121 = vector.extract_strided_slice %71 {offsets = [2, 1, 0], sizes = [8, 8, 128], strides = [1, 1, 1]} : vector<10x10x128xf32> to vector<8x8x128xf32>
    %122 = vector.shape_cast %121 : vector<8x8x128xf32> to vector<64x128xf32>
    %123 = arith.truncf %122 : vector<64x128xf32> to vector<64x128xbf16>
    %c16 = arith.constant 16 : index
    %c0_56 = arith.constant 0 : index
    %c0_57 = arith.constant 0 : index
    %124 = vector.load %arg3[%c16, %c0_56, %c0_57] : memref<27x128x128xbf16, #tpu.memory_space<vmem>>, vector<1x128x128xbf16>
    %125 = vector.shape_cast %124 : vector<1x128x128xbf16> to vector<128x128xbf16>
    %cst_58 = arith.constant dense<0.000000e+00> : vector<64x128xf32>
    %126 = tpu.matmul %123, %125, %cst_58 {dimension_numbers = #tpu.dot_dimension_numbers<[1], [0], [0], [1], [0, 0, 1, 1], [], []>} : vector<64x128xbf16>, vector<128x128xbf16>, vector<64x128xf32> -> vector<64x128xf32>
    %127 = arith.addf %120, %126 : vector<64x128xf32>
    %128 = vector.extract_strided_slice %71 {offsets = [2, 2, 0], sizes = [8, 8, 128], strides = [1, 1, 1]} : vector<10x10x128xf32> to vector<8x8x128xf32>
    %129 = vector.shape_cast %128 : vector<8x8x128xf32> to vector<64x128xf32>
    %130 = arith.truncf %129 : vector<64x128xf32> to vector<64x128xbf16>
    %c17 = arith.constant 17 : index
    %c0_59 = arith.constant 0 : index
    %c0_60 = arith.constant 0 : index
    %131 = vector.load %arg3[%c17, %c0_59, %c0_60] : memref<27x128x128xbf16, #tpu.memory_space<vmem>>, vector<1x128x128xbf16>
    %132 = vector.shape_cast %131 : vector<1x128x128xbf16> to vector<128x128xbf16>
    %cst_61 = arith.constant dense<0.000000e+00> : vector<64x128xf32>
    %133 = tpu.matmul %130, %132, %cst_61 {dimension_numbers = #tpu.dot_dimension_numbers<[1], [0], [0], [1], [0, 0, 1, 1], [], []>} : vector<64x128xbf16>, vector<128x128xbf16>, vector<64x128xf32> -> vector<64x128xf32>
    %134 = arith.addf %127, %133 : vector<64x128xf32>
    %c2_i32 = arith.constant 2 : i32
    %135 = arith.addi %arg1, %c2_i32 : i32
    %c0_62 = arith.constant 0 : index
    %136 = arith.index_cast %135 : i32 to index
    %c0_63 = arith.constant 0 : index
    %c0_64 = arith.constant 0 : index
    %c0_65 = arith.constant 0 : index
    %137 = vector.load %arg2[%c0_62, %136, %c0_63, %c0_64, %c0_65] : memref<1x6x10x10x128xf32, #tpu.memory_space<vmem>>, vector<1x1x10x10x128xf32>
    %138 = vector.shape_cast %137 : vector<1x1x10x10x128xf32> to vector<10x10x128xf32>
    %139 = vector.extract_strided_slice %138 {offsets = [0, 0, 0], sizes = [8, 8, 128], strides = [1, 1, 1]} : vector<10x10x128xf32> to vector<8x8x128xf32>
    %140 = vector.shape_cast %139 : vector<8x8x128xf32> to vector<64x128xf32>
    %141 = arith.truncf %140 : vector<64x128xf32> to vector<64x128xbf16>
    %c18 = arith.constant 18 : index
    %c0_66 = arith.constant 0 : index
    %c0_67 = arith.constant 0 : index
    %142 = vector.load %arg3[%c18, %c0_66, %c0_67] : memref<27x128x128xbf16, #tpu.memory_space<vmem>>, vector<1x128x128xbf16>
    %143 = vector.shape_cast %142 : vector<1x128x128xbf16> to vector<128x128xbf16>
    %cst_68 = arith.constant dense<0.000000e+00> : vector<64x128xf32>
    %144 = tpu.matmul %141, %143, %cst_68 {dimension_numbers = #tpu.dot_dimension_numbers<[1], [0], [0], [1], [0, 0, 1, 1], [], []>} : vector<64x128xbf16>, vector<128x128xbf16>, vector<64x128xf32> -> vector<64x128xf32>
    %145 = arith.addf %134, %144 : vector<64x128xf32>
    %146 = vector.extract_strided_slice %138 {offsets = [0, 1, 0], sizes = [8, 8, 128], strides = [1, 1, 1]} : vector<10x10x128xf32> to vector<8x8x128xf32>
    %147 = vector.shape_cast %146 : vector<8x8x128xf32> to vector<64x128xf32>
    %148 = arith.truncf %147 : vector<64x128xf32> to vector<64x128xbf16>
    %c19 = arith.constant 19 : index
    %c0_69 = arith.constant 0 : index
    %c0_70 = arith.constant 0 : index
    %149 = vector.load %arg3[%c19, %c0_69, %c0_70] : memref<27x128x128xbf16, #tpu.memory_space<vmem>>, vector<1x128x128xbf16>
    %150 = vector.shape_cast %149 : vector<1x128x128xbf16> to vector<128x128xbf16>
    %cst_71 = arith.constant dense<0.000000e+00> : vector<64x128xf32>
    %151 = tpu.matmul %148, %150, %cst_71 {dimension_numbers = #tpu.dot_dimension_numbers<[1], [0], [0], [1], [0, 0, 1, 1], [], []>} : vector<64x128xbf16>, vector<128x128xbf16>, vector<64x128xf32> -> vector<64x128xf32>
    %152 = arith.addf %145, %151 : vector<64x128xf32>
    %153 = vector.extract_strided_slice %138 {offsets = [0, 2, 0], sizes = [8, 8, 128], strides = [1, 1, 1]} : vector<10x10x128xf32> to vector<8x8x128xf32>
    %154 = vector.shape_cast %153 : vector<8x8x128xf32> to vector<64x128xf32>
    %155 = arith.truncf %154 : vector<64x128xf32> to vector<64x128xbf16>
    %c20 = arith.constant 20 : index
    %c0_72 = arith.constant 0 : index
    %c0_73 = arith.constant 0 : index
    %156 = vector.load %arg3[%c20, %c0_72, %c0_73] : memref<27x128x128xbf16, #tpu.memory_space<vmem>>, vector<1x128x128xbf16>
    %157 = vector.shape_cast %156 : vector<1x128x128xbf16> to vector<128x128xbf16>
    %cst_74 = arith.constant dense<0.000000e+00> : vector<64x128xf32>
    %158 = tpu.matmul %155, %157, %cst_74 {dimension_numbers = #tpu.dot_dimension_numbers<[1], [0], [0], [1], [0, 0, 1, 1], [], []>} : vector<64x128xbf16>, vector<128x128xbf16>, vector<64x128xf32> -> vector<64x128xf32>
    %159 = arith.addf %152, %158 : vector<64x128xf32>
    %160 = vector.extract_strided_slice %138 {offsets = [1, 0, 0], sizes = [8, 8, 128], strides = [1, 1, 1]} : vector<10x10x128xf32> to vector<8x8x128xf32>
    %161 = vector.shape_cast %160 : vector<8x8x128xf32> to vector<64x128xf32>
    %162 = arith.truncf %161 : vector<64x128xf32> to vector<64x128xbf16>
    %c21 = arith.constant 21 : index
    %c0_75 = arith.constant 0 : index
    %c0_76 = arith.constant 0 : index
    %163 = vector.load %arg3[%c21, %c0_75, %c0_76] : memref<27x128x128xbf16, #tpu.memory_space<vmem>>, vector<1x128x128xbf16>
    %164 = vector.shape_cast %163 : vector<1x128x128xbf16> to vector<128x128xbf16>
    %cst_77 = arith.constant dense<0.000000e+00> : vector<64x128xf32>
    %165 = tpu.matmul %162, %164, %cst_77 {dimension_numbers = #tpu.dot_dimension_numbers<[1], [0], [0], [1], [0, 0, 1, 1], [], []>} : vector<64x128xbf16>, vector<128x128xbf16>, vector<64x128xf32> -> vector<64x128xf32>
    %166 = arith.addf %159, %165 : vector<64x128xf32>
    %167 = vector.extract_strided_slice %138 {offsets = [1, 1, 0], sizes = [8, 8, 128], strides = [1, 1, 1]} : vector<10x10x128xf32> to vector<8x8x128xf32>
    %168 = vector.shape_cast %167 : vector<8x8x128xf32> to vector<64x128xf32>
    %169 = arith.truncf %168 : vector<64x128xf32> to vector<64x128xbf16>
    %c22 = arith.constant 22 : index
    %c0_78 = arith.constant 0 : index
    %c0_79 = arith.constant 0 : index
    %170 = vector.load %arg3[%c22, %c0_78, %c0_79] : memref<27x128x128xbf16, #tpu.memory_space<vmem>>, vector<1x128x128xbf16>
    %171 = vector.shape_cast %170 : vector<1x128x128xbf16> to vector<128x128xbf16>
    %cst_80 = arith.constant dense<0.000000e+00> : vector<64x128xf32>
    %172 = tpu.matmul %169, %171, %cst_80 {dimension_numbers = #tpu.dot_dimension_numbers<[1], [0], [0], [1], [0, 0, 1, 1], [], []>} : vector<64x128xbf16>, vector<128x128xbf16>, vector<64x128xf32> -> vector<64x128xf32>
    %173 = arith.addf %166, %172 : vector<64x128xf32>
    %174 = vector.extract_strided_slice %138 {offsets = [1, 2, 0], sizes = [8, 8, 128], strides = [1, 1, 1]} : vector<10x10x128xf32> to vector<8x8x128xf32>
    %175 = vector.shape_cast %174 : vector<8x8x128xf32> to vector<64x128xf32>
    %176 = arith.truncf %175 : vector<64x128xf32> to vector<64x128xbf16>
    %c23 = arith.constant 23 : index
    %c0_81 = arith.constant 0 : index
    %c0_82 = arith.constant 0 : index
    %177 = vector.load %arg3[%c23, %c0_81, %c0_82] : memref<27x128x128xbf16, #tpu.memory_space<vmem>>, vector<1x128x128xbf16>
    %178 = vector.shape_cast %177 : vector<1x128x128xbf16> to vector<128x128xbf16>
    %cst_83 = arith.constant dense<0.000000e+00> : vector<64x128xf32>
    %179 = tpu.matmul %176, %178, %cst_83 {dimension_numbers = #tpu.dot_dimension_numbers<[1], [0], [0], [1], [0, 0, 1, 1], [], []>} : vector<64x128xbf16>, vector<128x128xbf16>, vector<64x128xf32> -> vector<64x128xf32>
    %180 = arith.addf %173, %179 : vector<64x128xf32>
    %181 = vector.extract_strided_slice %138 {offsets = [2, 0, 0], sizes = [8, 8, 128], strides = [1, 1, 1]} : vector<10x10x128xf32> to vector<8x8x128xf32>
    %182 = vector.shape_cast %181 : vector<8x8x128xf32> to vector<64x128xf32>
    %183 = arith.truncf %182 : vector<64x128xf32> to vector<64x128xbf16>
    %c24 = arith.constant 24 : index
    %c0_84 = arith.constant 0 : index
    %c0_85 = arith.constant 0 : index
    %184 = vector.load %arg3[%c24, %c0_84, %c0_85] : memref<27x128x128xbf16, #tpu.memory_space<vmem>>, vector<1x128x128xbf16>
    %185 = vector.shape_cast %184 : vector<1x128x128xbf16> to vector<128x128xbf16>
    %cst_86 = arith.constant dense<0.000000e+00> : vector<64x128xf32>
    %186 = tpu.matmul %183, %185, %cst_86 {dimension_numbers = #tpu.dot_dimension_numbers<[1], [0], [0], [1], [0, 0, 1, 1], [], []>} : vector<64x128xbf16>, vector<128x128xbf16>, vector<64x128xf32> -> vector<64x128xf32>
    %187 = arith.addf %180, %186 : vector<64x128xf32>
    %188 = vector.extract_strided_slice %138 {offsets = [2, 1, 0], sizes = [8, 8, 128], strides = [1, 1, 1]} : vector<10x10x128xf32> to vector<8x8x128xf32>
    %189 = vector.shape_cast %188 : vector<8x8x128xf32> to vector<64x128xf32>
    %190 = arith.truncf %189 : vector<64x128xf32> to vector<64x128xbf16>
    %c25 = arith.constant 25 : index
    %c0_87 = arith.constant 0 : index
    %c0_88 = arith.constant 0 : index
    %191 = vector.load %arg3[%c25, %c0_87, %c0_88] : memref<27x128x128xbf16, #tpu.memory_space<vmem>>, vector<1x128x128xbf16>
    %192 = vector.shape_cast %191 : vector<1x128x128xbf16> to vector<128x128xbf16>
    %cst_89 = arith.constant dense<0.000000e+00> : vector<64x128xf32>
    %193 = tpu.matmul %190, %192, %cst_89 {dimension_numbers = #tpu.dot_dimension_numbers<[1], [0], [0], [1], [0, 0, 1, 1], [], []>} : vector<64x128xbf16>, vector<128x128xbf16>, vector<64x128xf32> -> vector<64x128xf32>
    %194 = arith.addf %187, %193 : vector<64x128xf32>
    %195 = vector.extract_strided_slice %138 {offsets = [2, 2, 0], sizes = [8, 8, 128], strides = [1, 1, 1]} : vector<10x10x128xf32> to vector<8x8x128xf32>
    %196 = vector.shape_cast %195 : vector<8x8x128xf32> to vector<64x128xf32>
    %197 = arith.truncf %196 : vector<64x128xf32> to vector<64x128xbf16>
    %c26 = arith.constant 26 : index
    %c0_90 = arith.constant 0 : index
    %c0_91 = arith.constant 0 : index
    %198 = vector.load %arg3[%c26, %c0_90, %c0_91] : memref<27x128x128xbf16, #tpu.memory_space<vmem>>, vector<1x128x128xbf16>
    %199 = vector.shape_cast %198 : vector<1x128x128xbf16> to vector<128x128xbf16>
    %cst_92 = arith.constant dense<0.000000e+00> : vector<64x128xf32>
    %200 = tpu.matmul %197, %199, %cst_92 {dimension_numbers = #tpu.dot_dimension_numbers<[1], [0], [0], [1], [0, 0, 1, 1], [], []>} : vector<64x128xbf16>, vector<128x128xbf16>, vector<64x128xf32> -> vector<64x128xf32>
    %201 = arith.addf %194, %200 : vector<64x128xf32>
    %202 = vector.shape_cast %201 : vector<64x128xf32> to vector<8x8x128xf32>
    %c0_93 = arith.constant 0 : index
    %c0_94 = arith.constant 0 : index
    %c0_95 = arith.constant 0 : index
    %c0_96 = arith.constant 0 : index
    %c0_97 = arith.constant 0 : index
    %203 = vector.load %arg4[%c0_93, %c0_94, %c0_95, %c0_96, %c0_97] : memref<1x1x8x8x128xf32, #tpu.memory_space<vmem>>, vector<1x1x8x8x128xf32>
    %204 = vector.shape_cast %203 : vector<1x1x8x8x128xf32> to vector<8x8x128xf32>
    %205 = vector.shape_cast %202 : vector<8x8x128xf32> to vector<1x1x8x8x128xf32>
    tpu.vector_store %arg4[%c0_93, %c0_94, %c0_95, %c0_96, %c0_97], %205 {strides = array<i32>} : memref<1x1x8x8x128xf32, #tpu.memory_space<vmem>>, vector<1x1x8x8x128xf32>,
    %cst_98 = arith.constant dense<0.000000e+00> : vector<128xf32>
    %206 = vector.multi_reduction <add>, %201, %cst_98 [0] : vector<64x128xf32> to vector<128xf32>
    %207 = vector.shape_cast %206 : vector<128xf32> to vector<1x128xf32>
    %c0_99 = arith.constant 0 : index
    %c0_100 = arith.constant 0 : index
    %c0_101 = arith.constant 0 : index
    %c0_102 = arith.constant 0 : index
    %208 = vector.load %arg5[%c0_99, %c0_100, %c0_101, %c0_102] : memref<1x1x2x128xf32, #tpu.memory_space<vmem>>, vector<1x1x1x128xf32>
    %209 = vector.shape_cast %208 : vector<1x1x1x128xf32> to vector<1x128xf32>
    %210 = vector.shape_cast %207 : vector<1x128xf32> to vector<1x1x1x128xf32>
    tpu.vector_store %arg5[%c0_99, %c0_100, %c0_101, %c0_102], %210 {strides = array<i32>} : memref<1x1x2x128xf32, #tpu.memory_space<vmem>>, vector<1x1x1x128xf32>,
    %211 = arith.mulf %201, %201 : vector<64x128xf32>
    %cst_103 = arith.constant dense<0.000000e+00> : vector<128xf32>
    %212 = vector.multi_reduction <add>, %211, %cst_103 [0] : vector<64x128xf32> to vector<128xf32>
    %213 = vector.shape_cast %212 : vector<128xf32> to vector<1x128xf32>
    %c0_104 = arith.constant 0 : index
    %c0_105 = arith.constant 0 : index
    %c1_106 = arith.constant 1 : index
    %c0_107 = arith.constant 0 : index
    %214 = vector.load %arg5[%c0_104, %c0_105, %c1_106, %c0_107] : memref<1x1x2x128xf32, #tpu.memory_space<vmem>>, vector<1x1x1x128xf32>
    %215 = vector.shape_cast %214 : vector<1x1x1x128xf32> to vector<1x128xf32>
    %216 = vector.shape_cast %213 : vector<1x128xf32> to vector<1x1x1x128xf32>
    tpu.vector_store %arg5[%c0_104, %c0_105, %c1_106, %c0_107], %216 {strides = array<i32>} : memref<1x1x2x128xf32, #tpu.memory_space<vmem>>, vector<1x1x1x128xf32>,
    return
  }
  func.func @transform_0(%arg0: i32, %arg1: i32) -> (i32, i32, i32, i32, i32) {
    %c0_i32 = arith.constant 0 : i32
    %c0_i32_0 = arith.constant 0 : i32
    %c0_i32_1 = arith.constant 0 : i32
    %c0_i32_2 = arith.constant 0 : i32
    %c0_i32_3 = arith.constant 0 : i32
    return %arg0, %c0_i32, %c0_i32_0, %c0_i32_1, %c0_i32_2 : i32, i32, i32, i32, i32
  }
  func.func @transform_1(%arg0: i32, %arg1: i32) -> (i32, i32, i32) {
    %c0_i32 = arith.constant 0 : i32
    %c0_i32_0 = arith.constant 0 : i32
    %c0_i32_1 = arith.constant 0 : i32
    %c0_i32_2 = arith.constant 0 : i32
    return %c0_i32, %c0_i32_0, %c0_i32_1 : i32, i32, i32
  }
  func.func @transform_2(%arg0: i32, %arg1: i32) -> (i32, i32, i32, i32, i32) {
    %c0_i32 = arith.constant 0 : i32
    %c0_i32_0 = arith.constant 0 : i32
    %c0_i32_1 = arith.constant 0 : i32
    %c0_i32_2 = arith.constant 0 : i32
    return %arg0, %arg1, %c0_i32, %c0_i32_0, %c0_i32_1 : i32, i32, i32, i32, i32
  }
  func.func @transform_3(%arg0: i32, %arg1: i32) -> (i32, i32, i32, i32) {
    %c0_i32 = arith.constant 0 : i32
    %c0_i32_0 = arith.constant 0 : i32
    %c0_i32_1 = arith.constant 0 : i32
    return %arg0, %arg1, %c0_i32, %c0_i32_0 : i32, i32, i32, i32
  }
}

</mosaic_0001>

<llo_original>
// kernel: tpu_custom_call.1
$region0: #{tpu_custom_call.1}
  #allocation0 [shape = 'u32[]', space=smem, size = 0x4, offset = 0x4, fixed_abs, tag = 'smem constant byte address 0x4 - core index']
  #allocation1 [shape = 'u32[144,128]{1,0:T(1,128)}', space=vmem, size = 0x12000, scoped, tag = 'internal scratch']
  %s0 = inlined_call_operand.vmem [shape: f32[2,6,10,10,128], index: 0, kind: input, shape index: {}]
  %s1 = inlined_call_operand.vmem [shape: bf16[27,128,128], index: 1, kind: input, shape index: {}]
  %s2 = inlined_call_operand.hbm [shape: f32[2,4,8,8,128], index: 2, kind: output, shape index: {0}]
  %s3 = inlined_call_operand.hbm [shape: f32[2,4,2,128], index: 3, kind: output, shape index: {1}]
  %4 = xla_tuple %s2, %s3
  %s5 = sld [smem:[#allocation0]]
  $region49: #{tpu_custom_call.1} parent=0
    _
  %s7 = ssub.s32 1, %s5
  %s8 = scalar_select 0, %s7, %s5
  $region1: #{tpu_custom_call.1} parent=0
    #allocation2 [shape = 'u8[65536]{0}', space=vmem, size = 0x10000, scoped, tag = 'output window, operand 0']
    #allocation3 [shape = 's32[2]{0}', space=sflag, size = 0x8, scoped, tag = 'scoped memory for tpu_custom_call.1']
    #allocation4 [shape = 'u8[2048]{0}', space=vmem, size = 0x800, scoped, tag = 'output window, operand 1']
    #allocation5 [shape = 's32[2]{0}', space=sflag, size = 0x8, scoped, tag = 'scoped memory for tpu_custom_call.1']
    %9 = vsyncpa [#allocation3], 0
    %s10 = scalar_lea.sflag [#allocation3], 1
    %11 = vsyncpa %s10, 0
    %12 = vsyncpa [#allocation5], 0
    %s13 = scalar_lea.sflag [#allocation5], 1
    %14 = vsyncpa %s13, 0
    loop: start=0, step=1, limit=10
    $region2: #{tpu_custom_call.1} parent=1 // loop_pre_header
      _
    $region3: #{tpu_custom_call.1} parent=1 // loop_header
      %s16 = sphi 0, %s20
      %p17 = scmp.ge.s32.totalorder %s16, 10
      %s23 = sphi 0, %s35
      %s24 = sphi 0, %s31
      %s25 = sphi 0, %s23
      %s26 = sphi 0, %s24
      %s27 = sphi 0, %s25
      %s28 = sphi 0, %s26
      %s38 = sphi 0, %s40
      %s41 = sphi 0, %s38
      %s42 = sphi 0, %s41
      %s58 = sphi 0, %s42
      %s62 = sphi 0, %s62
      %s64 = sphi 0, %s62
      %s65 = sphi 0, %s64
      %s79 = sphi 0, %s65
      %s87 = sphi 0, %s89
      %s90 = sphi 0, %s87
      %s91 = sphi 0, %s90
      %s107 = sphi 0, %s91
      %s115 = sphi 0, %s117
      %s118 = sphi 0, %s115
      %s119 = sphi 0, %s118
      %s135 = sphi 0, %s119
    $region4: #{tpu_custom_call.1} parent=1 // loop_header_branch
      %19 = sbr.rel (%p17) target = $region8
    $region5: #{tpu_custom_call.1} parent=1 // loop_body
      %s21 = ssub.s32 %s16, 1
      %s22 = ssub.s32 %s16, 2
      %s29 = sadd.s32 1, %s24
      %p30 = scmp.ge.s32.totalorder %s29, 4
      %s31 = scalar_select %p30, 0, %s29
      %s32 = sadd.s32 1, %s23
      %s33 = scalar_select %p30, %s32, %s23
      %p34 = scmp.ge.s32.totalorder %s33, 2
      %s35 = scalar_select %p34, 0, %s33
      %s36 = ssub.s32 %s23, %s35
      %p37 = scmp.eq.s32.totalorder %s36, 0
      %s39 = sadd.s32 %s38, 1
      %s40 = scalar_select %p37, %s38, %s39
      %p43 = pneg %p37
      %p44 = scmp.eq.s32.totalorder %s16, 7
      %p45 = por %p43, %p44
      %p46 = scmp.ne.s32.totalorder %s38, %s41
      %p47 = scmp.eq.s32.totalorder %s16, 0
      %p48 = por %p46, %p47
      %p49 = scmp.ne.s32.totalorder %s38, %s41
      %p50 = scmp.eq.s32.totalorder %s21, 7
      %p51 = por %p49, %p50
      %p52 = scmp.ne.s32.totalorder %s41, %s42
      %p53 = scmp.eq.s32.totalorder %s21, 0
      %p54 = por %p52, %p53
      %p55 = scmp.ne.s32.totalorder %s41, %s42
      %p56 = scmp.eq.s32.totalorder %s22, 7
      %p57 = por %p55, %p56
      %p59 = scmp.ne.s32.totalorder %s42, %s58
      %p60 = scmp.eq.s32.totalorder %s22, 0
      %p61 = por %p59, %p60
      %s63 = sadd.s32 %s62, 1
      %p66 = scmp.eq.s32.totalorder %s16, 7
      %p67 = scmp.ne.s32.totalorder %s62, %s64
      %p68 = scmp.eq.s32.totalorder %s16, 0
      %p69 = por %p67, %p68
      %p70 = scmp.ne.s32.totalorder %s62, %s64
      %p71 = scmp.eq.s32.totalorder %s21, 7
      %p72 = por %p70, %p71
      %p73 = scmp.ne.s32.totalorder %s64, %s65
      %p74 = scmp.eq.s32.totalorder %s21, 0
      %p75 = por %p73, %p74
      %p76 = scmp.ne.s32.totalorder %s64, %s65
      %p77 = scmp.eq.s32.totalorder %s22, 7
      %p78 = por %p76, %p77
      %p80 = scmp.ne.s32.totalorder %s65, %s79
      %p81 = scmp.eq.s32.totalorder %s22, 0
      %p82 = por %p80, %p81
      %s83 = ssub.s32 %s23, %s35
      %s84 = ssub.s32 %s24, %s31
      %s85 = sor.u32 %s83, %s84
      %p86 = scmp.eq.s32.totalorder %s85, 0
      %s88 = sadd.s32 %s87, 1
      %s89 = scalar_select %p86, %s87, %s88
      %p92 = pneg %p86
      %p93 = scmp.eq.s32.totalorder %s16, 7
      %p94 = por %p92, %p93
      %p95 = scmp.ne.s32.totalorder %s87, %s90
      %p96 = scmp.eq.s32.totalorder %s16, 0
      %p97 = por %p95, %p96
      %p98 = scmp.ne.s32.totalorder %s87, %s90
      %p99 = scmp.eq.s32.totalorder %s21, 7
      %p100 = por %p98, %p99
      %p101 = scmp.ne.s32.totalorder %s90, %s91
      %p102 = scmp.eq.s32.totalorder %s21, 0
      %p103 = por %p101, %p102
      %p104 = scmp.ne.s32.totalorder %s90, %s91
      %p105 = scmp.eq.s32.totalorder %s22, 7
      %p106 = por %p104, %p105
      %p108 = scmp.ne.s32.totalorder %s91, %s107
      %p109 = scmp.eq.s32.totalorder %s22, 0
      %p110 = por %p108, %p109
      %s111 = ssub.s32 %s23, %s35
      %s112 = ssub.s32 %s24, %s31
      %s113 = sor.u32 %s111, %s112
      %p114 = scmp.eq.s32.totalorder %s113, 0
      %s116 = sadd.s32 %s115, 1
      %s117 = scalar_select %p114, %s115, %s116
      %p120 = pneg %p114
      %p121 = scmp.eq.s32.totalorder %s16, 7
      %p122 = por %p120, %p121
      %p123 = scmp.ne.s32.totalorder %s115, %s118
      %p124 = scmp.eq.s32.totalorder %s16, 0
      %p125 = por %p123, %p124
      %p126 = scmp.ne.s32.totalorder %s115, %s118
      %p127 = scmp.eq.s32.totalorder %s21, 7
      %p128 = por %p126, %p127
      %p129 = scmp.ne.s32.totalorder %s118, %s119
      %p130 = scmp.eq.s32.totalorder %s21, 0
      %p131 = por %p129, %p130
      %p132 = scmp.ne.s32.totalorder %s118, %s119
      %p133 = scmp.eq.s32.totalorder %s22, 7
      %p134 = por %p132, %p133
      %p136 = scmp.ne.s32.totalorder %s119, %s135
      %p137 = scmp.eq.s32.totalorder %s22, 0
      %p138 = por %p136, %p137
      %p139 = scmp.le.s32.totalorder 1, %s16
      %p140 = scmp.lt.s32.totalorder %s16, 9
      %p141 = pnand %p139, %p140
      %p142 = pneg %p141
      // Predicated region
      $region9: #{tpu_custom_call.1} parent=5 // pred_check
        _
      $region10: #{tpu_custom_call.1} parent=5 // pred_check_branch
        %144 = sbr.rel (%p141) target = $region12
      $region11: #{tpu_custom_call.1} parent=5 // pred_region
        %s145 = ssub.s32 %s16, 1
        // Predicated region
        $region13: #{tpu_custom_call.1} parent=11 // pred_check
          %p146 = pneg %p75
        $region14: #{tpu_custom_call.1} parent=11 // pred_check_branch
          %148 = sbr.rel (%p146) target = $region16
        $region15: #{tpu_custom_call.1} parent=11 // pred_region
          _
        $region16: #{tpu_custom_call.1} parent=11 // pred_fallthru
          _
      $region12: #{tpu_custom_call.1} parent=5 // pred_fallthru
        _
      %p149 = scmp.lt.s32.totalorder %s16, 8
      // Predicated region
      $region17: #{tpu_custom_call.1} parent=5 // pred_check
        %p150 = pneg %p149
      $region18: #{tpu_custom_call.1} parent=5 // pred_check_branch
        %152 = sbr.rel (%p150) target = $region20
      $region19: #{tpu_custom_call.1} parent=5 // pred_region
        // Predicated region
        $region21: #{tpu_custom_call.1} parent=19 // pred_check
          %p153 = pneg %p48
        $region22: #{tpu_custom_call.1} parent=19 // pred_check_branch
          %155 = sbr.rel (%p153) target = $region24
        $region23: #{tpu_custom_call.1} parent=19 // pred_region
          %p156 = scmp.lt.s32.totalorder %s23, 1
          %s157 = scalar_select %p156, %s23, 1
          %s158 = smul.addr %s157, 120
          %s159 = smul.addr %s158, 8
          %s160 = scalar_lea.vmem %s0, %s159
        $region24: #{tpu_custom_call.1} parent=19 // pred_fallthru
          _
      $region20: #{tpu_custom_call.1} parent=5 // pred_fallthru
        _
      %p161 = scmp.le.s32.totalorder 1, %s16
      %p162 = scmp.lt.s32.totalorder %s16, 9
      %p163 = pnand %p161, %p162
      %p164 = pneg %p163
      // Predicated region
      $region25: #{tpu_custom_call.1} parent=5 // pred_check
        _
      $region26: #{tpu_custom_call.1} parent=5 // pred_check_branch
        %166 = sbr.rel (%p163) target = $region28
      $region27: #{tpu_custom_call.1} parent=5 // pred_region
        %s167 = ssub.s32 %s16, 1
        %p168 = scmp.lt.s32.totalorder %s25, 1
        %s169 = scalar_select %p168, %s25, 1
        %s170 = smul.addr %s169, 120
        %s171 = smul.addr %s170, 8
        %s172 = scalar_lea.vmem %s0, %s171
        %p173 = pneg %p54
        %p174 = pneg %p51
        %p175 = pneg %p75
        %p176 = pneg %p72
        %p177 = pneg %p103
        %p178 = pneg %p100
        %s179 = sand.u32 %s90, 1
        %s180 = scalar_lea.sflag [#allocation3], %s179
        %s181 = sand.u32 %s90, 1
        %s182 = smul.addr %s181, 64
        %s183 = scalar_lea.vmem [#allocation2], %s182
        %p184 = pneg %p131
        %p185 = pneg %p128
        %s186 = sand.u32 %s118, 1
        %s187 = scalar_lea.sflag [#allocation5], %s186
        %s188 = sand.u32 %s118, 1
        %s189 = smul.addr %s188, 2
        %s190 = scalar_lea.vmem [#allocation4], %s189
        %p191 = scmp.lt.s32.totalorder %s25, 1
        %s192 = scalar_select %p191, %s25, 1
        %s193 = smul.addr %s192, 120
        %s194 = smul.addr %s193, 8
        %s195 = scalar_lea.vmem %s0, %s194
        %s197 = smul.u32 %s26, 160
        %s198 = scalar_lea.vmem %s195, %s197
        %v199 = vld [vmem:[%s198] sm:$0xff]
        %v200 = vld [vmem:[%s198 + $0x8] sm:$0x3]
        %v201 = vld [vmem:[%s198 + $0x10] sm:$0xff]
        %v202 = vld [vmem:[%s198 + $0x18] sm:$0x3]
        %v203 = vld [vmem:[%s198 + $0x20] sm:$0xff]
        %v204 = vld [vmem:[%s198 + $0x28] sm:$0x3]
        %v205 = vld [vmem:[%s198 + $0x30] sm:$0xff]
        %v206 = vld [vmem:[%s198 + $0x38] sm:$0x3]
        %v207 = vld [vmem:[%s198 + $0x40] sm:$0xff]
        %v208 = vld [vmem:[%s198 + $0x48] sm:$0x3]
        %v209 = vld [vmem:[%s198 + $0x50] sm:$0xff]
        %v210 = vld [vmem:[%s198 + $0x58] sm:$0x3]
        %v211 = vld [vmem:[%s198 + $0x60] sm:$0xff]
        %v212 = vld [vmem:[%s198 + $0x68] sm:$0x3]
        %v213 = vld [vmem:[%s198 + $0x70] sm:$0xff]
        %v214 = vld [vmem:[%s198 + $0x78] sm:$0x3]
        %v215 = vld [vmem:[%s198 + $0x80] sm:$0xff]
        %v216 = vld [vmem:[%s198 + $0x88] sm:$0x3]
        %v217 = vld [vmem:[%s198 + $0x90] sm:$0xff]
        %v218 = vld [vmem:[%s198 + $0x98] sm:$0x3]
        %v219 = vpack.c.bf16 %v201, %v199
        %v220 = vpack.c.bf16 %v205, %v203
        %v221 = vpack.c.bf16 %v209, %v207
        %v222 = vpack.c.bf16 %v213, %v211
        %v223 = vld [vmem:[%s1] sm:$0xf]
        %v224 = vld [vmem:[%s1 + $0x4] sm:$0xf]
        %v225 = vld [vmem:[%s1 + $0x8] sm:$0xf]
        %v226 = vld [vmem:[%s1 + $0xc] sm:$0xf]
        %v227 = vld [vmem:[%s1 + $0x10] sm:$0xf]
        %v228 = vld [vmem:[%s1 + $0x14] sm:$0xf]
        %v229 = vld [vmem:[%s1 + $0x18] sm:$0xf]
        %v230 = vld [vmem:[%s1 + $0x1c] sm:$0xf]
        %v231 = vld [vmem:[%s1 + $0x20] sm:$0xf]
        %v232 = vld [vmem:[%s1 + $0x24] sm:$0xf]
        %v233 = vld [vmem:[%s1 + $0x28] sm:$0xf]
        %v234 = vld [vmem:[%s1 + $0x2c] sm:$0xf]
        %v235 = vld [vmem:[%s1 + $0x30] sm:$0xf]
        %v236 = vld [vmem:[%s1 + $0x34] sm:$0xf]
        %v237 = vld [vmem:[%s1 + $0x38] sm:$0xf]
        %v238 = vld [vmem:[%s1 + $0x3c] sm:$0xf]
        %vm255 = vcmask 1046528
        %v256 = vrot.slane %v199, 1
        %v257 = vrot.slane %v200, 1
        %v258 = vsel %vm255, %v256, %v257
        %v259 = vrot.slane %v201, 1
        %v260 = vrot.slane %v202, 1
        %v261 = vsel %vm255, %v259, %v260
        %v262 = vrot.slane %v203, 1
        %v263 = vrot.slane %v204, 1
        %v264 = vsel %vm255, %v262, %v263
        %v265 = vrot.slane %v205, 1
        %v266 = vrot.slane %v206, 1
        %v267 = vsel %vm255, %v265, %v266
        %v268 = vrot.slane %v207, 1
        %v269 = vrot.slane %v208, 1
        %v270 = vsel %vm255, %v268, %v269
        %v271 = vrot.slane %v209, 1
        %v272 = vrot.slane %v210, 1
        %v273 = vsel %vm255, %v271, %v272
        %v274 = vrot.slane %v211, 1
        %v275 = vrot.slane %v212, 1
        %v276 = vsel %vm255, %v274, %v275
        %v277 = vrot.slane %v213, 1
        %v278 = vrot.slane %v214, 1
        %v279 = vsel %vm255, %v277, %v278
        %v288 = vpack.c.bf16 %v261, %v258
        %v289 = vpack.c.bf16 %v267, %v264
        %v290 = vpack.c.bf16 %v273, %v270
        %v291 = vpack.c.bf16 %v279, %v276
        %s292 = scalar_lea.vmem %s1, 64
        %v293 = vld [vmem:[%s292] sm:$0xf]
        %v294 = vld [vmem:[%s292 + $0x4] sm:$0xf]
        %v295 = vld [vmem:[%s292 + $0x8] sm:$0xf]
        %v296 = vld [vmem:[%s292 + $0xc] sm:$0xf]
        %v297 = vld [vmem:[%s292 + $0x10] sm:$0xf]
        %v298 = vld [vmem:[%s292 + $0x14] sm:$0xf]
        %v299 = vld [vmem:[%s292 + $0x18] sm:$0xf]
        %v300 = vld [vmem:[%s292 + $0x1c] sm:$0xf]
        %v301 = vld [vmem:[%s292 + $0x20] sm:$0xf]
        %v302 = vld [vmem:[%s292 + $0x24] sm:$0xf]
        %v303 = vld [vmem:[%s292 + $0x28] sm:$0xf]
        %v304 = vld [vmem:[%s292 + $0x2c] sm:$0xf]
        %v305 = vld [vmem:[%s292 + $0x30] sm:$0xf]
        %v306 = vld [vmem:[%s292 + $0x34] sm:$0xf]
        %v307 = vld [vmem:[%s292 + $0x38] sm:$0xf]
        %v308 = vld [vmem:[%s292 + $0x3c] sm:$0xf]
        %v325 = vunpack.c.l.b16 %v293
        %v326 = vunpack.c.l.b16 %v294
        %v327 = vunpack.c.l.b16 %v295
        %v328 = vunpack.c.l.b16 %v296
        %v329 = vunpack.c.l.b16 %v297
        %v330 = vunpack.c.l.b16 %v298
        %v331 = vunpack.c.l.b16 %v299
        %v332 = vunpack.c.l.b16 %v300
        %v333 = vunpack.c.l.b16 %v301
        %v334 = vunpack.c.l.b16 %v302
        %v335 = vunpack.c.l.b16 %v303
        %v336 = vunpack.c.l.b16 %v304
        %v337 = vunpack.c.l.b16 %v305
        %v338 = vunpack.c.l.b16 %v306
        %v339 = vunpack.c.l.b16 %v307
        %v340 = vunpack.c.l.b16 %v308
        %v341 = vpack.c.b16 %v326, %v325
        %v342 = vpack.c.b16 %v328, %v327
        %v343 = vpack.c.b16 %v330, %v329
        %v344 = vpack.c.b16 %v332, %v331
        %v345 = vpack.c.b16 %v334, %v333
        %v346 = vpack.c.b16 %v336, %v335
        %v347 = vpack.c.b16 %v338, %v337
        %v348 = vpack.c.b16 %v340, %v339
        %357 = vmatprep.subr.bf16.mxu0 0
        %358 = vmatpush1.bf16.msra.mxu0 %v341
        %359 = vmatprep.subr.bf16.mxu0 0
        %360 = vmatpush1.bf16.msra.mxu0 %v342
        %361 = vmatprep.subr.bf16.mxu0 0
        %362 = vmatpush1.bf16.msra.mxu0 %v343
        %363 = vmatprep.subr.bf16.mxu0 0
        %364 = vmatpush1.bf16.msra.mxu0 %v344
        %365 = vmatprep.subr.bf16.mxu0 0
        %366 = vmatpush1.bf16.msra.mxu0 %v345
        %367 = vmatprep.subr.bf16.mxu0 0
        %368 = vmatpush1.bf16.msra.mxu0 %v346
        %369 = vmatprep.subr.bf16.mxu0 0
        %370 = vmatpush1.bf16.msra.mxu0 %v347
        %371 = vmatprep.subr.bf16.mxu0 0
        %372 = vmatpush1.bf16.msra.mxu0 %v348
        %373 = vmatprep.subr.bf16.mxu0 0
        %374 = vmatpush1.bf16.msra.mxu0 0
        %375 = vmatprep.subr.bf16.mxu0 0
        %376 = vmatpush1.bf16.msra.mxu0 0
        %377 = vmatprep.subr.bf16.mxu0 0
        %378 = vmatpush1.bf16.msra.mxu0 0
        %379 = vmatprep.subr.bf16.mxu0 0
        %380 = vmatpush1.bf16.msra.mxu0 0
        %381 = vmatprep.subr.bf16.mxu0 0
        %382 = vmatpush1.bf16.msra.mxu0 0
        %383 = vmatprep.subr.bf16.mxu0 0
        %384 = vmatpush1.bf16.msra.mxu0 0
        %385 = vmatprep.subr.bf16.mxu0 0
        %386 = vmatpush1.bf16.msra.mxu0 0
        %387 = vmatprep.subr.bf16.mxu0 0
        %388 = vmatpush1.bf16.msra.mxu0 0
        %389 = vmatprep.mubr.bf16.mxu0 0
        %390 = vmatmul.mubr.bf16.gmra.mrb[0].mxu0 %v288
        %v391 = vpop.f32.mrb[0].mxu0
        %v392 = vadd.f32 0.0, %v391
        %v393 = vpop.f32.mrb[0].mxu0
        %v394 = vpop.f32.mrb[0].mxu0
        %v395 = vadd.f32 0.0, %v394
        %v396 = vpop.f32.mrb[0].mxu0
        %397 = vmatprep.mubr.bf16.mxu0 0
        %398 = vmatmul.mubr.bf16.gmra.mrb[0].mxu0 %v289
        %v399 = vpop.f32.mrb[0].mxu0
        %v400 = vadd.f32 0.0, %v399
        %v401 = vpop.f32.mrb[0].mxu0
        %v402 = vpop.f32.mrb[0].mxu0
        %v403 = vadd.f32 0.0, %v402
        %v404 = vpop.f32.mrb[0].mxu0
        %405 = vmatprep.mubr.bf16.mxu0 0
        %406 = vmatmul.mubr.bf16.gmra.mrb[0].mxu0 %v290
        %v407 = vpop.f32.mrb[0].mxu0
        %v408 = vadd.f32 0.0, %v407
        %v409 = vpop.f32.mrb[0].mxu0
        %v410 = vpop.f32.mrb[0].mxu0
        %v411 = vadd.f32 0.0, %v410
        %v412 = vpop.f32.mrb[0].mxu0
        %413 = vmatprep.mubr.bf16.mxu0 0
        %414 = vmatmul.mubr.bf16.gmra.mrb[0].mxu0 %v291
        %v415 = vpop.f32.mrb[0].mxu0
        %v416 = vadd.f32 0.0, %v415
        %v417 = vpop.f32.mrb[0].mxu0
        %v418 = vpop.f32.mrb[0].mxu0
        %v419 = vadd.f32 0.0, %v418
        %v420 = vpop.f32.mrb[0].mxu0
        %421 = vdwg.mxu0
        %v438 = vunpack.c.l.b16 %v223
        %v439 = vunpack.c.l.b16 %v224
        %v440 = vunpack.c.l.b16 %v225
        %v441 = vunpack.c.l.b16 %v226
        %v442 = vunpack.c.l.b16 %v227
        %v443 = vunpack.c.l.b16 %v228
        %v444 = vunpack.c.l.b16 %v229
        %v445 = vunpack.c.l.b16 %v230
        %v446 = vunpack.c.l.b16 %v231
        %v447 = vunpack.c.l.b16 %v232
        %v448 = vunpack.c.l.b16 %v233
        %v449 = vunpack.c.l.b16 %v234
        %v450 = vunpack.c.l.b16 %v235
        %v451 = vunpack.c.l.b16 %v236
        %v452 = vunpack.c.l.b16 %v237
        %v453 = vunpack.c.l.b16 %v238
        %v454 = vpack.c.b16 %v439, %v438
        %v455 = vpack.c.b16 %v441, %v440
        %v456 = vpack.c.b16 %v443, %v442
        %v457 = vpack.c.b16 %v445, %v444
        %v458 = vpack.c.b16 %v447, %v446
        %v459 = vpack.c.b16 %v449, %v448
        %v460 = vpack.c.b16 %v451, %v450
        %v461 = vpack.c.b16 %v453, %v452
        %470 = vmatprep.subr.bf16.mxu0 0
        %471 = vmatpush1.bf16.msra.mxu0 %v454
        %472 = vmatprep.subr.bf16.mxu0 0
        %473 = vmatpush1.bf16.msra.mxu0 %v455
        %474 = vmatprep.subr.bf16.mxu0 0
        %475 = vmatpush1.bf16.msra.mxu0 %v456
        %476 = vmatprep.subr.bf16.mxu0 0
        %477 = vmatpush1.bf16.msra.mxu0 %v457
        %478 = vmatprep.subr.bf16.mxu0 0
        %479 = vmatpush1.bf16.msra.mxu0 %v458
        %480 = vmatprep.subr.bf16.mxu0 0
        %481 = vmatpush1.bf16.msra.mxu0 %v459
        %482 = vmatprep.subr.bf16.mxu0 0
        %483 = vmatpush1.bf16.msra.mxu0 %v460
        %484 = vmatprep.subr.bf16.mxu0 0
        %485 = vmatpush1.bf16.msra.mxu0 %v461
        %486 = vmatprep.subr.bf16.mxu0 0
        %487 = vmatpush1.bf16.msra.mxu0 0
        %488 = vmatprep.subr.bf16.mxu0 0
        %489 = vmatpush1.bf16.msra.mxu0 0
        %490 = vmatprep.subr.bf16.mxu0 0
        %491 = vmatpush1.bf16.msra.mxu0 0
        %492 = vmatprep.subr.bf16.mxu0 0
        %493 = vmatpush1.bf16.msra.mxu0 0
        %494 = vmatprep.subr.bf16.mxu0 0
        %495 = vmatpush1.bf16.msra.mxu0 0
        %496 = vmatprep.subr.bf16.mxu0 0
        %497 = vmatpush1.bf16.msra.mxu0 0
        %498 = vmatprep.subr.bf16.mxu0 0
        %499 = vmatpush1.bf16.msra.mxu0 0
        %500 = vmatprep.subr.bf16.mxu0 0
        %501 = vmatpush1.bf16.msra.mxu0 0
        %502 = vmatprep.mubr.bf16.mxu0 0
        %503 = vmatmul.mubr.bf16.gmra.mrb[0].mxu0 %v219
        %v504 = vpop.f32.mrb[0].mxu0
        %v505 = vadd.f32 %v392, %v504
        %v506 = vpop.f32.mrb[0].mxu0
        %v507 = vpop.f32.mrb[0].mxu0
        %v508 = vadd.f32 %v395, %v507
        %v509 = vpop.f32.mrb[0].mxu0
        %510 = vmatprep.mubr.bf16.mxu0 0
        %511 = vmatmul.mubr.bf16.gmra.mrb[0].mxu0 %v220
        %v512 = vpop.f32.mrb[0].mxu0
        %v513 = vadd.f32 %v400, %v512
        %v514 = vpop.f32.mrb[0].mxu0
        %v515 = vpop.f32.mrb[0].mxu0
        %v516 = vadd.f32 %v403, %v515
        %v517 = vpop.f32.mrb[0].mxu0
        %518 = vmatprep.mubr.bf16.mxu0 0
        %519 = vmatmul.mubr.bf16.gmra.mrb[0].mxu0 %v221
        %v520 = vpop.f32.mrb[0].mxu0
        %v521 = vadd.f32 %v408, %v520
        %v522 = vpop.f32.mrb[0].mxu0
        %v523 = vpop.f32.mrb[0].mxu0
        %v524 = vadd.f32 %v411, %v523
        %v525 = vpop.f32.mrb[0].mxu0
        %526 = vmatprep.mubr.bf16.mxu0 0
        %527 = vmatmul.mubr.bf16.gmra.mrb[0].mxu0 %v222
        %v528 = vpop.f32.mrb[0].mxu0
        %v529 = vadd.f32 %v416, %v528
        %v530 = vpop.f32.mrb[0].mxu0
        %v531 = vpop.f32.mrb[0].mxu0
        %v532 = vadd.f32 %v419, %v531
        %v533 = vpop.f32.mrb[0].mxu0
        %534 = vdwg.mxu0
        %vm535 = vcmask 1045504
        %v536 = vrot.slane %v199, 2
        %v537 = vrot.slane %v200, 2
        %v538 = vsel %vm535, %v536, %v537
        %v539 = vrot.slane %v201, 2
        %v540 = vrot.slane %v202, 2
        %v541 = vsel %vm535, %v539, %v540
        %v542 = vrot.slane %v203, 2
        %v543 = vrot.slane %v204, 2
        %v544 = vsel %vm535, %v542, %v543
        %v545 = vrot.slane %v205, 2
        %v546 = vrot.slane %v206, 2
        %v547 = vsel %vm535, %v545, %v546
        %v548 = vrot.slane %v207, 2
        %v549 = vrot.slane %v208, 2
        %v550 = vsel %vm535, %v548, %v549
        %v551 = vrot.slane %v209, 2
        %v552 = vrot.slane %v210, 2
        %v553 = vsel %vm535, %v551, %v552
        %v554 = vrot.slane %v211, 2
        %v555 = vrot.slane %v212, 2
        %v556 = vsel %vm535, %v554, %v555
        %v557 = vrot.slane %v213, 2
        %v558 = vrot.slane %v214, 2
        %v559 = vsel %vm535, %v557, %v558
        %v568 = vpack.c.bf16 %v541, %v538
        %v569 = vpack.c.bf16 %v547, %v544
        %v570 = vpack.c.bf16 %v553, %v550
        %v571 = vpack.c.bf16 %v559, %v556
        %s572 = scalar_lea.vmem %s1, 128
        %v573 = vld [vmem:[%s572] sm:$0xf]
        %v574 = vld [vmem:[%s572 + $0x4] sm:$0xf]
        %v575 = vld [vmem:[%s572 + $0x8] sm:$0xf]
        %v576 = vld [vmem:[%s572 + $0xc] sm:$0xf]
        %v577 = vld [vmem:[%s572 + $0x10] sm:$0xf]
        %v578 = vld [vmem:[%s572 + $0x14] sm:$0xf]
        %v579 = vld [vmem:[%s572 + $0x18] sm:$0xf]
        %v580 = vld [vmem:[%s572 + $0x1c] sm:$0xf]
        %v581 = vld [vmem:[%s572 + $0x20] sm:$0xf]
        %v582 = vld [vmem:[%s572 + $0x24] sm:$0xf]
        %v583 = vld [vmem:[%s572 + $0x28] sm:$0xf]
        %v584 = vld [vmem:[%s572 + $0x2c] sm:$0xf]
        %v585 = vld [vmem:[%s572 + $0x30] sm:$0xf]
        %v586 = vld [vmem:[%s572 + $0x34] sm:$0xf]
        %v587 = vld [vmem:[%s572 + $0x38] sm:$0xf]
        %v588 = vld [vmem:[%s572 + $0x3c] sm:$0xf]
        %v605 = vunpack.c.l.b16 %v573
        %v606 = vunpack.c.l.b16 %v574
        %v607 = vunpack.c.l.b16 %v575
        %v608 = vunpack.c.l.b16 %v576
        %v609 = vunpack.c.l.b16 %v577
        %v610 = vunpack.c.l.b16 %v578
        %v611 = vunpack.c.l.b16 %v579
        %v612 = vunpack.c.l.b16 %v580
        %v613 = vunpack.c.l.b16 %v581
        %v614 = vunpack.c.l.b16 %v582
        %v615 = vunpack.c.l.b16 %v583
        %v616 = vunpack.c.l.b16 %v584
        %v617 = vunpack.c.l.b16 %v585
        %v618 = vunpack.c.l.b16 %v586
        %v619 = vunpack.c.l.b16 %v587
        %v620 = vunpack.c.l.b16 %v588
        %v621 = vpack.c.b16 %v606, %v605
        %v622 = vpack.c.b16 %v608, %v607
        %v623 = vpack.c.b16 %v610, %v609
        %v624 = vpack.c.b16 %v612, %v611
        %v625 = vpack.c.b16 %v614, %v613
        %v626 = vpack.c.b16 %v616, %v615
        %v627 = vpack.c.b16 %v618, %v617
        %v628 = vpack.c.b16 %v620, %v619
        %637 = vmatprep.subr.bf16.mxu0 0
        %638 = vmatpush1.bf16.msra.mxu0 %v621
        %639 = vmatprep.subr.bf16.mxu0 0
        %640 = vmatpush1.bf16.msra.mxu0 %v622
        %641 = vmatprep.subr.bf16.mxu0 0
        %642 = vmatpush1.bf16.msra.mxu0 %v623
        %643 = vmatprep.subr.bf16.mxu0 0
        %644 = vmatpush1.bf16.msra.mxu0 %v624
        %645 = vmatprep.subr.bf16.mxu0 0
        %646 = vmatpush1.bf16.msra.mxu0 %v625
        %647 = vmatprep.subr.bf16.mxu0 0
        %648 = vmatpush1.bf16.msra.mxu0 %v626
        %649 = vmatprep.subr.bf16.mxu0 0
        %650 = vmatpush1.bf16.msra.mxu0 %v627
        %651 = vmatprep.subr.bf16.mxu0 0
        %652 = vmatpush1.bf16.msra.mxu0 %v628
        %653 = vmatprep.subr.bf16.mxu0 0
        %654 = vmatpush1.bf16.msra.mxu0 0
        %655 = vmatprep.subr.bf16.mxu0 0
        %656 = vmatpush1.bf16.msra.mxu0 0
        %657 = vmatprep.subr.bf16.mxu0 0
        %658 = vmatpush1.bf16.msra.mxu0 0
        %659 = vmatprep.subr.bf16.mxu0 0
        %660 = vmatpush1.bf16.msra.mxu0 0
        %661 = vmatprep.subr.bf16.mxu0 0
        %662 = vmatpush1.bf16.msra.mxu0 0
        %663 = vmatprep.subr.bf16.mxu0 0
        %664 = vmatpush1.bf16.msra.mxu0 0
        %665 = vmatprep.subr.bf16.mxu0 0
        %666 = vmatpush1.bf16.msra.mxu0 0
        %667 = vmatprep.subr.bf16.mxu0 0
        %668 = vmatpush1.bf16.msra.mxu0 0
        %669 = vmatprep.mubr.bf16.mxu0 0
        %670 = vmatmul.mubr.bf16.gmra.mrb[0].mxu0 %v568
        %v671 = vpop.f32.mrb[0].mxu0
        %v672 = vadd.f32 0.0, %v671
        %v673 = vpop.f32.mrb[0].mxu0
        %v674 = vpop.f32.mrb[0].mxu0
        %v675 = vadd.f32 0.0, %v674
        %v676 = vpop.f32.mrb[0].mxu0
        %677 = vmatprep.mubr.bf16.mxu0 0
        %678 = vmatmul.mubr.bf16.gmra.mrb[0].mxu0 %v569
        %v679 = vpop.f32.mrb[0].mxu0
        %v680 = vadd.f32 0.0, %v679
        %v681 = vpop.f32.mrb[0].mxu0
        %v682 = vpop.f32.mrb[0].mxu0
        %v683 = vadd.f32 0.0, %v682
        %v684 = vpop.f32.mrb[0].mxu0
        %685 = vmatprep.mubr.bf16.mxu0 0
        %686 = vmatmul.mubr.bf16.gmra.mrb[0].mxu0 %v570
        %v687 = vpop.f32.mrb[0].mxu0
        %v688 = vadd.f32 0.0, %v687
        %v689 = vpop.f32.mrb[0].mxu0
        %v690 = vpop.f32.mrb[0].mxu0
        %v691 = vadd.f32 0.0, %v690
        %v692 = vpop.f32.mrb[0].mxu0
        %693 = vmatprep.mubr.bf16.mxu0 0
        %694 = vmatmul.mubr.bf16.gmra.mrb[0].mxu0 %v571
        %v695 = vpop.f32.mrb[0].mxu0
        %v696 = vadd.f32 0.0, %v695
        %v697 = vpop.f32.mrb[0].mxu0
        %v698 = vpop.f32.mrb[0].mxu0
        %v699 = vadd.f32 0.0, %v698
        %v700 = vpop.f32.mrb[0].mxu0
        %701 = vdwg.mxu0
        %v702 = vadd.f32 %v505, %v672
        %v703 = vadd.f32 %v508, %v675
        %v704 = vadd.f32 %v513, %v680
        %v705 = vadd.f32 %v516, %v683
        %v706 = vadd.f32 %v521, %v688
        %v707 = vadd.f32 %v524, %v691
        %v708 = vadd.f32 %v529, %v696
        %v709 = vadd.f32 %v532, %v699
        %v710 = vpack.c.bf16 %v203, %v201
        %v711 = vpack.c.bf16 %v207, %v205
        %v712 = vpack.c.bf16 %v211, %v209
        %v713 = vpack.c.bf16 %v215, %v213
        %s714 = scalar_lea.vmem %s1, 192
        %v715 = vld [vmem:[%s714] sm:$0xf]
        %v716 = vld [vmem:[%s714 + $0x4] sm:$0xf]
        %v717 = vld [vmem:[%s714 + $0x8] sm:$0xf]
        %v718 = vld [vmem:[%s714 + $0xc] sm:$0xf]
        %v719 = vld [vmem:[%s714 + $0x10] sm:$0xf]
        %v720 = vld [vmem:[%s714 + $0x14] sm:$0xf]
        %v721 = vld [vmem:[%s714 + $0x18] sm:$0xf]
        %v722 = vld [vmem:[%s714 + $0x1c] sm:$0xf]
        %v723 = vld [vmem:[%s714 + $0x20] sm:$0xf]
        %v724 = vld [vmem:[%s714 + $0x24] sm:$0xf]
        %v725 = vld [vmem:[%s714 + $0x28] sm:$0xf]
        %v726 = vld [vmem:[%s714 + $0x2c] sm:$0xf]
        %v727 = vld [vmem:[%s714 + $0x30] sm:$0xf]
        %v728 = vld [vmem:[%s714 + $0x34] sm:$0xf]
        %v729 = vld [vmem:[%s714 + $0x38] sm:$0xf]
        %v730 = vld [vmem:[%s714 + $0x3c] sm:$0xf]
        %v747 = vunpack.c.l.b16 %v715
        %v748 = vunpack.c.l.b16 %v716
        %v749 = vunpack.c.l.b16 %v717
        %v750 = vunpack.c.l.b16 %v718
        %v751 = vunpack.c.l.b16 %v719
        %v752 = vunpack.c.l.b16 %v720
        %v753 = vunpack.c.l.b16 %v721
        %v754 = vunpack.c.l.b16 %v722
        %v755 = vunpack.c.l.b16 %v723
        %v756 = vunpack.c.l.b16 %v724
        %v757 = vunpack.c.l.b16 %v725
        %v758 = vunpack.c.l.b16 %v726
        %v759 = vunpack.c.l.b16 %v727
        %v760 = vunpack.c.l.b16 %v728
        %v761 = vunpack.c.l.b16 %v729
        %v762 = vunpack.c.l.b16 %v730
        %v763 = vpack.c.b16 %v748, %v747
        %v764 = vpack.c.b16 %v750, %v749
        %v765 = vpack.c.b16 %v752, %v751
        %v766 = vpack.c.b16 %v754, %v753
        %v767 = vpack.c.b16 %v756, %v755
        %v768 = vpack.c.b16 %v758, %v757
        %v769 = vpack.c.b16 %v760, %v759
        %v770 = vpack.c.b16 %v762, %v761
        %779 = vmatprep.subr.bf16.mxu0 0
        %780 = vmatpush1.bf16.msra.mxu0 %v763
        %781 = vmatprep.subr.bf16.mxu0 0
        %782 = vmatpush1.bf16.msra.mxu0 %v764
        %783 = vmatprep.subr.bf16.mxu0 0
        %784 = vmatpush1.bf16.msra.mxu0 %v765
        %785 = vmatprep.subr.bf16.mxu0 0
        %786 = vmatpush1.bf16.msra.mxu0 %v766
        %787 = vmatprep.subr.bf16.mxu0 0
        %788 = vmatpush1.bf16.msra.mxu0 %v767
        %789 = vmatprep.subr.bf16.mxu0 0
        %790 = vmatpush1.bf16.msra.mxu0 %v768
        %791 = vmatprep.subr.bf16.mxu0 0
        %792 = vmatpush1.bf16.msra.mxu0 %v769
        %793 = vmatprep.subr.bf16.mxu0 0
        %794 = vmatpush1.bf16.msra.mxu0 %v770
        %795 = vmatprep.subr.bf16.mxu0 0
        %796 = vmatpush1.bf16.msra.mxu0 0
        %797 = vmatprep.subr.bf16.mxu0 0
        %798 = vmatpush1.bf16.msra.mxu0 0
        %799 = vmatprep.subr.bf16.mxu0 0
        %800 = vmatpush1.bf16.msra.mxu0 0
        %801 = vmatprep.subr.bf16.mxu0 0
        %802 = vmatpush1.bf16.msra.mxu0 0
        %803 = vmatprep.subr.bf16.mxu0 0
        %804 = vmatpush1.bf16.msra.mxu0 0
        %805 = vmatprep.subr.bf16.mxu0 0
        %806 = vmatpush1.bf16.msra.mxu0 0
        %807 = vmatprep.subr.bf16.mxu0 0
        %808 = vmatpush1.bf16.msra.mxu0 0
        %809 = vmatprep.subr.bf16.mxu0 0
        %810 = vmatpush1.bf16.msra.mxu0 0
        %811 = vmatprep.mubr.bf16.mxu0 0
        %812 = vmatmul.mubr.bf16.gmra.mrb[0].mxu0 %v710
        %v813 = vpop.f32.mrb[0].mxu0
        %v814 = vadd.f32 0.0, %v813
        %v815 = vpop.f32.mrb[0].mxu0
        %v816 = vpop.f32.mrb[0].mxu0
        %v817 = vadd.f32 0.0, %v816
        %v818 = vpop.f32.mrb[0].mxu0
        %819 = vmatprep.mubr.bf16.mxu0 0
        %820 = vmatmul.mubr.bf16.gmra.mrb[0].mxu0 %v711
        %v821 = vpop.f32.mrb[0].mxu0
        %v822 = vadd.f32 0.0, %v821
        %v823 = vpop.f32.mrb[0].mxu0
        %v824 = vpop.f32.mrb[0].mxu0
        %v825 = vadd.f32 0.0, %v824
        %v826 = vpop.f32.mrb[0].mxu0
        %827 = vmatprep.mubr.bf16.mxu0 0
        %828 = vmatmul.mubr.bf16.gmra.mrb[0].mxu0 %v712
        %v829 = vpop.f32.mrb[0].mxu0
        %v830 = vadd.f32 0.0, %v829
        %v831 = vpop.f32.mrb[0].mxu0
        %v832 = vpop.f32.mrb[0].mxu0
        %v833 = vadd.f32 0.0, %v832
        %v834 = vpop.f32.mrb[0].mxu0
        %835 = vmatprep.mubr.bf16.mxu0 0
        %836 = vmatmul.mubr.bf16.gmra.mrb[0].mxu0 %v713
        %v837 = vpop.f32.mrb[0].mxu0
        %v838 = vadd.f32 0.0, %v837
        %v839 = vpop.f32.mrb[0].mxu0
        %v840 = vpop.f32.mrb[0].mxu0
        %v841 = vadd.f32 0.0, %v840
        %v842 = vpop.f32.mrb[0].mxu0
        %843 = vdwg.mxu0
        %v844 = vadd.f32 %v702, %v814
        %v845 = vadd.f32 %v703, %v817
        %v846 = vadd.f32 %v704, %v822
        %v847 = vadd.f32 %v705, %v825
        %v848 = vadd.f32 %v706, %v830
        %v849 = vadd.f32 %v707, %v833
        %v850 = vadd.f32 %v708, %v838
        %v851 = vadd.f32 %v709, %v841
        %v854 = vrot.slane %v215, 1
        %v855 = vrot.slane %v216, 1
        %v856 = vsel %vm255, %v854, %v855
        %v858 = vpack.c.bf16 %v264, %v261
        %v859 = vpack.c.bf16 %v270, %v267
        %v860 = vpack.c.bf16 %v276, %v273
        %v861 = vpack.c.bf16 %v856, %v279
        %s862 = scalar_lea.vmem %s1, 256
        %v863 = vld [vmem:[%s862] sm:$0xf]
        %v864 = vld [vmem:[%s862 + $0x4] sm:$0xf]
        %v865 = vld [vmem:[%s862 + $0x8] sm:$0xf]
        %v866 = vld [vmem:[%s862 + $0xc] sm:$0xf]
        %v867 = vld [vmem:[%s862 + $0x10] sm:$0xf]
        %v868 = vld [vmem:[%s862 + $0x14] sm:$0xf]
        %v869 = vld [vmem:[%s862 + $0x18] sm:$0xf]
        %v870 = vld [vmem:[%s862 + $0x1c] sm:$0xf]
        %v871 = vld [vmem:[%s862 + $0x20] sm:$0xf]
        %v872 = vld [vmem:[%s862 + $0x24] sm:$0xf]
        %v873 = vld [vmem:[%s862 + $0x28] sm:$0xf]
        %v874 = vld [vmem:[%s862 + $0x2c] sm:$0xf]
        %v875 = vld [vmem:[%s862 + $0x30] sm:$0xf]
        %v876 = vld [vmem:[%s862 + $0x34] sm:$0xf]
        %v877 = vld [vmem:[%s862 + $0x38] sm:$0xf]
        %v878 = vld [vmem:[%s862 + $0x3c] sm:$0xf]
        %v895 = vunpack.c.l.b16 %v863
        %v896 = vunpack.c.l.b16 %v864
        %v897 = vunpack.c.l.b16 %v865
        %v898 = vunpack.c.l.b16 %v866
        %v899 = vunpack.c.l.b16 %v867
        %v900 = vunpack.c.l.b16 %v868
        %v901 = vunpack.c.l.b16 %v869
        %v902 = vunpack.c.l.b16 %v870
        %v903 = vunpack.c.l.b16 %v871
        %v904 = vunpack.c.l.b16 %v872
        %v905 = vunpack.c.l.b16 %v873
        %v906 = vunpack.c.l.b16 %v874
        %v907 = vunpack.c.l.b16 %v875
        %v908 = vunpack.c.l.b16 %v876
        %v909 = vunpack.c.l.b16 %v877
        %v910 = vunpack.c.l.b16 %v878
        %v911 = vpack.c.b16 %v896, %v895
        %v912 = vpack.c.b16 %v898, %v897
        %v913 = vpack.c.b16 %v900, %v899
        %v914 = vpack.c.b16 %v902, %v901
        %v915 = vpack.c.b16 %v904, %v903
        %v916 = vpack.c.b16 %v906, %v905
        %v917 = vpack.c.b16 %v908, %v907
        %v918 = vpack.c.b16 %v910, %v909
        %927 = vmatprep.subr.bf16.mxu0 0
        %928 = vmatpush1.bf16.msra.mxu0 %v911
        %929 = vmatprep.subr.bf16.mxu0 0
        %930 = vmatpush1.bf16.msra.mxu0 %v912
        %931 = vmatprep.subr.bf16.mxu0 0
        %932 = vmatpush1.bf16.msra.mxu0 %v913
        %933 = vmatprep.subr.bf16.mxu0 0
        %934 = vmatpush1.bf16.msra.mxu0 %v914
        %935 = vmatprep.subr.bf16.mxu0 0
        %936 = vmatpush1.bf16.msra.mxu0 %v915
        %937 = vmatprep.subr.bf16.mxu0 0
        %938 = vmatpush1.bf16.msra.mxu0 %v916
        %939 = vmatprep.subr.bf16.mxu0 0
        %940 = vmatpush1.bf16.msra.mxu0 %v917
        %941 = vmatprep.subr.bf16.mxu0 0
        %942 = vmatpush1.bf16.msra.mxu0 %v918
        %943 = vmatprep.subr.bf16.mxu0 0
        %944 = vmatpush1.bf16.msra.mxu0 0
        %945 = vmatprep.subr.bf16.mxu0 0
        %946 = vmatpush1.bf16.msra.mxu0 0
        %947 = vmatprep.subr.bf16.mxu0 0
        %948 = vmatpush1.bf16.msra.mxu0 0
        %949 = vmatprep.subr.bf16.mxu0 0
        %950 = vmatpush1.bf16.msra.mxu0 0
        %951 = vmatprep.subr.bf16.mxu0 0
        %952 = vmatpush1.bf16.msra.mxu0 0
        %953 = vmatprep.subr.bf16.mxu0 0
        %954 = vmatpush1.bf16.msra.mxu0 0
        %955 = vmatprep.subr.bf16.mxu0 0
        %956 = vmatpush1.bf16.msra.mxu0 0
        %957 = vmatprep.subr.bf16.mxu0 0
        %958 = vmatpush1.bf16.msra.mxu0 0
        %959 = vmatprep.mubr.bf16.mxu0 0
        %960 = vmatmul.mubr.bf16.gmra.mrb[0].mxu0 %v858
        %v961 = vpop.f32.mrb[0].mxu0
        %v962 = vadd.f32 0.0, %v961
        %v963 = vpop.f32.mrb[0].mxu0
        %v964 = vpop.f32.mrb[0].mxu0
        %v965 = vadd.f32 0.0, %v964
        %v966 = vpop.f32.mrb[0].mxu0
        %967 = vmatprep.mubr.bf16.mxu0 0
        %968 = vmatmul.mubr.bf16.gmra.mrb[0].mxu0 %v859
        %v969 = vpop.f32.mrb[0].mxu0
        %v970 = vadd.f32 0.0, %v969
        %v971 = vpop.f32.mrb[0].mxu0
        %v972 = vpop.f32.mrb[0].mxu0
        %v973 = vadd.f32 0.0, %v972
        %v974 = vpop.f32.mrb[0].mxu0
        %975 = vmatprep.mubr.bf16.mxu0 0
        %976 = vmatmul.mubr.bf16.gmra.mrb[0].mxu0 %v860
        %v977 = vpop.f32.mrb[0].mxu0
        %v978 = vadd.f32 0.0, %v977
        %v979 = vpop.f32.mrb[0].mxu0
        %v980 = vpop.f32.mrb[0].mxu0
        %v981 = vadd.f32 0.0, %v980
        %v982 = vpop.f32.mrb[0].mxu0
        %983 = vmatprep.mubr.bf16.mxu0 0
        %984 = vmatmul.mubr.bf16.gmra.mrb[0].mxu0 %v861
        %v985 = vpop.f32.mrb[0].mxu0
        %v986 = vadd.f32 0.0, %v985
        %v987 = vpop.f32.mrb[0].mxu0
        %v988 = vpop.f32.mrb[0].mxu0
        %v989 = vadd.f32 0.0, %v988
        %v990 = vpop.f32.mrb[0].mxu0
        %991 = vdwg.mxu0
        %v992 = vadd.f32 %v844, %v962
        %v993 = vadd.f32 %v845, %v965
        %v994 = vadd.f32 %v846, %v970
        %v995 = vadd.f32 %v847, %v973
        %v996 = vadd.f32 %v848, %v978
        %v997 = vadd.f32 %v849, %v981
        %v998 = vadd.f32 %v850, %v986
        %v999 = vadd.f32 %v851, %v989
        %v1000 = vrot.slane %v215, 2
        %v1001 = vrot.slane %v216, 2
        %v1002 = vsel %vm535, %v1000, %v1001
        %v1004 = vpack.c.bf16 %v544, %v541
        %v1005 = vpack.c.bf16 %v550, %v547
        %v1006 = vpack.c.bf16 %v556, %v553
        %v1007 = vpack.c.bf16 %v1002, %v559
        %s1008 = scalar_lea.vmem %s1, 320
        %v1009 = vld [vmem:[%s1008] sm:$0xf]
        %v1010 = vld [vmem:[%s1008 + $0x4] sm:$0xf]
        %v1011 = vld [vmem:[%s1008 + $0x8] sm:$0xf]
        %v1012 = vld [vmem:[%s1008 + $0xc] sm:$0xf]
        %v1013 = vld [vmem:[%s1008 + $0x10] sm:$0xf]
        %v1014 = vld [vmem:[%s1008 + $0x14] sm:$0xf]
        %v1015 = vld [vmem:[%s1008 + $0x18] sm:$0xf]
        %v1016 = vld [vmem:[%s1008 + $0x1c] sm:$0xf]
        %v1017 = vld [vmem:[%s1008 + $0x20] sm:$0xf]
        %v1018 = vld [vmem:[%s1008 + $0x24] sm:$0xf]
        %v1019 = vld [vmem:[%s1008 + $0x28] sm:$0xf]
        %v1020 = vld [vmem:[%s1008 + $0x2c] sm:$0xf]
        %v1021 = vld [vmem:[%s1008 + $0x30] sm:$0xf]
        %v1022 = vld [vmem:[%s1008 + $0x34] sm:$0xf]
        %v1023 = vld [vmem:[%s1008 + $0x38] sm:$0xf]
        %v1024 = vld [vmem:[%s1008 + $0x3c] sm:$0xf]
        %v1041 = vunpack.c.l.b16 %v1009
        %v1042 = vunpack.c.l.b16 %v1010
        %v1043 = vunpack.c.l.b16 %v1011
        %v1044 = vunpack.c.l.b16 %v1012
        %v1045 = vunpack.c.l.b16 %v1013
        %v1046 = vunpack.c.l.b16 %v1014
        %v1047 = vunpack.c.l.b16 %v1015
        %v1048 = vunpack.c.l.b16 %v1016
        %v1049 = vunpack.c.l.b16 %v1017
        %v1050 = vunpack.c.l.b16 %v1018
        %v1051 = vunpack.c.l.b16 %v1019
        %v1052 = vunpack.c.l.b16 %v1020
        %v1053 = vunpack.c.l.b16 %v1021
        %v1054 = vunpack.c.l.b16 %v1022
        %v1055 = vunpack.c.l.b16 %v1023
        %v1056 = vunpack.c.l.b16 %v1024
        %v1057 = vpack.c.b16 %v1042, %v1041
        %v1058 = vpack.c.b16 %v1044, %v1043
        %v1059 = vpack.c.b16 %v1046, %v1045
        %v1060 = vpack.c.b16 %v1048, %v1047
        %v1061 = vpack.c.b16 %v1050, %v1049
        %v1062 = vpack.c.b16 %v1052, %v1051
        %v1063 = vpack.c.b16 %v1054, %v1053
        %v1064 = vpack.c.b16 %v1056, %v1055
        %1073 = vmatprep.subr.bf16.mxu0 0
        %1074 = vmatpush1.bf16.msra.mxu0 %v1057
        %1075 = vmatprep.subr.bf16.mxu0 0
        %1076 = vmatpush1.bf16.msra.mxu0 %v1058
        %1077 = vmatprep.subr.bf16.mxu0 0
        %1078 = vmatpush1.bf16.msra.mxu0 %v1059
        %1079 = vmatprep.subr.bf16.mxu0 0
        %1080 = vmatpush1.bf16.msra.mxu0 %v1060
        %1081 = vmatprep.subr.bf16.mxu0 0
        %1082 = vmatpush1.bf16.msra.mxu0 %v1061
        %1083 = vmatprep.subr.bf16.mxu0 0
        %1084 = vmatpush1.bf16.msra.mxu0 %v1062
        %1085 = vmatprep.subr.bf16.mxu0 0
        %1086 = vmatpush1.bf16.msra.mxu0 %v1063
        %1087 = vmatprep.subr.bf16.mxu0 0
        %1088 = vmatpush1.bf16.msra.mxu0 %v1064
        %1089 = vmatprep.subr.bf16.mxu0 0
        %1090 = vmatpush1.bf16.msra.mxu0 0
        %1091 = vmatprep.subr.bf16.mxu0 0
        %1092 = vmatpush1.bf16.msra.mxu0 0
        %1093 = vmatprep.subr.bf16.mxu0 0
        %1094 = vmatpush1.bf16.msra.mxu0 0
        %1095 = vmatprep.subr.bf16.mxu0 0
        %1096 = vmatpush1.bf16.msra.mxu0 0
        %1097 = vmatprep.subr.bf16.mxu0 0
        %1098 = vmatpush1.bf16.msra.mxu0 0
        %1099 = vmatprep.subr.bf16.mxu0 0
        %1100 = vmatpush1.bf16.msra.mxu0 0
        %1101 = vmatprep.subr.bf16.mxu0 0
        %1102 = vmatpush1.bf16.msra.mxu0 0
        %1103 = vmatprep.subr.bf16.mxu0 0
        %1104 = vmatpush1.bf16.msra.mxu0 0
        %1105 = vmatprep.mubr.bf16.mxu0 0
        %1106 = vmatmul.mubr.bf16.gmra.mrb[0].mxu0 %v1004
        %v1107 = vpop.f32.mrb[0].mxu0
        %v1108 = vadd.f32 0.0, %v1107
        %v1109 = vpop.f32.mrb[0].mxu0
        %v1110 = vpop.f32.mrb[0].mxu0
        %v1111 = vadd.f32 0.0, %v1110
        %v1112 = vpop.f32.mrb[0].mxu0
        %1113 = vmatprep.mubr.bf16.mxu0 0
        %1114 = vmatmul.mubr.bf16.gmra.mrb[0].mxu0 %v1005
        %v1115 = vpop.f32.mrb[0].mxu0
        %v1116 = vadd.f32 0.0, %v1115
        %v1117 = vpop.f32.mrb[0].mxu0
        %v1118 = vpop.f32.mrb[0].mxu0
        %v1119 = vadd.f32 0.0, %v1118
        %v1120 = vpop.f32.mrb[0].mxu0
        %1121 = vmatprep.mubr.bf16.mxu0 0
        %1122 = vmatmul.mubr.bf16.gmra.mrb[0].mxu0 %v1006
        %v1123 = vpop.f32.mrb[0].mxu0
        %v1124 = vadd.f32 0.0, %v1123
        %v1125 = vpop.f32.mrb[0].mxu0
        %v1126 = vpop.f32.mrb[0].mxu0
        %v1127 = vadd.f32 0.0, %v1126
        %v1128 = vpop.f32.mrb[0].mxu0
        %1129 = vmatprep.mubr.bf16.mxu0 0
        %1130 = vmatmul.mubr.bf16.gmra.mrb[0].mxu0 %v1007
        %v1131 = vpop.f32.mrb[0].mxu0
        %v1132 = vadd.f32 0.0, %v1131
        %v1133 = vpop.f32.mrb[0].mxu0
        %v1134 = vpop.f32.mrb[0].mxu0
        %v1135 = vadd.f32 0.0, %v1134
        %v1136 = vpop.f32.mrb[0].mxu0
        %1137 = vdwg.mxu0
        %v1138 = vadd.f32 %v992, %v1108
        %v1139 = vadd.f32 %v993, %v1111
        %v1140 = vadd.f32 %v994, %v1116
        %v1141 = vadd.f32 %v995, %v1119
        %v1142 = vadd.f32 %v996, %v1124
        %v1143 = vadd.f32 %v997, %v1127
        %v1144 = vadd.f32 %v998, %v1132
        %v1145 = vadd.f32 %v999, %v1135
        %v1146 = vpack.c.bf16 %v217, %v215
        %s1147 = scalar_lea.vmem %s1, 384
        %v1148 = vld [vmem:[%s1147] sm:$0xf]
        %v1149 = vld [vmem:[%s1147 + $0x4] sm:$0xf]
        %v1150 = vld [vmem:[%s1147 + $0x8] sm:$0xf]
        %v1151 = vld [vmem:[%s1147 + $0xc] sm:$0xf]
        %v1152 = vld [vmem:[%s1147 + $0x10] sm:$0xf]
        %v1153 = vld [vmem:[%s1147 + $0x14] sm:$0xf]
        %v1154 = vld [vmem:[%s1147 + $0x18] sm:$0xf]
        %v1155 = vld [vmem:[%s1147 + $0x1c] sm:$0xf]
        %v1156 = vld [vmem:[%s1147 + $0x20] sm:$0xf]
        %v1157 = vld [vmem:[%s1147 + $0x24] sm:$0xf]
        %v1158 = vld [vmem:[%s1147 + $0x28] sm:$0xf]
        %v1159 = vld [vmem:[%s1147 + $0x2c] sm:$0xf]
        %v1160 = vld [vmem:[%s1147 + $0x30] sm:$0xf]
        %v1161 = vld [vmem:[%s1147 + $0x34] sm:$0xf]
        %v1162 = vld [vmem:[%s1147 + $0x38] sm:$0xf]
        %v1163 = vld [vmem:[%s1147 + $0x3c] sm:$0xf]
        %v1180 = vunpack.c.l.b16 %v1148
        %v1181 = vunpack.c.l.b16 %v1149
        %v1182 = vunpack.c.l.b16 %v1150
        %v1183 = vunpack.c.l.b16 %v1151
        %v1184 = vunpack.c.l.b16 %v1152
        %v1185 = vunpack.c.l.b16 %v1153
        %v1186 = vunpack.c.l.b16 %v1154
        %v1187 = vunpack.c.l.b16 %v1155
        %v1188 = vunpack.c.l.b16 %v1156
        %v1189 = vunpack.c.l.b16 %v1157
        %v1190 = vunpack.c.l.b16 %v1158
        %v1191 = vunpack.c.l.b16 %v1159
        %v1192 = vunpack.c.l.b16 %v1160
        %v1193 = vunpack.c.l.b16 %v1161
        %v1194 = vunpack.c.l.b16 %v1162
        %v1195 = vunpack.c.l.b16 %v1163
        %v1196 = vpack.c.b16 %v1181, %v1180
        %v1197 = vpack.c.b16 %v1183, %v1182
        %v1198 = vpack.c.b16 %v1185, %v1184
        %v1199 = vpack.c.b16 %v1187, %v1186
        %v1200 = vpack.c.b16 %v1189, %v1188
        %v1201 = vpack.c.b16 %v1191, %v1190
        %v1202 = vpack.c.b16 %v1193, %v1192
        %v1203 = vpack.c.b16 %v1195, %v1194
        %1212 = vmatprep.subr.bf16.mxu0 0
        %1213 = vmatpush1.bf16.msra.mxu0 %v1196
        %1214 = vmatprep.subr.bf16.mxu0 0
        %1215 = vmatpush1.bf16.msra.mxu0 %v1197
        %1216 = vmatprep.subr.bf16.mxu0 0
        %1217 = vmatpush1.bf16.msra.mxu0 %v1198
        %1218 = vmatprep.subr.bf16.mxu0 0
        %1219 = vmatpush1.bf16.msra.mxu0 %v1199
        %1220 = vmatprep.subr.bf16.mxu0 0
        %1221 = vmatpush1.bf16.msra.mxu0 %v1200
        %1222 = vmatprep.subr.bf16.mxu0 0
        %1223 = vmatpush1.bf16.msra.mxu0 %v1201
        %1224 = vmatprep.subr.bf16.mxu0 0
        %1225 = vmatpush1.bf16.msra.mxu0 %v1202
        %1226 = vmatprep.subr.bf16.mxu0 0
        %1227 = vmatpush1.bf16.msra.mxu0 %v1203
        %1228 = vmatprep.subr.bf16.mxu0 0
        %1229 = vmatpush1.bf16.msra.mxu0 0
        %1230 = vmatprep.subr.bf16.mxu0 0
        %1231 = vmatpush1.bf16.msra.mxu0 0
        %1232 = vmatprep.subr.bf16.mxu0 0
        %1233 = vmatpush1.bf16.msra.mxu0 0
        %1234 = vmatprep.subr.bf16.mxu0 0
        %1235 = vmatpush1.bf16.msra.mxu0 0
        %1236 = vmatprep.subr.bf16.mxu0 0
        %1237 = vmatpush1.bf16.msra.mxu0 0
        %1238 = vmatprep.subr.bf16.mxu0 0
        %1239 = vmatpush1.bf16.msra.mxu0 0
        %1240 = vmatprep.subr.bf16.mxu0 0
        %1241 = vmatpush1.bf16.msra.mxu0 0
        %1242 = vmatprep.subr.bf16.mxu0 0
        %1243 = vmatpush1.bf16.msra.mxu0 0
        %1244 = vmatprep.mubr.bf16.mxu0 0
        %1245 = vmatmul.mubr.bf16.gmra.mrb[0].mxu0 %v220
        %v1246 = vpop.f32.mrb[0].mxu0
        %v1247 = vadd.f32 0.0, %v1246
        %v1248 = vpop.f32.mrb[0].mxu0
        %v1249 = vpop.f32.mrb[0].mxu0
        %v1250 = vadd.f32 0.0, %v1249
        %v1251 = vpop.f32.mrb[0].mxu0
        %1252 = vmatprep.mubr.bf16.mxu0 0
        %1253 = vmatmul.mubr.bf16.gmra.mrb[0].mxu0 %v221
        %v1254 = vpop.f32.mrb[0].mxu0
        %v1255 = vadd.f32 0.0, %v1254
        %v1256 = vpop.f32.mrb[0].mxu0
        %v1257 = vpop.f32.mrb[0].mxu0
        %v1258 = vadd.f32 0.0, %v1257
        %v1259 = vpop.f32.mrb[0].mxu0
        %1260 = vmatprep.mubr.bf16.mxu0 0
        %1261 = vmatmul.mubr.bf16.gmra.mrb[0].mxu0 %v222
        %v1262 = vpop.f32.mrb[0].mxu0
        %v1263 = vadd.f32 0.0, %v1262
        %v1264 = vpop.f32.mrb[0].mxu0
        %v1265 = vpop.f32.mrb[0].mxu0
        %v1266 = vadd.f32 0.0, %v1265
        %v1267 = vpop.f32.mrb[0].mxu0
        %1268 = vmatprep.mubr.bf16.mxu0 0
        %1269 = vmatmul.mubr.bf16.gmra.mrb[0].mxu0 %v1146
        %v1270 = vpop.f32.mrb[0].mxu0
        %v1271 = vadd.f32 0.0, %v1270
        %v1272 = vpop.f32.mrb[0].mxu0
        %v1273 = vpop.f32.mrb[0].mxu0
        %v1274 = vadd.f32 0.0, %v1273
        %v1275 = vpop.f32.mrb[0].mxu0
        %1276 = vdwg.mxu0
        %v1277 = vadd.f32 %v1138, %v1247
        %v1278 = vadd.f32 %v1139, %v1250
        %v1279 = vadd.f32 %v1140, %v1255
        %v1280 = vadd.f32 %v1141, %v1258
        %v1281 = vadd.f32 %v1142, %v1263
        %v1282 = vadd.f32 %v1143, %v1266
        %v1283 = vadd.f32 %v1144, %v1271
        %v1284 = vadd.f32 %v1145, %v1274
        %v1287 = vrot.slane %v217, 1
        %v1288 = vrot.slane %v218, 1
        %v1289 = vsel %vm255, %v1287, %v1288
        %v1291 = vpack.c.bf16 %v1289, %v856
        %s1292 = scalar_lea.vmem %s1, 448
        %v1293 = vld [vmem:[%s1292] sm:$0xf]
        %v1294 = vld [vmem:[%s1292 + $0x4] sm:$0xf]
        %v1295 = vld [vmem:[%s1292 + $0x8] sm:$0xf]
        %v1296 = vld [vmem:[%s1292 + $0xc] sm:$0xf]
        %v1297 = vld [vmem:[%s1292 + $0x10] sm:$0xf]
        %v1298 = vld [vmem:[%s1292 + $0x14] sm:$0xf]
        %v1299 = vld [vmem:[%s1292 + $0x18] sm:$0xf]
        %v1300 = vld [vmem:[%s1292 + $0x1c] sm:$0xf]
        %v1301 = vld [vmem:[%s1292 + $0x20] sm:$0xf]
        %v1302 = vld [vmem:[%s1292 + $0x24] sm:$0xf]
        %v1303 = vld [vmem:[%s1292 + $0x28] sm:$0xf]
        %v1304 = vld [vmem:[%s1292 + $0x2c] sm:$0xf]
        %v1305 = vld [vmem:[%s1292 + $0x30] sm:$0xf]
        %v1306 = vld [vmem:[%s1292 + $0x34] sm:$0xf]
        %v1307 = vld [vmem:[%s1292 + $0x38] sm:$0xf]
        %v1308 = vld [vmem:[%s1292 + $0x3c] sm:$0xf]
        %v1325 = vunpack.c.l.b16 %v1293
        %v1326 = vunpack.c.l.b16 %v1294
        %v1327 = vunpack.c.l.b16 %v1295
        %v1328 = vunpack.c.l.b16 %v1296
        %v1329 = vunpack.c.l.b16 %v1297
        %v1330 = vunpack.c.l.b16 %v1298
        %v1331 = vunpack.c.l.b16 %v1299
        %v1332 = vunpack.c.l.b16 %v1300
        %v1333 = vunpack.c.l.b16 %v1301
        %v1334 = vunpack.c.l.b16 %v1302
        %v1335 = vunpack.c.l.b16 %v1303
        %v1336 = vunpack.c.l.b16 %v1304
        %v1337 = vunpack.c.l.b16 %v1305
        %v1338 = vunpack.c.l.b16 %v1306
        %v1339 = vunpack.c.l.b16 %v1307
        %v1340 = vunpack.c.l.b16 %v1308
        %v1341 = vpack.c.b16 %v1326, %v1325
        %v1342 = vpack.c.b16 %v1328, %v1327
        %v1343 = vpack.c.b16 %v1330, %v1329
        %v1344 = vpack.c.b16 %v1332, %v1331
        %v1345 = vpack.c.b16 %v1334, %v1333
        %v1346 = vpack.c.b16 %v1336, %v1335
        %v1347 = vpack.c.b16 %v1338, %v1337
        %v1348 = vpack.c.b16 %v1340, %v1339
        %1357 = vmatprep.subr.bf16.mxu0 0
        %1358 = vmatpush1.bf16.msra.mxu0 %v1341
        %1359 = vmatprep.subr.bf16.mxu0 0
        %1360 = vmatpush1.bf16.msra.mxu0 %v1342
        %1361 = vmatprep.subr.bf16.mxu0 0
        %1362 = vmatpush1.bf16.msra.mxu0 %v1343
        %1363 = vmatprep.subr.bf16.mxu0 0
        %1364 = vmatpush1.bf16.msra.mxu0 %v1344
        %1365 = vmatprep.subr.bf16.mxu0 0
        %1366 = vmatpush1.bf16.msra.mxu0 %v1345
        %1367 = vmatprep.subr.bf16.mxu0 0
        %1368 = vmatpush1.bf16.msra.mxu0 %v1346
        %1369 = vmatprep.subr.bf16.mxu0 0
        %1370 = vmatpush1.bf16.msra.mxu0 %v1347
        %1371 = vmatprep.subr.bf16.mxu0 0
        %1372 = vmatpush1.bf16.msra.mxu0 %v1348
        %1373 = vmatprep.subr.bf16.mxu0 0
        %1374 = vmatpush1.bf16.msra.mxu0 0
        %1375 = vmatprep.subr.bf16.mxu0 0
        %1376 = vmatpush1.bf16.msra.mxu0 0
        %1377 = vmatprep.subr.bf16.mxu0 0
        %1378 = vmatpush1.bf16.msra.mxu0 0
        %1379 = vmatprep.subr.bf16.mxu0 0
        %1380 = vmatpush1.bf16.msra.mxu0 0
        %1381 = vmatprep.subr.bf16.mxu0 0
        %1382 = vmatpush1.bf16.msra.mxu0 0
        %1383 = vmatprep.subr.bf16.mxu0 0
        %1384 = vmatpush1.bf16.msra.mxu0 0
        %1385 = vmatprep.subr.bf16.mxu0 0
        %1386 = vmatpush1.bf16.msra.mxu0 0
        %1387 = vmatprep.subr.bf16.mxu0 0
        %1388 = vmatpush1.bf16.msra.mxu0 0
        %1389 = vmatprep.mubr.bf16.mxu0 0
        %1390 = vmatmul.mubr.bf16.gmra.mrb[0].mxu0 %v289
        %v1391 = vpop.f32.mrb[0].mxu0
        %v1392 = vadd.f32 0.0, %v1391
        %v1393 = vpop.f32.mrb[0].mxu0
        %v1394 = vpop.f32.mrb[0].mxu0
        %v1395 = vadd.f32 0.0, %v1394
        %v1396 = vpop.f32.mrb[0].mxu0
        %1397 = vmatprep.mubr.bf16.mxu0 0
        %1398 = vmatmul.mubr.bf16.gmra.mrb[0].mxu0 %v290
        %v1399 = vpop.f32.mrb[0].mxu0
        %v1400 = vadd.f32 0.0, %v1399
        %v1401 = vpop.f32.mrb[0].mxu0
        %v1402 = vpop.f32.mrb[0].mxu0
        %v1403 = vadd.f32 0.0, %v1402
        %v1404 = vpop.f32.mrb[0].mxu0
        %1405 = vmatprep.mubr.bf16.mxu0 0
        %1406 = vmatmul.mubr.bf16.gmra.mrb[0].mxu0 %v291
        %v1407 = vpop.f32.mrb[0].mxu0
        %v1408 = vadd.f32 0.0, %v1407
        %v1409 = vpop.f32.mrb[0].mxu0
        %v1410 = vpop.f32.mrb[0].mxu0
        %v1411 = vadd.f32 0.0, %v1410
        %v1412 = vpop.f32.mrb[0].mxu0
        %1413 = vmatprep.mubr.bf16.mxu0 0
        %1414 = vmatmul.mubr.bf16.gmra.mrb[0].mxu0 %v1291
        %v1415 = vpop.f32.mrb[0].mxu0
        %v1416 = vadd.f32 0.0, %v1415
        %v1417 = vpop.f32.mrb[0].mxu0
        %v1418 = vpop.f32.mrb[0].mxu0
        %v1419 = vadd.f32 0.0, %v1418
        %v1420 = vpop.f32.mrb[0].mxu0
        %1421 = vdwg.mxu0
        %v1422 = vadd.f32 %v1277, %v1392
        %v1423 = vadd.f32 %v1278, %v1395
        %v1424 = vadd.f32 %v1279, %v1400
        %v1425 = vadd.f32 %v1280, %v1403
        %v1426 = vadd.f32 %v1281, %v1408
        %v1427 = vadd.f32 %v1282, %v1411
        %v1428 = vadd.f32 %v1283, %v1416
        %v1429 = vadd.f32 %v1284, %v1419
        %v1430 = vrot.slane %v217, 2
        %v1431 = vrot.slane %v218, 2
        %v1432 = vsel %vm535, %v1430, %v1431
        %v1434 = vpack.c.bf16 %v1432, %v1002
        %s1435 = scalar_lea.vmem %s1, 512
        %v1436 = vld [vmem:[%s1435] sm:$0xf]
        %v1437 = vld [vmem:[%s1435 + $0x4] sm:$0xf]
        %v1438 = vld [vmem:[%s1435 + $0x8] sm:$0xf]
        %v1439 = vld [vmem:[%s1435 + $0xc] sm:$0xf]
        %v1440 = vld [vmem:[%s1435 + $0x10] sm:$0xf]
        %v1441 = vld [vmem:[%s1435 + $0x14] sm:$0xf]
        %v1442 = vld [vmem:[%s1435 + $0x18] sm:$0xf]
        %v1443 = vld [vmem:[%s1435 + $0x1c] sm:$0xf]
        %v1444 = vld [vmem:[%s1435 + $0x20] sm:$0xf]
        %v1445 = vld [vmem:[%s1435 + $0x24] sm:$0xf]
        %v1446 = vld [vmem:[%s1435 + $0x28] sm:$0xf]
        %v1447 = vld [vmem:[%s1435 + $0x2c] sm:$0xf]
        %v1448 = vld [vmem:[%s1435 + $0x30] sm:$0xf]
        %v1449 = vld [vmem:[%s1435 + $0x34] sm:$0xf]
        %v1450 = vld [vmem:[%s1435 + $0x38] sm:$0xf]
        %v1451 = vld [vmem:[%s1435 + $0x3c] sm:$0xf]
        %v1468 = vunpack.c.l.b16 %v1436
        %v1469 = vunpack.c.l.b16 %v1437
        %v1470 = vunpack.c.l.b16 %v1438
        %v1471 = vunpack.c.l.b16 %v1439
        %v1472 = vunpack.c.l.b16 %v1440
        %v1473 = vunpack.c.l.b16 %v1441
        %v1474 = vunpack.c.l.b16 %v1442
        %v1475 = vunpack.c.l.b16 %v1443
        %v1476 = vunpack.c.l.b16 %v1444
        %v1477 = vunpack.c.l.b16 %v1445
        %v1478 = vunpack.c.l.b16 %v1446
        %v1479 = vunpack.c.l.b16 %v1447
        %v1480 = vunpack.c.l.b16 %v1448
        %v1481 = vunpack.c.l.b16 %v1449
        %v1482 = vunpack.c.l.b16 %v1450
        %v1483 = vunpack.c.l.b16 %v1451
        %v1484 = vpack.c.b16 %v1469, %v1468
        %v1485 = vpack.c.b16 %v1471, %v1470
        %v1486 = vpack.c.b16 %v1473, %v1472
        %v1487 = vpack.c.b16 %v1475, %v1474
        %v1488 = vpack.c.b16 %v1477, %v1476
        %v1489 = vpack.c.b16 %v1479, %v1478
        %v1490 = vpack.c.b16 %v1481, %v1480
        %v1491 = vpack.c.b16 %v1483, %v1482
        %1500 = vmatprep.subr.bf16.mxu0 0
        %1501 = vmatpush1.bf16.msra.mxu0 %v1484
        %1502 = vmatprep.subr.bf16.mxu0 0
        %1503 = vmatpush1.bf16.msra.mxu0 %v1485
        %1504 = vmatprep.subr.bf16.mxu0 0
        %1505 = vmatpush1.bf16.msra.mxu0 %v1486
        %1506 = vmatprep.subr.bf16.mxu0 0
        %1507 = vmatpush1.bf16.msra.mxu0 %v1487
        %1508 = vmatprep.subr.bf16.mxu0 0
        %1509 = vmatpush1.bf16.msra.mxu0 %v1488
        %1510 = vmatprep.subr.bf16.mxu0 0
        %1511 = vmatpush1.bf16.msra.mxu0 %v1489
        %1512 = vmatprep.subr.bf16.mxu0 0
        %1513 = vmatpush1.bf16.msra.mxu0 %v1490
        %1514 = vmatprep.subr.bf16.mxu0 0
        %1515 = vmatpush1.bf16.msra.mxu0 %v1491
        %1516 = vmatprep.subr.bf16.mxu0 0
        %1517 = vmatpush1.bf16.msra.mxu0 0
        %1518 = vmatprep.subr.bf16.mxu0 0
        %1519 = vmatpush1.bf16.msra.mxu0 0
        %1520 = vmatprep.subr.bf16.mxu0 0
        %1521 = vmatpush1.bf16.msra.mxu0 0
        %1522 = vmatprep.subr.bf16.mxu0 0
        %1523 = vmatpush1.bf16.msra.mxu0 0
        %1524 = vmatprep.subr.bf16.mxu0 0
        %1525 = vmatpush1.bf16.msra.mxu0 0
        %1526 = vmatprep.subr.bf16.mxu0 0
        %1527 = vmatpush1.bf16.msra.mxu0 0
        %1528 = vmatprep.subr.bf16.mxu0 0
        %1529 = vmatpush1.bf16.msra.mxu0 0
        %1530 = vmatprep.subr.bf16.mxu0 0
        %1531 = vmatpush1.bf16.msra.mxu0 0
        %1532 = vmatprep.mubr.bf16.mxu0 0
        %1533 = vmatmul.mubr.bf16.gmra.mrb[0].mxu0 %v569
        %v1534 = vpop.f32.mrb[0].mxu0
        %v1535 = vadd.f32 0.0, %v1534
        %v1536 = vpop.f32.mrb[0].mxu0
        %v1537 = vpop.f32.mrb[0].mxu0
        %v1538 = vadd.f32 0.0, %v1537
        %v1539 = vpop.f32.mrb[0].mxu0
        %1540 = vmatprep.mubr.bf16.mxu0 0
        %1541 = vmatmul.mubr.bf16.gmra.mrb[0].mxu0 %v570
        %v1542 = vpop.f32.mrb[0].mxu0
        %v1543 = vadd.f32 0.0, %v1542
        %v1544 = vpop.f32.mrb[0].mxu0
        %v1545 = vpop.f32.mrb[0].mxu0
        %v1546 = vadd.f32 0.0, %v1545
        %v1547 = vpop.f32.mrb[0].mxu0
        %1548 = vmatprep.mubr.bf16.mxu0 0
        %1549 = vmatmul.mubr.bf16.gmra.mrb[0].mxu0 %v571
        %v1550 = vpop.f32.mrb[0].mxu0
        %v1551 = vadd.f32 0.0, %v1550
        %v1552 = vpop.f32.mrb[0].mxu0
        %v1553 = vpop.f32.mrb[0].mxu0
        %v1554 = vadd.f32 0.0, %v1553
        %v1555 = vpop.f32.mrb[0].mxu0
        %1556 = vmatprep.mubr.bf16.mxu0 0
        %1557 = vmatmul.mubr.bf16.gmra.mrb[0].mxu0 %v1434
        %v1558 = vpop.f32.mrb[0].mxu0
        %v1559 = vadd.f32 0.0, %v1558
        %v1560 = vpop.f32.mrb[0].mxu0
        %v1561 = vpop.f32.mrb[0].mxu0
        %v1562 = vadd.f32 0.0, %v1561
        %v1563 = vpop.f32.mrb[0].mxu0
        %1564 = vdwg.mxu0
        %v1565 = vadd.f32 %v1422, %v1535
        %v1566 = vadd.f32 %v1423, %v1538
        %v1567 = vadd.f32 %v1424, %v1543
        %v1568 = vadd.f32 %v1425, %v1546
        %v1569 = vadd.f32 %v1426, %v1551
        %v1570 = vadd.f32 %v1427, %v1554
        %v1571 = vadd.f32 %v1428, %v1559
        %v1572 = vadd.f32 %v1429, %v1562
        %s1573 = sadd.s32 %s26, 1
        %s1574 = smul.u32 %s1573, 160
        %s1575 = scalar_lea.vmem %s195, %s1574
        %v1576 = vld [vmem:[%s1575] sm:$0xff]
        %v1577 = vld [vmem:[%s1575 + $0x8] sm:$0x3]
        %v1578 = vld [vmem:[%s1575 + $0x10] sm:$0xff]
        %v1579 = vld [vmem:[%s1575 + $0x18] sm:$0x3]
        %v1580 = vld [vmem:[%s1575 + $0x20] sm:$0xff]
        %v1581 = vld [vmem:[%s1575 + $0x28] sm:$0x3]
        %v1582 = vld [vmem:[%s1575 + $0x30] sm:$0xff]
        %v1583 = vld [vmem:[%s1575 + $0x38] sm:$0x3]
        %v1584 = vld [vmem:[%s1575 + $0x40] sm:$0xff]
        %v1585 = vld [vmem:[%s1575 + $0x48] sm:$0x3]
        %v1586 = vld [vmem:[%s1575 + $0x50] sm:$0xff]
        %v1587 = vld [vmem:[%s1575 + $0x58] sm:$0x3]
        %v1588 = vld [vmem:[%s1575 + $0x60] sm:$0xff]
        %v1589 = vld [vmem:[%s1575 + $0x68] sm:$0x3]
        %v1590 = vld [vmem:[%s1575 + $0x70] sm:$0xff]
        %v1591 = vld [vmem:[%s1575 + $0x78] sm:$0x3]
        %v1592 = vld [vmem:[%s1575 + $0x80] sm:$0xff]
        %v1593 = vld [vmem:[%s1575 + $0x88] sm:$0x3]
        %v1594 = vld [vmem:[%s1575 + $0x90] sm:$0xff]
        %v1595 = vld [vmem:[%s1575 + $0x98] sm:$0x3]
        %v1596 = vpack.c.bf16 %v1578, %v1576
        %v1597 = vpack.c.bf16 %v1582, %v1580
        %v1598 = vpack.c.bf16 %v1586, %v1584
        %v1599 = vpack.c.bf16 %v1590, %v1588
        %s1600 = scalar_lea.vmem %s1, 576
        %v1601 = vld [vmem:[%s1600] sm:$0xf]
        %v1602 = vld [vmem:[%s1600 + $0x4] sm:$0xf]
        %v1603 = vld [vmem:[%s1600 + $0x8] sm:$0xf]
        %v1604 = vld [vmem:[%s1600 + $0xc] sm:$0xf]
        %v1605 = vld [vmem:[%s1600 + $0x10] sm:$0xf]
        %v1606 = vld [vmem:[%s1600 + $0x14] sm:$0xf]
        %v1607 = vld [vmem:[%s1600 + $0x18] sm:$0xf]
        %v1608 = vld [vmem:[%s1600 + $0x1c] sm:$0xf]
        %v1609 = vld [vmem:[%s1600 + $0x20] sm:$0xf]
        %v1610 = vld [vmem:[%s1600 + $0x24] sm:$0xf]
        %v1611 = vld [vmem:[%s1600 + $0x28] sm:$0xf]
        %v1612 = vld [vmem:[%s1600 + $0x2c] sm:$0xf]
        %v1613 = vld [vmem:[%s1600 + $0x30] sm:$0xf]
        %v1614 = vld [vmem:[%s1600 + $0x34] sm:$0xf]
        %v1615 = vld [vmem:[%s1600 + $0x38] sm:$0xf]
        %v1616 = vld [vmem:[%s1600 + $0x3c] sm:$0xf]
        %v1633 = vunpack.c.l.b16 %v1601
        %v1634 = vunpack.c.l.b16 %v1602
        %v1635 = vunpack.c.l.b16 %v1603
        %v1636 = vunpack.c.l.b16 %v1604
        %v1637 = vunpack.c.l.b16 %v1605
        %v1638 = vunpack.c.l.b16 %v1606
        %v1639 = vunpack.c.l.b16 %v1607
        %v1640 = vunpack.c.l.b16 %v1608
        %v1641 = vunpack.c.l.b16 %v1609
        %v1642 = vunpack.c.l.b16 %v1610
        %v1643 = vunpack.c.l.b16 %v1611
        %v1644 = vunpack.c.l.b16 %v1612
        %v1645 = vunpack.c.l.b16 %v1613
        %v1646 = vunpack.c.l.b16 %v1614
        %v1647 = vunpack.c.l.b16 %v1615
        %v1648 = vunpack.c.l.b16 %v1616
        %v1649 = vpack.c.b16 %v1634, %v1633
        %v1650 = vpack.c.b16 %v1636, %v1635
        %v1651 = vpack.c.b16 %v1638, %v1637
        %v1652 = vpack.c.b16 %v1640, %v1639
        %v1653 = vpack.c.b16 %v1642, %v1641
        %v1654 = vpack.c.b16 %v1644, %v1643
        %v1655 = vpack.c.b16 %v1646, %v1645
        %v1656 = vpack.c.b16 %v1648, %v1647
        %1665 = vmatprep.subr.bf16.mxu0 0
        %1666 = vmatpush1.bf16.msra.mxu0 %v1649
        %1667 = vmatprep.subr.bf16.mxu0 0
        %1668 = vmatpush1.bf16.msra.mxu0 %v1650
        %1669 = vmatprep.subr.bf16.mxu0 0
        %1670 = vmatpush1.bf16.msra.mxu0 %v1651
        %1671 = vmatprep.subr.bf16.mxu0 0
        %1672 = vmatpush1.bf16.msra.mxu0 %v1652
        %1673 = vmatprep.subr.bf16.mxu0 0
        %1674 = vmatpush1.bf16.msra.mxu0 %v1653
        %1675 = vmatprep.subr.bf16.mxu0 0
        %1676 = vmatpush1.bf16.msra.mxu0 %v1654
        %1677 = vmatprep.subr.bf16.mxu0 0
        %1678 = vmatpush1.bf16.msra.mxu0 %v1655
        %1679 = vmatprep.subr.bf16.mxu0 0
        %1680 = vmatpush1.bf16.msra.mxu0 %v1656
        %1681 = vmatprep.subr.bf16.mxu0 0
        %1682 = vmatpush1.bf16.msra.mxu0 0
        %1683 = vmatprep.subr.bf16.mxu0 0
        %1684 = vmatpush1.bf16.msra.mxu0 0
        %1685 = vmatprep.subr.bf16.mxu0 0
        %1686 = vmatpush1.bf16.msra.mxu0 0
        %1687 = vmatprep.subr.bf16.mxu0 0
        %1688 = vmatpush1.bf16.msra.mxu0 0
        %1689 = vmatprep.subr.bf16.mxu0 0
        %1690 = vmatpush1.bf16.msra.mxu0 0
        %1691 = vmatprep.subr.bf16.mxu0 0
        %1692 = vmatpush1.bf16.msra.mxu0 0
        %1693 = vmatprep.subr.bf16.mxu0 0
        %1694 = vmatpush1.bf16.msra.mxu0 0
        %1695 = vmatprep.subr.bf16.mxu0 0
        %1696 = vmatpush1.bf16.msra.mxu0 0
        %1697 = vmatprep.mubr.bf16.mxu0 0
        %1698 = vmatmul.mubr.bf16.gmra.mrb[0].mxu0 %v1596
        %v1699 = vpop.f32.mrb[0].mxu0
        %v1700 = vadd.f32 0.0, %v1699
        %v1701 = vpop.f32.mrb[0].mxu0
        %v1702 = vpop.f32.mrb[0].mxu0
        %v1703 = vadd.f32 0.0, %v1702
        %v1704 = vpop.f32.mrb[0].mxu0
        %1705 = vmatprep.mubr.bf16.mxu0 0
        %1706 = vmatmul.mubr.bf16.gmra.mrb[0].mxu0 %v1597
        %v1707 = vpop.f32.mrb[0].mxu0
        %v1708 = vadd.f32 0.0, %v1707
        %v1709 = vpop.f32.mrb[0].mxu0
        %v1710 = vpop.f32.mrb[0].mxu0
        %v1711 = vadd.f32 0.0, %v1710
        %v1712 = vpop.f32.mrb[0].mxu0
        %1713 = vmatprep.mubr.bf16.mxu0 0
        %1714 = vmatmul.mubr.bf16.gmra.mrb[0].mxu0 %v1598
        %v1715 = vpop.f32.mrb[0].mxu0
        %v1716 = vadd.f32 0.0, %v1715
        %v1717 = vpop.f32.mrb[0].mxu0
        %v1718 = vpop.f32.mrb[0].mxu0
        %v1719 = vadd.f32 0.0, %v1718
        %v1720 = vpop.f32.mrb[0].mxu0
        %1721 = vmatprep.mubr.bf16.mxu0 0
        %1722 = vmatmul.mubr.bf16.gmra.mrb[0].mxu0 %v1599
        %v1723 = vpop.f32.mrb[0].mxu0
        %v1724 = vadd.f32 0.0, %v1723
        %v1725 = vpop.f32.mrb[0].mxu0
        %v1726 = vpop.f32.mrb[0].mxu0
        %v1727 = vadd.f32 0.0, %v1726
        %v1728 = vpop.f32.mrb[0].mxu0
        %1729 = vdwg.mxu0
        %v1730 = vadd.f32 %v1565, %v1700
        %v1731 = vadd.f32 %v1566, %v1703
        %v1732 = vadd.f32 %v1567, %v1708
        %v1733 = vadd.f32 %v1568, %v1711
        %v1734 = vadd.f32 %v1569, %v1716
        %v1735 = vadd.f32 %v1570, %v1719
        %v1736 = vadd.f32 %v1571, %v1724
        %v1737 = vadd.f32 %v1572, %v1727
        %v1754 = vrot.slane %v1576, 1
        %v1755 = vrot.slane %v1577, 1
        %v1756 = vsel %vm255, %v1754, %v1755
        %v1757 = vrot.slane %v1578, 1
        %v1758 = vrot.slane %v1579, 1
        %v1759 = vsel %vm255, %v1757, %v1758
        %v1760 = vrot.slane %v1580, 1
        %v1761 = vrot.slane %v1581, 1
        %v1762 = vsel %vm255, %v1760, %v1761
        %v1763 = vrot.slane %v1582, 1
        %v1764 = vrot.slane %v1583, 1
        %v1765 = vsel %vm255, %v1763, %v1764
        %v1766 = vrot.slane %v1584, 1
        %v1767 = vrot.slane %v1585, 1
        %v1768 = vsel %vm255, %v1766, %v1767
        %v1769 = vrot.slane %v1586, 1
        %v1770 = vrot.slane %v1587, 1
        %v1771 = vsel %vm255, %v1769, %v1770
        %v1772 = vrot.slane %v1588, 1
        %v1773 = vrot.slane %v1589, 1
        %v1774 = vsel %vm255, %v1772, %v1773
        %v1775 = vrot.slane %v1590, 1
        %v1776 = vrot.slane %v1591, 1
        %v1777 = vsel %vm255, %v1775, %v1776
        %v1786 = vpack.c.bf16 %v1759, %v1756
        %v1787 = vpack.c.bf16 %v1765, %v1762
        %v1788 = vpack.c.bf16 %v1771, %v1768
        %v1789 = vpack.c.bf16 %v1777, %v1774
        %s1790 = scalar_lea.vmem %s1, 640
        %v1791 = vld [vmem:[%s1790] sm:$0xf]
        %v1792 = vld [vmem:[%s1790 + $0x4] sm:$0xf]
        %v1793 = vld [vmem:[%s1790 + $0x8] sm:$0xf]
        %v1794 = vld [vmem:[%s1790 + $0xc] sm:$0xf]
        %v1795 = vld [vmem:[%s1790 + $0x10] sm:$0xf]
        %v1796 = vld [vmem:[%s1790 + $0x14] sm:$0xf]
        %v1797 = vld [vmem:[%s1790 + $0x18] sm:$0xf]
        %v1798 = vld [vmem:[%s1790 + $0x1c] sm:$0xf]
        %v1799 = vld [vmem:[%s1790 + $0x20] sm:$0xf]
        %v1800 = vld [vmem:[%s1790 + $0x24] sm:$0xf]
        %v1801 = vld [vmem:[%s1790 + $0x28] sm:$0xf]
        %v1802 = vld [vmem:[%s1790 + $0x2c] sm:$0xf]
        %v1803 = vld [vmem:[%s1790 + $0x30] sm:$0xf]
        %v1804 = vld [vmem:[%s1790 + $0x34] sm:$0xf]
        %v1805 = vld [vmem:[%s1790 + $0x38] sm:$0xf]
        %v1806 = vld [vmem:[%s1790 + $0x3c] sm:$0xf]
        %v1823 = vunpack.c.l.b16 %v1791
        %v1824 = vunpack.c.l.b16 %v1792
        %v1825 = vunpack.c.l.b16 %v1793
        %v1826 = vunpack.c.l.b16 %v1794
        %v1827 = vunpack.c.l.b16 %v1795
        %v1828 = vunpack.c.l.b16 %v1796
        %v1829 = vunpack.c.l.b16 %v1797
        %v1830 = vunpack.c.l.b16 %v1798
        %v1831 = vunpack.c.l.b16 %v1799
        %v1832 = vunpack.c.l.b16 %v1800
        %v1833 = vunpack.c.l.b16 %v1801
        %v1834 = vunpack.c.l.b16 %v1802
        %v1835 = vunpack.c.l.b16 %v1803
        %v1836 = vunpack.c.l.b16 %v1804
        %v1837 = vunpack.c.l.b16 %v1805
        %v1838 = vunpack.c.l.b16 %v1806
        %v1839 = vpack.c.b16 %v1824, %v1823
        %v1840 = vpack.c.b16 %v1826, %v1825
        %v1841 = vpack.c.b16 %v1828, %v1827
        %v1842 = vpack.c.b16 %v1830, %v1829
        %v1843 = vpack.c.b16 %v1832, %v1831
        %v1844 = vpack.c.b16 %v1834, %v1833
        %v1845 = vpack.c.b16 %v1836, %v1835
        %v1846 = vpack.c.b16 %v1838, %v1837
        %1855 = vmatprep.subr.bf16.mxu0 0
        %1856 = vmatpush1.bf16.msra.mxu0 %v1839
        %1857 = vmatprep.subr.bf16.mxu0 0
        %1858 = vmatpush1.bf16.msra.mxu0 %v1840
        %1859 = vmatprep.subr.bf16.mxu0 0
        %1860 = vmatpush1.bf16.msra.mxu0 %v1841
        %1861 = vmatprep.subr.bf16.mxu0 0
        %1862 = vmatpush1.bf16.msra.mxu0 %v1842
        %1863 = vmatprep.subr.bf16.mxu0 0
        %1864 = vmatpush1.bf16.msra.mxu0 %v1843
        %1865 = vmatprep.subr.bf16.mxu0 0
        %1866 = vmatpush1.bf16.msra.mxu0 %v1844
        %1867 = vmatprep.subr.bf16.mxu0 0
        %1868 = vmatpush1.bf16.msra.mxu0 %v1845
        %1869 = vmatprep.subr.bf16.mxu0 0
        %1870 = vmatpush1.bf16.msra.mxu0 %v1846
        %1871 = vmatprep.subr.bf16.mxu0 0
        %1872 = vmatpush1.bf16.msra.mxu0 0
        %1873 = vmatprep.subr.bf16.mxu0 0
        %1874 = vmatpush1.bf16.msra.mxu0 0
        %1875 = vmatprep.subr.bf16.mxu0 0
        %1876 = vmatpush1.bf16.msra.mxu0 0
        %1877 = vmatprep.subr.bf16.mxu0 0
        %1878 = vmatpush1.bf16.msra.mxu0 0
        %1879 = vmatprep.subr.bf16.mxu0 0
        %1880 = vmatpush1.bf16.msra.mxu0 0
        %1881 = vmatprep.subr.bf16.mxu0 0
        %1882 = vmatpush1.bf16.msra.mxu0 0
        %1883 = vmatprep.subr.bf16.mxu0 0
        %1884 = vmatpush1.bf16.msra.mxu0 0
        %1885 = vmatprep.subr.bf16.mxu0 0
        %1886 = vmatpush1.bf16.msra.mxu0 0
        %1887 = vmatprep.mubr.bf16.mxu0 0
        %1888 = vmatmul.mubr.bf16.gmra.mrb[0].mxu0 %v1786
        %v1889 = vpop.f32.mrb[0].mxu0
        %v1890 = vadd.f32 0.0, %v1889
        %v1891 = vpop.f32.mrb[0].mxu0
        %v1892 = vpop.f32.mrb[0].mxu0
        %v1893 = vadd.f32 0.0, %v1892
        %v1894 = vpop.f32.mrb[0].mxu0
        %1895 = vmatprep.mubr.bf16.mxu0 0
        %1896 = vmatmul.mubr.bf16.gmra.mrb[0].mxu0 %v1787
        %v1897 = vpop.f32.mrb[0].mxu0
        %v1898 = vadd.f32 0.0, %v1897
        %v1899 = vpop.f32.mrb[0].mxu0
        %v1900 = vpop.f32.mrb[0].mxu0
        %v1901 = vadd.f32 0.0, %v1900
        %v1902 = vpop.f32.mrb[0].mxu0
        %1903 = vmatprep.mubr.bf16.mxu0 0
        %1904 = vmatmul.mubr.bf16.gmra.mrb[0].mxu0 %v1788
        %v1905 = vpop.f32.mrb[0].mxu0
        %v1906 = vadd.f32 0.0, %v1905
        %v1907 = vpop.f32.mrb[0].mxu0
        %v1908 = vpop.f32.mrb[0].mxu0
        %v1909 = vadd.f32 0.0, %v1908
        %v1910 = vpop.f32.mrb[0].mxu0
        %1911 = vmatprep.mubr.bf16.mxu0 0
        %1912 = vmatmul.mubr.bf16.gmra.mrb[0].mxu0 %v1789
        %v1913 = vpop.f32.mrb[0].mxu0
        %v1914 = vadd.f32 0.0, %v1913
        %v1915 = vpop.f32.mrb[0].mxu0
        %v1916 = vpop.f32.mrb[0].mxu0
        %v1917 = vadd.f32 0.0, %v1916
        %v1918 = vpop.f32.mrb[0].mxu0
        %1919 = vdwg.mxu0
        %v1920 = vadd.f32 %v1730, %v1890
        %v1921 = vadd.f32 %v1731, %v1893
        %v1922 = vadd.f32 %v1732, %v1898
        %v1923 = vadd.f32 %v1733, %v1901
        %v1924 = vadd.f32 %v1734, %v1906
        %v1925 = vadd.f32 %v1735, %v1909
        %v1926 = vadd.f32 %v1736, %v1914
        %v1927 = vadd.f32 %v1737, %v1917
        %v1928 = vrot.slane %v1576, 2
        %v1929 = vrot.slane %v1577, 2
        %v1930 = vsel %vm535, %v1928, %v1929
        %v1931 = vrot.slane %v1578, 2
        %v1932 = vrot.slane %v1579, 2
        %v1933 = vsel %vm535, %v1931, %v1932
        %v1934 = vrot.slane %v1580, 2
        %v1935 = vrot.slane %v1581, 2
        %v1936 = vsel %vm535, %v1934, %v1935
        %v1937 = vrot.slane %v1582, 2
        %v1938 = vrot.slane %v1583, 2
        %v1939 = vsel %vm535, %v1937, %v1938
        %v1940 = vrot.slane %v1584, 2
        %v1941 = vrot.slane %v1585, 2
        %v1942 = vsel %vm535, %v1940, %v1941
        %v1943 = vrot.slane %v1586, 2
        %v1944 = vrot.slane %v1587, 2
        %v1945 = vsel %vm535, %v1943, %v1944
        %v1946 = vrot.slane %v1588, 2
        %v1947 = vrot.slane %v1589, 2
        %v1948 = vsel %vm535, %v1946, %v1947
        %v1949 = vrot.slane %v1590, 2
        %v1950 = vrot.slane %v1591, 2
        %v1951 = vsel %vm535, %v1949, %v1950
        %v1960 = vpack.c.bf16 %v1933, %v1930
        %v1961 = vpack.c.bf16 %v1939, %v1936
        %v1962 = vpack.c.bf16 %v1945, %v1942
        %v1963 = vpack.c.bf16 %v1951, %v1948
        %s1964 = scalar_lea.vmem %s1, 704
        %v1965 = vld [vmem:[%s1964] sm:$0xf]
        %v1966 = vld [vmem:[%s1964 + $0x4] sm:$0xf]
        %v1967 = vld [vmem:[%s1964 + $0x8] sm:$0xf]
        %v1968 = vld [vmem:[%s1964 + $0xc] sm:$0xf]
        %v1969 = vld [vmem:[%s1964 + $0x10] sm:$0xf]
        %v1970 = vld [vmem:[%s1964 + $0x14] sm:$0xf]
        %v1971 = vld [vmem:[%s1964 + $0x18] sm:$0xf]
        %v1972 = vld [vmem:[%s1964 + $0x1c] sm:$0xf]
        %v1973 = vld [vmem:[%s1964 + $0x20] sm:$0xf]
        %v1974 = vld [vmem:[%s1964 + $0x24] sm:$0xf]
        %v1975 = vld [vmem:[%s1964 + $0x28] sm:$0xf]
        %v1976 = vld [vmem:[%s1964 + $0x2c] sm:$0xf]
        %v1977 = vld [vmem:[%s1964 + $0x30] sm:$0xf]
        %v1978 = vld [vmem:[%s1964 + $0x34] sm:$0xf]
        %v1979 = vld [vmem:[%s1964 + $0x38] sm:$0xf]
        %v1980 = vld [vmem:[%s1964 + $0x3c] sm:$0xf]
        %v1997 = vunpack.c.l.b16 %v1965
        %v1998 = vunpack.c.l.b16 %v1966
        %v1999 = vunpack.c.l.b16 %v1967
        %v2000 = vunpack.c.l.b16 %v1968
        %v2001 = vunpack.c.l.b16 %v1969
        %v2002 = vunpack.c.l.b16 %v1970
        %v2003 = vunpack.c.l.b16 %v1971
        %v2004 = vunpack.c.l.b16 %v1972
        %v2005 = vunpack.c.l.b16 %v1973
        %v2006 = vunpack.c.l.b16 %v1974
        %v2007 = vunpack.c.l.b16 %v1975
        %v2008 = vunpack.c.l.b16 %v1976
        %v2009 = vunpack.c.l.b16 %v1977
        %v2010 = vunpack.c.l.b16 %v1978
        %v2011 = vunpack.c.l.b16 %v1979
        %v2012 = vunpack.c.l.b16 %v1980
        %v2013 = vpack.c.b16 %v1998, %v1997
        %v2014 = vpack.c.b16 %v2000, %v1999
        %v2015 = vpack.c.b16 %v2002, %v2001
        %v2016 = vpack.c.b16 %v2004, %v2003
        %v2017 = vpack.c.b16 %v2006, %v2005
        %v2018 = vpack.c.b16 %v2008, %v2007
        %v2019 = vpack.c.b16 %v2010, %v2009
        %v2020 = vpack.c.b16 %v2012, %v2011
        %2029 = vmatprep.subr.bf16.mxu0 0
        %2030 = vmatpush1.bf16.msra.mxu0 %v2013
        %2031 = vmatprep.subr.bf16.mxu0 0
        %2032 = vmatpush1.bf16.msra.mxu0 %v2014
        %2033 = vmatprep.subr.bf16.mxu0 0
        %2034 = vmatpush1.bf16.msra.mxu0 %v2015
        %2035 = vmatprep.subr.bf16.mxu0 0
        %2036 = vmatpush1.bf16.msra.mxu0 %v2016
        %2037 = vmatprep.subr.bf16.mxu0 0
        %2038 = vmatpush1.bf16.msra.mxu0 %v2017
        %2039 = vmatprep.subr.bf16.mxu0 0
        %2040 = vmatpush1.bf16.msra.mxu0 %v2018
        %2041 = vmatprep.subr.bf16.mxu0 0
        %2042 = vmatpush1.bf16.msra.mxu0 %v2019
        %2043 = vmatprep.subr.bf16.mxu0 0
        %2044 = vmatpush1.bf16.msra.mxu0 %v2020
        %2045 = vmatprep.subr.bf16.mxu0 0
        %2046 = vmatpush1.bf16.msra.mxu0 0
        %2047 = vmatprep.subr.bf16.mxu0 0
        %2048 = vmatpush1.bf16.msra.mxu0 0
        %2049 = vmatprep.subr.bf16.mxu0 0
        %2050 = vmatpush1.bf16.msra.mxu0 0
        %2051 = vmatprep.subr.bf16.mxu0 0
        %2052 = vmatpush1.bf16.msra.mxu0 0
        %2053 = vmatprep.subr.bf16.mxu0 0
        %2054 = vmatpush1.bf16.msra.mxu0 0
        %2055 = vmatprep.subr.bf16.mxu0 0
        %2056 = vmatpush1.bf16.msra.mxu0 0
        %2057 = vmatprep.subr.bf16.mxu0 0
        %2058 = vmatpush1.bf16.msra.mxu0 0
        %2059 = vmatprep.subr.bf16.mxu0 0
        %2060 = vmatpush1.bf16.msra.mxu0 0
        %2061 = vmatprep.mubr.bf16.mxu0 0
        %2062 = vmatmul.mubr.bf16.gmra.mrb[0].mxu0 %v1960
        %v2063 = vpop.f32.mrb[0].mxu0
        %v2064 = vadd.f32 0.0, %v2063
        %v2065 = vpop.f32.mrb[0].mxu0
        %v2066 = vpop.f32.mrb[0].mxu0
        %v2067 = vadd.f32 0.0, %v2066
        %v2068 = vpop.f32.mrb[0].mxu0
        %2069 = vmatprep.mubr.bf16.mxu0 0
        %2070 = vmatmul.mubr.bf16.gmra.mrb[0].mxu0 %v1961
        %v2071 = vpop.f32.mrb[0].mxu0
        %v2072 = vadd.f32 0.0, %v2071
        %v2073 = vpop.f32.mrb[0].mxu0
        %v2074 = vpop.f32.mrb[0].mxu0
        %v2075 = vadd.f32 0.0, %v2074
        %v2076 = vpop.f32.mrb[0].mxu0
        %2077 = vmatprep.mubr.bf16.mxu0 0
        %2078 = vmatmul.mubr.bf16.gmra.mrb[0].mxu0 %v1962
        %v2079 = vpop.f32.mrb[0].mxu0
        %v2080 = vadd.f32 0.0, %v2079
        %v2081 = vpop.f32.mrb[0].mxu0
        %v2082 = vpop.f32.mrb[0].mxu0
        %v2083 = vadd.f32 0.0, %v2082
        %v2084 = vpop.f32.mrb[0].mxu0
        %2085 = vmatprep.mubr.bf16.mxu0 0
        %2086 = vmatmul.mubr.bf16.gmra.mrb[0].mxu0 %v1963
        %v2087 = vpop.f32.mrb[0].mxu0
        %v2088 = vadd.f32 0.0, %v2087
        %v2089 = vpop.f32.mrb[0].mxu0
        %v2090 = vpop.f32.mrb[0].mxu0
        %v2091 = vadd.f32 0.0, %v2090
        %v2092 = vpop.f32.mrb[0].mxu0
        %2093 = vdwg.mxu0
        %v2094 = vadd.f32 %v1920, %v2064
        %v2095 = vadd.f32 %v1921, %v2067
        %v2096 = vadd.f32 %v1922, %v2072
        %v2097 = vadd.f32 %v1923, %v2075
        %v2098 = vadd.f32 %v1924, %v2080
        %v2099 = vadd.f32 %v1925, %v2083
        %v2100 = vadd.f32 %v1926, %v2088
        %v2101 = vadd.f32 %v1927, %v2091
        %v2102 = vpack.c.bf16 %v1580, %v1578
        %v2103 = vpack.c.bf16 %v1584, %v1582
        %v2104 = vpack.c.bf16 %v1588, %v1586
        %v2105 = vpack.c.bf16 %v1592, %v1590
        %s2106 = scalar_lea.vmem %s1, 768
        %v2107 = vld [vmem:[%s2106] sm:$0xf]
        %v2108 = vld [vmem:[%s2106 + $0x4] sm:$0xf]
        %v2109 = vld [vmem:[%s2106 + $0x8] sm:$0xf]
        %v2110 = vld [vmem:[%s2106 + $0xc] sm:$0xf]
        %v2111 = vld [vmem:[%s2106 + $0x10] sm:$0xf]
        %v2112 = vld [vmem:[%s2106 + $0x14] sm:$0xf]
        %v2113 = vld [vmem:[%s2106 + $0x18] sm:$0xf]
        %v2114 = vld [vmem:[%s2106 + $0x1c] sm:$0xf]
        %v2115 = vld [vmem:[%s2106 + $0x20] sm:$0xf]
        %v2116 = vld [vmem:[%s2106 + $0x24] sm:$0xf]
        %v2117 = vld [vmem:[%s2106 + $0x28] sm:$0xf]
        %v2118 = vld [vmem:[%s2106 + $0x2c] sm:$0xf]
        %v2119 = vld [vmem:[%s2106 + $0x30] sm:$0xf]
        %v2120 = vld [vmem:[%s2106 + $0x34] sm:$0xf]
        %v2121 = vld [vmem:[%s2106 + $0x38] sm:$0xf]
        %v2122 = vld [vmem:[%s2106 + $0x3c] sm:$0xf]
        %v2139 = vunpack.c.l.b16 %v2107
        %v2140 = vunpack.c.l.b16 %v2108
        %v2141 = vunpack.c.l.b16 %v2109
        %v2142 = vunpack.c.l.b16 %v2110
        %v2143 = vunpack.c.l.b16 %v2111
        %v2144 = vunpack.c.l.b16 %v2112
        %v2145 = vunpack.c.l.b16 %v2113
        %v2146 = vunpack.c.l.b16 %v2114
        %v2147 = vunpack.c.l.b16 %v2115
        %v2148 = vunpack.c.l.b16 %v2116
        %v2149 = vunpack.c.l.b16 %v2117
        %v2150 = vunpack.c.l.b16 %v2118
        %v2151 = vunpack.c.l.b16 %v2119
        %v2152 = vunpack.c.l.b16 %v2120
        %v2153 = vunpack.c.l.b16 %v2121
        %v2154 = vunpack.c.l.b16 %v2122
        %v2155 = vpack.c.b16 %v2140, %v2139
        %v2156 = vpack.c.b16 %v2142, %v2141
        %v2157 = vpack.c.b16 %v2144, %v2143
        %v2158 = vpack.c.b16 %v2146, %v2145
        %v2159 = vpack.c.b16 %v2148, %v2147
        %v2160 = vpack.c.b16 %v2150, %v2149
        %v2161 = vpack.c.b16 %v2152, %v2151
        %v2162 = vpack.c.b16 %v2154, %v2153
        %2171 = vmatprep.subr.bf16.mxu0 0
        %2172 = vmatpush1.bf16.msra.mxu0 %v2155
        %2173 = vmatprep.subr.bf16.mxu0 0
        %2174 = vmatpush1.bf16.msra.mxu0 %v2156
        %2175 = vmatprep.subr.bf16.mxu0 0
        %2176 = vmatpush1.bf16.msra.mxu0 %v2157
        %2177 = vmatprep.subr.bf16.mxu0 0
        %2178 = vmatpush1.bf16.msra.mxu0 %v2158
        %2179 = vmatprep.subr.bf16.mxu0 0
        %2180 = vmatpush1.bf16.msra.mxu0 %v2159
        %2181 = vmatprep.subr.bf16.mxu0 0
        %2182 = vmatpush1.bf16.msra.mxu0 %v2160
        %2183 = vmatprep.subr.bf16.mxu0 0
        %2184 = vmatpush1.bf16.msra.mxu0 %v2161
        %2185 = vmatprep.subr.bf16.mxu0 0
        %2186 = vmatpush1.bf16.msra.mxu0 %v2162
        %2187 = vmatprep.subr.bf16.mxu0 0
        %2188 = vmatpush1.bf16.msra.mxu0 0
        %2189 = vmatprep.subr.bf16.mxu0 0
        %2190 = vmatpush1.bf16.msra.mxu0 0
        %2191 = vmatprep.subr.bf16.mxu0 0
        %2192 = vmatpush1.bf16.msra.mxu0 0
        %2193 = vmatprep.subr.bf16.mxu0 0
        %2194 = vmatpush1.bf16.msra.mxu0 0
        %2195 = vmatprep.subr.bf16.mxu0 0
        %2196 = vmatpush1.bf16.msra.mxu0 0
        %2197 = vmatprep.subr.bf16.mxu0 0
        %2198 = vmatpush1.bf16.msra.mxu0 0
        %2199 = vmatprep.subr.bf16.mxu0 0
        %2200 = vmatpush1.bf16.msra.mxu0 0
        %2201 = vmatprep.subr.bf16.mxu0 0
        %2202 = vmatpush1.bf16.msra.mxu0 0
        %2203 = vmatprep.mubr.bf16.mxu0 0
        %2204 = vmatmul.mubr.bf16.gmra.mrb[0].mxu0 %v2102
        %v2205 = vpop.f32.mrb[0].mxu0
        %v2206 = vadd.f32 0.0, %v2205
        %v2207 = vpop.f32.mrb[0].mxu0
        %v2208 = vpop.f32.mrb[0].mxu0
        %v2209 = vadd.f32 0.0, %v2208
        %v2210 = vpop.f32.mrb[0].mxu0
        %2211 = vmatprep.mubr.bf16.mxu0 0
        %2212 = vmatmul.mubr.bf16.gmra.mrb[0].mxu0 %v2103
        %v2213 = vpop.f32.mrb[0].mxu0
        %v2214 = vadd.f32 0.0, %v2213
        %v2215 = vpop.f32.mrb[0].mxu0
        %v2216 = vpop.f32.mrb[0].mxu0
        %v2217 = vadd.f32 0.0, %v2216
        %v2218 = vpop.f32.mrb[0].mxu0
        %2219 = vmatprep.mubr.bf16.mxu0 0
        %2220 = vmatmul.mubr.bf16.gmra.mrb[0].mxu0 %v2104
        %v2221 = vpop.f32.mrb[0].mxu0
        %v2222 = vadd.f32 0.0, %v2221
        %v2223 = vpop.f32.mrb[0].mxu0
        %v2224 = vpop.f32.mrb[0].mxu0
        %v2225 = vadd.f32 0.0, %v2224
        %v2226 = vpop.f32.mrb[0].mxu0
        %2227 = vmatprep.mubr.bf16.mxu0 0
        %2228 = vmatmul.mubr.bf16.gmra.mrb[0].mxu0 %v2105
        %v2229 = vpop.f32.mrb[0].mxu0
        %v2230 = vadd.f32 0.0, %v2229
        %v2231 = vpop.f32.mrb[0].mxu0
        %v2232 = vpop.f32.mrb[0].mxu0
        %v2233 = vadd.f32 0.0, %v2232
        %v2234 = vpop.f32.mrb[0].mxu0
        %2235 = vdwg.mxu0
        %v2236 = vadd.f32 %v2094, %v2206
        %v2237 = vadd.f32 %v2095, %v2209
        %v2238 = vadd.f32 %v2096, %v2214
        %v2239 = vadd.f32 %v2097, %v2217
        %v2240 = vadd.f32 %v2098, %v2222
        %v2241 = vadd.f32 %v2099, %v2225
        %v2242 = vadd.f32 %v2100, %v2230
        %v2243 = vadd.f32 %v2101, %v2233
        %v2246 = vrot.slane %v1592, 1
        %v2247 = vrot.slane %v1593, 1
        %v2248 = vsel %vm255, %v2246, %v2247
        %v2250 = vpack.c.bf16 %v1762, %v1759
        %v2251 = vpack.c.bf16 %v1768, %v1765
        %v2252 = vpack.c.bf16 %v1774, %v1771
        %v2253 = vpack.c.bf16 %v2248, %v1777
        %s2254 = scalar_lea.vmem %s1, 832
        %v2255 = vld [vmem:[%s2254] sm:$0xf]
        %v2256 = vld [vmem:[%s2254 + $0x4] sm:$0xf]
        %v2257 = vld [vmem:[%s2254 + $0x8] sm:$0xf]
        %v2258 = vld [vmem:[%s2254 + $0xc] sm:$0xf]
        %v2259 = vld [vmem:[%s2254 + $0x10] sm:$0xf]
        %v2260 = vld [vmem:[%s2254 + $0x14] sm:$0xf]
        %v2261 = vld [vmem:[%s2254 + $0x18] sm:$0xf]
        %v2262 = vld [vmem:[%s2254 + $0x1c] sm:$0xf]
        %v2263 = vld [vmem:[%s2254 + $0x20] sm:$0xf]
        %v2264 = vld [vmem:[%s2254 + $0x24] sm:$0xf]
        %v2265 = vld [vmem:[%s2254 + $0x28] sm:$0xf]
        %v2266 = vld [vmem:[%s2254 + $0x2c] sm:$0xf]
        %v2267 = vld [vmem:[%s2254 + $0x30] sm:$0xf]
        %v2268 = vld [vmem:[%s2254 + $0x34] sm:$0xf]
        %v2269 = vld [vmem:[%s2254 + $0x38] sm:$0xf]
        %v2270 = vld [vmem:[%s2254 + $0x3c] sm:$0xf]
        %v2287 = vunpack.c.l.b16 %v2255
        %v2288 = vunpack.c.l.b16 %v2256
        %v2289 = vunpack.c.l.b16 %v2257
        %v2290 = vunpack.c.l.b16 %v2258
        %v2291 = vunpack.c.l.b16 %v2259
        %v2292 = vunpack.c.l.b16 %v2260
        %v2293 = vunpack.c.l.b16 %v2261
        %v2294 = vunpack.c.l.b16 %v2262
        %v2295 = vunpack.c.l.b16 %v2263
        %v2296 = vunpack.c.l.b16 %v2264
        %v2297 = vunpack.c.l.b16 %v2265
        %v2298 = vunpack.c.l.b16 %v2266
        %v2299 = vunpack.c.l.b16 %v2267
        %v2300 = vunpack.c.l.b16 %v2268
        %v2301 = vunpack.c.l.b16 %v2269
        %v2302 = vunpack.c.l.b16 %v2270
        %v2303 = vpack.c.b16 %v2288, %v2287
        %v2304 = vpack.c.b16 %v2290, %v2289
        %v2305 = vpack.c.b16 %v2292, %v2291
        %v2306 = vpack.c.b16 %v2294, %v2293
        %v2307 = vpack.c.b16 %v2296, %v2295
        %v2308 = vpack.c.b16 %v2298, %v2297
        %v2309 = vpack.c.b16 %v2300, %v2299
        %v2310 = vpack.c.b16 %v2302, %v2301
        %2319 = vmatprep.subr.bf16.mxu0 0
        %2320 = vmatpush1.bf16.msra.mxu0 %v2303
        %2321 = vmatprep.subr.bf16.mxu0 0
        %2322 = vmatpush1.bf16.msra.mxu0 %v2304
        %2323 = vmatprep.subr.bf16.mxu0 0
        %2324 = vmatpush1.bf16.msra.mxu0 %v2305
        %2325 = vmatprep.subr.bf16.mxu0 0
        %2326 = vmatpush1.bf16.msra.mxu0 %v2306
        %2327 = vmatprep.subr.bf16.mxu0 0
        %2328 = vmatpush1.bf16.msra.mxu0 %v2307
        %2329 = vmatprep.subr.bf16.mxu0 0
        %2330 = vmatpush1.bf16.msra.mxu0 %v2308
        %2331 = vmatprep.subr.bf16.mxu0 0
        %2332 = vmatpush1.bf16.msra.mxu0 %v2309
        %2333 = vmatprep.subr.bf16.mxu0 0
        %2334 = vmatpush1.bf16.msra.mxu0 %v2310
        %2335 = vmatprep.subr.bf16.mxu0 0
        %2336 = vmatpush1.bf16.msra.mxu0 0
        %2337 = vmatprep.subr.bf16.mxu0 0
        %2338 = vmatpush1.bf16.msra.mxu0 0
        %2339 = vmatprep.subr.bf16.mxu0 0
        %2340 = vmatpush1.bf16.msra.mxu0 0
        %2341 = vmatprep.subr.bf16.mxu0 0
        %2342 = vmatpush1.bf16.msra.mxu0 0
        %2343 = vmatprep.subr.bf16.mxu0 0
        %2344 = vmatpush1.bf16.msra.mxu0 0
        %2345 = vmatprep.subr.bf16.mxu0 0
        %2346 = vmatpush1.bf16.msra.mxu0 0
        %2347 = vmatprep.subr.bf16.mxu0 0
        %2348 = vmatpush1.bf16.msra.mxu0 0
        %2349 = vmatprep.subr.bf16.mxu0 0
        %2350 = vmatpush1.bf16.msra.mxu0 0
        %2351 = vmatprep.mubr.bf16.mxu0 0
        %2352 = vmatmul.mubr.bf16.gmra.mrb[0].mxu0 %v2250
        %v2353 = vpop.f32.mrb[0].mxu0
        %v2354 = vadd.f32 0.0, %v2353
        %v2355 = vpop.f32.mrb[0].mxu0
        %v2356 = vpop.f32.mrb[0].mxu0
        %v2357 = vadd.f32 0.0, %v2356
        %v2358 = vpop.f32.mrb[0].mxu0
        %2359 = vmatprep.mubr.bf16.mxu0 0
        %2360 = vmatmul.mubr.bf16.gmra.mrb[0].mxu0 %v2251
        %v2361 = vpop.f32.mrb[0].mxu0
        %v2362 = vadd.f32 0.0, %v2361
        %v2363 = vpop.f32.mrb[0].mxu0
        %v2364 = vpop.f32.mrb[0].mxu0
        %v2365 = vadd.f32 0.0, %v2364
        %v2366 = vpop.f32.mrb[0].mxu0
        %2367 = vmatprep.mubr.bf16.mxu0 0
        %2368 = vmatmul.mubr.bf16.gmra.mrb[0].mxu0 %v2252
        %v2369 = vpop.f32.mrb[0].mxu0
        %v2370 = vadd.f32 0.0, %v2369
        %v2371 = vpop.f32.mrb[0].mxu0
        %v2372 = vpop.f32.mrb[0].mxu0
        %v2373 = vadd.f32 0.0, %v2372
        %v2374 = vpop.f32.mrb[0].mxu0
        %2375 = vmatprep.mubr.bf16.mxu0 0
        %2376 = vmatmul.mubr.bf16.gmra.mrb[0].mxu0 %v2253
        %v2377 = vpop.f32.mrb[0].mxu0
        %v2378 = vadd.f32 0.0, %v2377
        %v2379 = vpop.f32.mrb[0].mxu0
        %v2380 = vpop.f32.mrb[0].mxu0
        %v2381 = vadd.f32 0.0, %v2380
        %v2382 = vpop.f32.mrb[0].mxu0
        %2383 = vdwg.mxu0
        %v2384 = vadd.f32 %v2236, %v2354
        %v2385 = vadd.f32 %v2237, %v2357
        %v2386 = vadd.f32 %v2238, %v2362
        %v2387 = vadd.f32 %v2239, %v2365
        %v2388 = vadd.f32 %v2240, %v2370
        %v2389 = vadd.f32 %v2241, %v2373
        %v2390 = vadd.f32 %v2242, %v2378
        %v2391 = vadd.f32 %v2243, %v2381
        %v2392 = vrot.slane %v1592, 2
        %v2393 = vrot.slane %v1593, 2
        %v2394 = vsel %vm535, %v2392, %v2393
        %v2396 = vpack.c.bf16 %v1936, %v1933
        %v2397 = vpack.c.bf16 %v1942, %v1939
        %v2398 = vpack.c.bf16 %v1948, %v1945
        %v2399 = vpack.c.bf16 %v2394, %v1951
        %s2400 = scalar_lea.vmem %s1, 896
        %v2401 = vld [vmem:[%s2400] sm:$0xf]
        %v2402 = vld [vmem:[%s2400 + $0x4] sm:$0xf]
        %v2403 = vld [vmem:[%s2400 + $0x8] sm:$0xf]
        %v2404 = vld [vmem:[%s2400 + $0xc] sm:$0xf]
        %v2405 = vld [vmem:[%s2400 + $0x10] sm:$0xf]
        %v2406 = vld [vmem:[%s2400 + $0x14] sm:$0xf]
        %v2407 = vld [vmem:[%s2400 + $0x18] sm:$0xf]
        %v2408 = vld [vmem:[%s2400 + $0x1c] sm:$0xf]
        %v2409 = vld [vmem:[%s2400 + $0x20] sm:$0xf]
        %v2410 = vld [vmem:[%s2400 + $0x24] sm:$0xf]
        %v2411 = vld [vmem:[%s2400 + $0x28] sm:$0xf]
        %v2412 = vld [vmem:[%s2400 + $0x2c] sm:$0xf]
        %v2413 = vld [vmem:[%s2400 + $0x30] sm:$0xf]
        %v2414 = vld [vmem:[%s2400 + $0x34] sm:$0xf]
        %v2415 = vld [vmem:[%s2400 + $0x38] sm:$0xf]
        %v2416 = vld [vmem:[%s2400 + $0x3c] sm:$0xf]
        %v2433 = vunpack.c.l.b16 %v2401
        %v2434 = vunpack.c.l.b16 %v2402
        %v2435 = vunpack.c.l.b16 %v2403
        %v2436 = vunpack.c.l.b16 %v2404
        %v2437 = vunpack.c.l.b16 %v2405
        %v2438 = vunpack.c.l.b16 %v2406
        %v2439 = vunpack.c.l.b16 %v2407
        %v2440 = vunpack.c.l.b16 %v2408
        %v2441 = vunpack.c.l.b16 %v2409
        %v2442 = vunpack.c.l.b16 %v2410
        %v2443 = vunpack.c.l.b16 %v2411
        %v2444 = vunpack.c.l.b16 %v2412
        %v2445 = vunpack.c.l.b16 %v2413
        %v2446 = vunpack.c.l.b16 %v2414
        %v2447 = vunpack.c.l.b16 %v2415
        %v2448 = vunpack.c.l.b16 %v2416
        %v2449 = vpack.c.b16 %v2434, %v2433
        %v2450 = vpack.c.b16 %v2436, %v2435
        %v2451 = vpack.c.b16 %v2438, %v2437
        %v2452 = vpack.c.b16 %v2440, %v2439
        %v2453 = vpack.c.b16 %v2442, %v2441
        %v2454 = vpack.c.b16 %v2444, %v2443
        %v2455 = vpack.c.b16 %v2446, %v2445
        %v2456 = vpack.c.b16 %v2448, %v2447
        %2465 = vmatprep.subr.bf16.mxu0 0
        %2466 = vmatpush1.bf16.msra.mxu0 %v2449
        %2467 = vmatprep.subr.bf16.mxu0 0
        %2468 = vmatpush1.bf16.msra.mxu0 %v2450
        %2469 = vmatprep.subr.bf16.mxu0 0
        %2470 = vmatpush1.bf16.msra.mxu0 %v2451
        %2471 = vmatprep.subr.bf16.mxu0 0
        %2472 = vmatpush1.bf16.msra.mxu0 %v2452
        %2473 = vmatprep.subr.bf16.mxu0 0
        %2474 = vmatpush1.bf16.msra.mxu0 %v2453
        %2475 = vmatprep.subr.bf16.mxu0 0
        %2476 = vmatpush1.bf16.msra.mxu0 %v2454
        %2477 = vmatprep.subr.bf16.mxu0 0
        %2478 = vmatpush1.bf16.msra.mxu0 %v2455
        %2479 = vmatprep.subr.bf16.mxu0 0
        %2480 = vmatpush1.bf16.msra.mxu0 %v2456
        %2481 = vmatprep.subr.bf16.mxu0 0
        %2482 = vmatpush1.bf16.msra.mxu0 0
        %2483 = vmatprep.subr.bf16.mxu0 0
        %2484 = vmatpush1.bf16.msra.mxu0 0
        %2485 = vmatprep.subr.bf16.mxu0 0
        %2486 = vmatpush1.bf16.msra.mxu0 0
        %2487 = vmatprep.subr.bf16.mxu0 0
        %2488 = vmatpush1.bf16.msra.mxu0 0
        %2489 = vmatprep.subr.bf16.mxu0 0
        %2490 = vmatpush1.bf16.msra.mxu0 0
        %2491 = vmatprep.subr.bf16.mxu0 0
        %2492 = vmatpush1.bf16.msra.mxu0 0
        %2493 = vmatprep.subr.bf16.mxu0 0
        %2494 = vmatpush1.bf16.msra.mxu0 0
        %2495 = vmatprep.subr.bf16.mxu0 0
        %2496 = vmatpush1.bf16.msra.mxu0 0
        %2497 = vmatprep.mubr.bf16.mxu0 0
        %2498 = vmatmul.mubr.bf16.gmra.mrb[0].mxu0 %v2396
        %v2499 = vpop.f32.mrb[0].mxu0
        %v2500 = vadd.f32 0.0, %v2499
        %v2501 = vpop.f32.mrb[0].mxu0
        %v2502 = vpop.f32.mrb[0].mxu0
        %v2503 = vadd.f32 0.0, %v2502
        %v2504 = vpop.f32.mrb[0].mxu0
        %2505 = vmatprep.mubr.bf16.mxu0 0
        %2506 = vmatmul.mubr.bf16.gmra.mrb[0].mxu0 %v2397
        %v2507 = vpop.f32.mrb[0].mxu0
        %v2508 = vadd.f32 0.0, %v2507
        %v2509 = vpop.f32.mrb[0].mxu0
        %v2510 = vpop.f32.mrb[0].mxu0
        %v2511 = vadd.f32 0.0, %v2510
        %v2512 = vpop.f32.mrb[0].mxu0
        %2513 = vmatprep.mubr.bf16.mxu0 0
        %2514 = vmatmul.mubr.bf16.gmra.mrb[0].mxu0 %v2398
        %v2515 = vpop.f32.mrb[0].mxu0
        %v2516 = vadd.f32 0.0, %v2515
        %v2517 = vpop.f32.mrb[0].mxu0
        %v2518 = vpop.f32.mrb[0].mxu0
        %v2519 = vadd.f32 0.0, %v2518
        %v2520 = vpop.f32.mrb[0].mxu0
        %2521 = vmatprep.mubr.bf16.mxu0 0
        %2522 = vmatmul.mubr.bf16.gmra.mrb[0].mxu0 %v2399
        %v2523 = vpop.f32.mrb[0].mxu0
        %v2524 = vadd.f32 0.0, %v2523
        %v2525 = vpop.f32.mrb[0].mxu0
        %v2526 = vpop.f32.mrb[0].mxu0
        %v2527 = vadd.f32 0.0, %v2526
        %v2528 = vpop.f32.mrb[0].mxu0
        %2529 = vdwg.mxu0
        %v2530 = vadd.f32 %v2384, %v2500
        %v2531 = vadd.f32 %v2385, %v2503
        %v2532 = vadd.f32 %v2386, %v2508
        %v2533 = vadd.f32 %v2387, %v2511
        %v2534 = vadd.f32 %v2388, %v2516
        %v2535 = vadd.f32 %v2389, %v2519
        %v2536 = vadd.f32 %v2390, %v2524
        %v2537 = vadd.f32 %v2391, %v2527
        %v2538 = vpack.c.bf16 %v1594, %v1592
        %s2539 = scalar_lea.vmem %s1, 960
        %v2540 = vld [vmem:[%s2539] sm:$0xf]
        %v2541 = vld [vmem:[%s2539 + $0x4] sm:$0xf]
        %v2542 = vld [vmem:[%s2539 + $0x8] sm:$0xf]
        %v2543 = vld [vmem:[%s2539 + $0xc] sm:$0xf]
        %v2544 = vld [vmem:[%s2539 + $0x10] sm:$0xf]
        %v2545 = vld [vmem:[%s2539 + $0x14] sm:$0xf]
        %v2546 = vld [vmem:[%s2539 + $0x18] sm:$0xf]
        %v2547 = vld [vmem:[%s2539 + $0x1c] sm:$0xf]
        %v2548 = vld [vmem:[%s2539 + $0x20] sm:$0xf]
        %v2549 = vld [vmem:[%s2539 + $0x24] sm:$0xf]
        %v2550 = vld [vmem:[%s2539 + $0x28] sm:$0xf]
        %v2551 = vld [vmem:[%s2539 + $0x2c] sm:$0xf]
        %v2552 = vld [vmem:[%s2539 + $0x30] sm:$0xf]
        %v2553 = vld [vmem:[%s2539 + $0x34] sm:$0xf]
        %v2554 = vld [vmem:[%s2539 + $0x38] sm:$0xf]
        %v2555 = vld [vmem:[%s2539 + $0x3c] sm:$0xf]
        %v2572 = vunpack.c.l.b16 %v2540
        %v2573 = vunpack.c.l.b16 %v2541
        %v2574 = vunpack.c.l.b16 %v2542
        %v2575 = vunpack.c.l.b16 %v2543
        %v2576 = vunpack.c.l.b16 %v2544
        %v2577 = vunpack.c.l.b16 %v2545
        %v2578 = vunpack.c.l.b16 %v2546
        %v2579 = vunpack.c.l.b16 %v2547
        %v2580 = vunpack.c.l.b16 %v2548
        %v2581 = vunpack.c.l.b16 %v2549
        %v2582 = vunpack.c.l.b16 %v2550
        %v2583 = vunpack.c.l.b16 %v2551
        %v2584 = vunpack.c.l.b16 %v2552
        %v2585 = vunpack.c.l.b16 %v2553
        %v2586 = vunpack.c.l.b16 %v2554
        %v2587 = vunpack.c.l.b16 %v2555
        %v2588 = vpack.c.b16 %v2573, %v2572
        %v2589 = vpack.c.b16 %v2575, %v2574
        %v2590 = vpack.c.b16 %v2577, %v2576
        %v2591 = vpack.c.b16 %v2579, %v2578
        %v2592 = vpack.c.b16 %v2581, %v2580
        %v2593 = vpack.c.b16 %v2583, %v2582
        %v2594 = vpack.c.b16 %v2585, %v2584
        %v2595 = vpack.c.b16 %v2587, %v2586
        %2604 = vmatprep.subr.bf16.mxu0 0
        %2605 = vmatpush1.bf16.msra.mxu0 %v2588
        %2606 = vmatprep.subr.bf16.mxu0 0
        %2607 = vmatpush1.bf16.msra.mxu0 %v2589
        %2608 = vmatprep.subr.bf16.mxu0 0
        %2609 = vmatpush1.bf16.msra.mxu0 %v2590
        %2610 = vmatprep.subr.bf16.mxu0 0
        %2611 = vmatpush1.bf16.msra.mxu0 %v2591
        %2612 = vmatprep.subr.bf16.mxu0 0
        %2613 = vmatpush1.bf16.msra.mxu0 %v2592
        %2614 = vmatprep.subr.bf16.mxu0 0
        %2615 = vmatpush1.bf16.msra.mxu0 %v2593
        %2616 = vmatprep.subr.bf16.mxu0 0
        %2617 = vmatpush1.bf16.msra.mxu0 %v2594
        %2618 = vmatprep.subr.bf16.mxu0 0
        %2619 = vmatpush1.bf16.msra.mxu0 %v2595
        %2620 = vmatprep.subr.bf16.mxu0 0
        %2621 = vmatpush1.bf16.msra.mxu0 0
        %2622 = vmatprep.subr.bf16.mxu0 0
        %2623 = vmatpush1.bf16.msra.mxu0 0
        %2624 = vmatprep.subr.bf16.mxu0 0
        %2625 = vmatpush1.bf16.msra.mxu0 0
        %2626 = vmatprep.subr.bf16.mxu0 0
        %2627 = vmatpush1.bf16.msra.mxu0 0
        %2628 = vmatprep.subr.bf16.mxu0 0
        %2629 = vmatpush1.bf16.msra.mxu0 0
        %2630 = vmatprep.subr.bf16.mxu0 0
        %2631 = vmatpush1.bf16.msra.mxu0 0
        %2632 = vmatprep.subr.bf16.mxu0 0
        %2633 = vmatpush1.bf16.msra.mxu0 0
        %2634 = vmatprep.subr.bf16.mxu0 0
        %2635 = vmatpush1.bf16.msra.mxu0 0
        %2636 = vmatprep.mubr.bf16.mxu0 0
        %2637 = vmatmul.mubr.bf16.gmra.mrb[0].mxu0 %v1597
        %v2638 = vpop.f32.mrb[0].mxu0
        %v2639 = vadd.f32 0.0, %v2638
        %v2640 = vpop.f32.mrb[0].mxu0
        %v2641 = vpop.f32.mrb[0].mxu0
        %v2642 = vadd.f32 0.0, %v2641
        %v2643 = vpop.f32.mrb[0].mxu0
        %2644 = vmatprep.mubr.bf16.mxu0 0
        %2645 = vmatmul.mubr.bf16.gmra.mrb[0].mxu0 %v1598
        %v2646 = vpop.f32.mrb[0].mxu0
        %v2647 = vadd.f32 0.0, %v2646
        %v2648 = vpop.f32.mrb[0].mxu0
        %v2649 = vpop.f32.mrb[0].mxu0
        %v2650 = vadd.f32 0.0, %v2649
        %v2651 = vpop.f32.mrb[0].mxu0
        %2652 = vmatprep.mubr.bf16.mxu0 0
        %2653 = vmatmul.mubr.bf16.gmra.mrb[0].mxu0 %v1599
        %v2654 = vpop.f32.mrb[0].mxu0
        %v2655 = vadd.f32 0.0, %v2654
        %v2656 = vpop.f32.mrb[0].mxu0
        %v2657 = vpop.f32.mrb[0].mxu0
        %v2658 = vadd.f32 0.0, %v2657
        %v2659 = vpop.f32.mrb[0].mxu0
        %2660 = vmatprep.mubr.bf16.mxu0 0
        %2661 = vmatmul.mubr.bf16.gmra.mrb[0].mxu0 %v2538
        %v2662 = vpop.f32.mrb[0].mxu0
        %v2663 = vadd.f32 0.0, %v2662
        %v2664 = vpop.f32.mrb[0].mxu0
        %v2665 = vpop.f32.mrb[0].mxu0
        %v2666 = vadd.f32 0.0, %v2665
        %v2667 = vpop.f32.mrb[0].mxu0
        %2668 = vdwg.mxu0
        %v2669 = vadd.f32 %v2530, %v2639
        %v2670 = vadd.f32 %v2531, %v2642
        %v2671 = vadd.f32 %v2532, %v2647
        %v2672 = vadd.f32 %v2533, %v2650
        %v2673 = vadd.f32 %v2534, %v2655
        %v2674 = vadd.f32 %v2535, %v2658
        %v2675 = vadd.f32 %v2536, %v2663
        %v2676 = vadd.f32 %v2537, %v2666
        %v2679 = vrot.slane %v1594, 1
        %v2680 = vrot.slane %v1595, 1
        %v2681 = vsel %vm255, %v2679, %v2680
        %v2683 = vpack.c.bf16 %v2681, %v2248
        %s2684 = scalar_lea.vmem %s1, 1024
        %v2685 = vld [vmem:[%s2684] sm:$0xf]
        %v2686 = vld [vmem:[%s2684 + $0x4] sm:$0xf]
        %v2687 = vld [vmem:[%s2684 + $0x8] sm:$0xf]
        %v2688 = vld [vmem:[%s2684 + $0xc] sm:$0xf]
        %v2689 = vld [vmem:[%s2684 + $0x10] sm:$0xf]
        %v2690 = vld [vmem:[%s2684 + $0x14] sm:$0xf]
        %v2691 = vld [vmem:[%s2684 + $0x18] sm:$0xf]
        %v2692 = vld [vmem:[%s2684 + $0x1c] sm:$0xf]
        %v2693 = vld [vmem:[%s2684 + $0x20] sm:$0xf]
        %v2694 = vld [vmem:[%s2684 + $0x24] sm:$0xf]
        %v2695 = vld [vmem:[%s2684 + $0x28] sm:$0xf]
        %v2696 = vld [vmem:[%s2684 + $0x2c] sm:$0xf]
        %v2697 = vld [vmem:[%s2684 + $0x30] sm:$0xf]
        %v2698 = vld [vmem:[%s2684 + $0x34] sm:$0xf]
        %v2699 = vld [vmem:[%s2684 + $0x38] sm:$0xf]
        %v2700 = vld [vmem:[%s2684 + $0x3c] sm:$0xf]
        %v2717 = vunpack.c.l.b16 %v2685
        %v2718 = vunpack.c.l.b16 %v2686
        %v2719 = vunpack.c.l.b16 %v2687
        %v2720 = vunpack.c.l.b16 %v2688
        %v2721 = vunpack.c.l.b16 %v2689
        %v2722 = vunpack.c.l.b16 %v2690
        %v2723 = vunpack.c.l.b16 %v2691
        %v2724 = vunpack.c.l.b16 %v2692
        %v2725 = vunpack.c.l.b16 %v2693
        %v2726 = vunpack.c.l.b16 %v2694
        %v2727 = vunpack.c.l.b16 %v2695
        %v2728 = vunpack.c.l.b16 %v2696
        %v2729 = vunpack.c.l.b16 %v2697
        %v2730 = vunpack.c.l.b16 %v2698
        %v2731 = vunpack.c.l.b16 %v2699
        %v2732 = vunpack.c.l.b16 %v2700
        %v2733 = vpack.c.b16 %v2718, %v2717
        %v2734 = vpack.c.b16 %v2720, %v2719
        %v2735 = vpack.c.b16 %v2722, %v2721
        %v2736 = vpack.c.b16 %v2724, %v2723
        %v2737 = vpack.c.b16 %v2726, %v2725
        %v2738 = vpack.c.b16 %v2728, %v2727
        %v2739 = vpack.c.b16 %v2730, %v2729
        %v2740 = vpack.c.b16 %v2732, %v2731
        %2749 = vmatprep.subr.bf16.mxu0 0
        %2750 = vmatpush1.bf16.msra.mxu0 %v2733
        %2751 = vmatprep.subr.bf16.mxu0 0
        %2752 = vmatpush1.bf16.msra.mxu0 %v2734
        %2753 = vmatprep.subr.bf16.mxu0 0
        %2754 = vmatpush1.bf16.msra.mxu0 %v2735
        %2755 = vmatprep.subr.bf16.mxu0 0
        %2756 = vmatpush1.bf16.msra.mxu0 %v2736
        %2757 = vmatprep.subr.bf16.mxu0 0
        %2758 = vmatpush1.bf16.msra.mxu0 %v2737
        %2759 = vmatprep.subr.bf16.mxu0 0
        %2760 = vmatpush1.bf16.msra.mxu0 %v2738
        %2761 = vmatprep.subr.bf16.mxu0 0
        %2762 = vmatpush1.bf16.msra.mxu0 %v2739
        %2763 = vmatprep.subr.bf16.mxu0 0
        %2764 = vmatpush1.bf16.msra.mxu0 %v2740
        %2765 = vmatprep.subr.bf16.mxu0 0
        %2766 = vmatpush1.bf16.msra.mxu0 0
        %2767 = vmatprep.subr.bf16.mxu0 0
        %2768 = vmatpush1.bf16.msra.mxu0 0
        %2769 = vmatprep.subr.bf16.mxu0 0
        %2770 = vmatpush1.bf16.msra.mxu0 0
        %2771 = vmatprep.subr.bf16.mxu0 0
        %2772 = vmatpush1.bf16.msra.mxu0 0
        %2773 = vmatprep.subr.bf16.mxu0 0
        %2774 = vmatpush1.bf16.msra.mxu0 0
        %2775 = vmatprep.subr.bf16.mxu0 0
        %2776 = vmatpush1.bf16.msra.mxu0 0
        %2777 = vmatprep.subr.bf16.mxu0 0
        %2778 = vmatpush1.bf16.msra.mxu0 0
        %2779 = vmatprep.subr.bf16.mxu0 0
        %2780 = vmatpush1.bf16.msra.mxu0 0
        %2781 = vmatprep.mubr.bf16.mxu0 0
        %2782 = vmatmul.mubr.bf16.gmra.mrb[0].mxu0 %v1787
        %v2783 = vpop.f32.mrb[0].mxu0
        %v2784 = vadd.f32 0.0, %v2783
        %v2785 = vpop.f32.mrb[0].mxu0
        %v2786 = vpop.f32.mrb[0].mxu0
        %v2787 = vadd.f32 0.0, %v2786
        %v2788 = vpop.f32.mrb[0].mxu0
        %2789 = vmatprep.mubr.bf16.mxu0 0
        %2790 = vmatmul.mubr.bf16.gmra.mrb[0].mxu0 %v1788
        %v2791 = vpop.f32.mrb[0].mxu0
        %v2792 = vadd.f32 0.0, %v2791
        %v2793 = vpop.f32.mrb[0].mxu0
        %v2794 = vpop.f32.mrb[0].mxu0
        %v2795 = vadd.f32 0.0, %v2794
        %v2796 = vpop.f32.mrb[0].mxu0
        %2797 = vmatprep.mubr.bf16.mxu0 0
        %2798 = vmatmul.mubr.bf16.gmra.mrb[0].mxu0 %v1789
        %v2799 = vpop.f32.mrb[0].mxu0
        %v2800 = vadd.f32 0.0, %v2799
        %v2801 = vpop.f32.mrb[0].mxu0
        %v2802 = vpop.f32.mrb[0].mxu0
        %v2803 = vadd.f32 0.0, %v2802
        %v2804 = vpop.f32.mrb[0].mxu0
        %2805 = vmatprep.mubr.bf16.mxu0 0
        %2806 = vmatmul.mubr.bf16.gmra.mrb[0].mxu0 %v2683
        %v2807 = vpop.f32.mrb[0].mxu0
        %v2808 = vadd.f32 0.0, %v2807
        %v2809 = vpop.f32.mrb[0].mxu0
        %v2810 = vpop.f32.mrb[0].mxu0
        %v2811 = vadd.f32 0.0, %v2810
        %v2812 = vpop.f32.mrb[0].mxu0
        %2813 = vdwg.mxu0
        %v2814 = vadd.f32 %v2669, %v2784
        %v2815 = vadd.f32 %v2670, %v2787
        %v2816 = vadd.f32 %v2671, %v2792
        %v2817 = vadd.f32 %v2672, %v2795
        %v2818 = vadd.f32 %v2673, %v2800
        %v2819 = vadd.f32 %v2674, %v2803
        %v2820 = vadd.f32 %v2675, %v2808
        %v2821 = vadd.f32 %v2676, %v2811
        %v2822 = vrot.slane %v1594, 2
        %v2823 = vrot.slane %v1595, 2
        %v2824 = vsel %vm535, %v2822, %v2823
        %v2826 = vpack.c.bf16 %v2824, %v2394
        %s2827 = scalar_lea.vmem %s1, 1088
        %v2828 = vld [vmem:[%s2827] sm:$0xf]
        %v2829 = vld [vmem:[%s2827 + $0x4] sm:$0xf]
        %v2830 = vld [vmem:[%s2827 + $0x8] sm:$0xf]
        %v2831 = vld [vmem:[%s2827 + $0xc] sm:$0xf]
        %v2832 = vld [vmem:[%s2827 + $0x10] sm:$0xf]
        %v2833 = vld [vmem:[%s2827 + $0x14] sm:$0xf]
        %v2834 = vld [vmem:[%s2827 + $0x18] sm:$0xf]
        %v2835 = vld [vmem:[%s2827 + $0x1c] sm:$0xf]
        %v2836 = vld [vmem:[%s2827 + $0x20] sm:$0xf]
        %v2837 = vld [vmem:[%s2827 + $0x24] sm:$0xf]
        %v2838 = vld [vmem:[%s2827 + $0x28] sm:$0xf]
        %v2839 = vld [vmem:[%s2827 + $0x2c] sm:$0xf]
        %v2840 = vld [vmem:[%s2827 + $0x30] sm:$0xf]
        %v2841 = vld [vmem:[%s2827 + $0x34] sm:$0xf]
        %v2842 = vld [vmem:[%s2827 + $0x38] sm:$0xf]
        %v2843 = vld [vmem:[%s2827 + $0x3c] sm:$0xf]
        %v2860 = vunpack.c.l.b16 %v2828
        %v2861 = vunpack.c.l.b16 %v2829
        %v2862 = vunpack.c.l.b16 %v2830
        %v2863 = vunpack.c.l.b16 %v2831
        %v2864 = vunpack.c.l.b16 %v2832
        %v2865 = vunpack.c.l.b16 %v2833
        %v2866 = vunpack.c.l.b16 %v2834
        %v2867 = vunpack.c.l.b16 %v2835
        %v2868 = vunpack.c.l.b16 %v2836
        %v2869 = vunpack.c.l.b16 %v2837
        %v2870 = vunpack.c.l.b16 %v2838
        %v2871 = vunpack.c.l.b16 %v2839
        %v2872 = vunpack.c.l.b16 %v2840
        %v2873 = vunpack.c.l.b16 %v2841
        %v2874 = vunpack.c.l.b16 %v2842
        %v2875 = vunpack.c.l.b16 %v2843
        %v2876 = vpack.c.b16 %v2861, %v2860
        %v2877 = vpack.c.b16 %v2863, %v2862
        %v2878 = vpack.c.b16 %v2865, %v2864
        %v2879 = vpack.c.b16 %v2867, %v2866
        %v2880 = vpack.c.b16 %v2869, %v2868
        %v2881 = vpack.c.b16 %v2871, %v2870
        %v2882 = vpack.c.b16 %v2873, %v2872
        %v2883 = vpack.c.b16 %v2875, %v2874
        %2892 = vmatprep.subr.bf16.mxu0 0
        %2893 = vmatpush1.bf16.msra.mxu0 %v2876
        %2894 = vmatprep.subr.bf16.mxu0 0
        %2895 = vmatpush1.bf16.msra.mxu0 %v2877
        %2896 = vmatprep.subr.bf16.mxu0 0
        %2897 = vmatpush1.bf16.msra.mxu0 %v2878
        %2898 = vmatprep.subr.bf16.mxu0 0
        %2899 = vmatpush1.bf16.msra.mxu0 %v2879
        %2900 = vmatprep.subr.bf16.mxu0 0
        %2901 = vmatpush1.bf16.msra.mxu0 %v2880
        %2902 = vmatprep.subr.bf16.mxu0 0
        %2903 = vmatpush1.bf16.msra.mxu0 %v2881
        %2904 = vmatprep.subr.bf16.mxu0 0
        %2905 = vmatpush1.bf16.msra.mxu0 %v2882
        %2906 = vmatprep.subr.bf16.mxu0 0
        %2907 = vmatpush1.bf16.msra.mxu0 %v2883
        %2908 = vmatprep.subr.bf16.mxu0 0
        %2909 = vmatpush1.bf16.msra.mxu0 0
        %2910 = vmatprep.subr.bf16.mxu0 0
        %2911 = vmatpush1.bf16.msra.mxu0 0
        %2912 = vmatprep.subr.bf16.mxu0 0
        %2913 = vmatpush1.bf16.msra.mxu0 0
        %2914 = vmatprep.subr.bf16.mxu0 0
        %2915 = vmatpush1.bf16.msra.mxu0 0
        %2916 = vmatprep.subr.bf16.mxu0 0
        %2917 = vmatpush1.bf16.msra.mxu0 0
        %2918 = vmatprep.subr.bf16.mxu0 0
        %2919 = vmatpush1.bf16.msra.mxu0 0
        %2920 = vmatprep.subr.bf16.mxu0 0
        %2921 = vmatpush1.bf16.msra.mxu0 0
        %2922 = vmatprep.subr.bf16.mxu0 0
        %2923 = vmatpush1.bf16.msra.mxu0 0
        %2924 = vmatprep.mubr.bf16.mxu0 0
        %2925 = vmatmul.mubr.bf16.gmra.mrb[0].mxu0 %v1961
        %v2926 = vpop.f32.mrb[0].mxu0
        %v2927 = vadd.f32 0.0, %v2926
        %v2928 = vpop.f32.mrb[0].mxu0
        %v2929 = vpop.f32.mrb[0].mxu0
        %v2930 = vadd.f32 0.0, %v2929
        %v2931 = vpop.f32.mrb[0].mxu0
        %2932 = vmatprep.mubr.bf16.mxu0 0
        %2933 = vmatmul.mubr.bf16.gmra.mrb[0].mxu0 %v1962
        %v2934 = vpop.f32.mrb[0].mxu0
        %v2935 = vadd.f32 0.0, %v2934
        %v2936 = vpop.f32.mrb[0].mxu0
        %v2937 = vpop.f32.mrb[0].mxu0
        %v2938 = vadd.f32 0.0, %v2937
        %v2939 = vpop.f32.mrb[0].mxu0
        %2940 = vmatprep.mubr.bf16.mxu0 0
        %2941 = vmatmul.mubr.bf16.gmra.mrb[0].mxu0 %v1963
        %v2942 = vpop.f32.mrb[0].mxu0
        %v2943 = vadd.f32 0.0, %v2942
        %v2944 = vpop.f32.mrb[0].mxu0
        %v2945 = vpop.f32.mrb[0].mxu0
        %v2946 = vadd.f32 0.0, %v2945
        %v2947 = vpop.f32.mrb[0].mxu0
        %2948 = vmatprep.mubr.bf16.mxu0 0
        %2949 = vmatmul.mubr.bf16.gmra.mrb[0].mxu0 %v2826
        %v2950 = vpop.f32.mrb[0].mxu0
        %v2951 = vadd.f32 0.0, %v2950
        %v2952 = vpop.f32.mrb[0].mxu0
        %v2953 = vpop.f32.mrb[0].mxu0
        %v2954 = vadd.f32 0.0, %v2953
        %v2955 = vpop.f32.mrb[0].mxu0
        %2956 = vdwg.mxu0
        %v2957 = vadd.f32 %v2814, %v2927
        %v2958 = vadd.f32 %v2815, %v2930
        %v2959 = vadd.f32 %v2816, %v2935
        %v2960 = vadd.f32 %v2817, %v2938
        %v2961 = vadd.f32 %v2818, %v2943
        %v2962 = vadd.f32 %v2819, %v2946
        %v2963 = vadd.f32 %v2820, %v2951
        %v2964 = vadd.f32 %v2821, %v2954
        %s2965 = sadd.s32 %s26, 2
        %s2966 = smul.u32 %s2965, 160
        %s2967 = scalar_lea.vmem %s195, %s2966
        %v2968 = vld [vmem:[%s2967] sm:$0xff]
        %v2969 = vld [vmem:[%s2967 + $0x8] sm:$0x3]
        %v2970 = vld [vmem:[%s2967 + $0x10] sm:$0xff]
        %v2971 = vld [vmem:[%s2967 + $0x18] sm:$0x3]
        %v2972 = vld [vmem:[%s2967 + $0x20] sm:$0xff]
        %v2973 = vld [vmem:[%s2967 + $0x28] sm:$0x3]
        %v2974 = vld [vmem:[%s2967 + $0x30] sm:$0xff]
        %v2975 = vld [vmem:[%s2967 + $0x38] sm:$0x3]
        %v2976 = vld [vmem:[%s2967 + $0x40] sm:$0xff]
        %v2977 = vld [vmem:[%s2967 + $0x48] sm:$0x3]
        %v2978 = vld [vmem:[%s2967 + $0x50] sm:$0xff]
        %v2979 = vld [vmem:[%s2967 + $0x58] sm:$0x3]
        %v2980 = vld [vmem:[%s2967 + $0x60] sm:$0xff]
        %v2981 = vld [vmem:[%s2967 + $0x68] sm:$0x3]
        %v2982 = vld [vmem:[%s2967 + $0x70] sm:$0xff]
        %v2983 = vld [vmem:[%s2967 + $0x78] sm:$0x3]
        %v2984 = vld [vmem:[%s2967 + $0x80] sm:$0xff]
        %v2985 = vld [vmem:[%s2967 + $0x88] sm:$0x3]
        %v2986 = vld [vmem:[%s2967 + $0x90] sm:$0xff]
        %v2987 = vld [vmem:[%s2967 + $0x98] sm:$0x3]
        %v2988 = vpack.c.bf16 %v2970, %v2968
        %v2989 = vpack.c.bf16 %v2974, %v2972
        %v2990 = vpack.c.bf16 %v2978, %v2976
        %v2991 = vpack.c.bf16 %v2982, %v2980
        %s2992 = scalar_lea.vmem %s1, 1152
        %v2993 = vld [vmem:[%s2992] sm:$0xf]
        %v2994 = vld [vmem:[%s2992 + $0x4] sm:$0xf]
        %v2995 = vld [vmem:[%s2992 + $0x8] sm:$0xf]
        %v2996 = vld [vmem:[%s2992 + $0xc] sm:$0xf]
        %v2997 = vld [vmem:[%s2992 + $0x10] sm:$0xf]
        %v2998 = vld [vmem:[%s2992 + $0x14] sm:$0xf]
        %v2999 = vld [vmem:[%s2992 + $0x18] sm:$0xf]
        %v3000 = vld [vmem:[%s2992 + $0x1c] sm:$0xf]
        %v3001 = vld [vmem:[%s2992 + $0x20] sm:$0xf]
        %v3002 = vld [vmem:[%s2992 + $0x24] sm:$0xf]
        %v3003 = vld [vmem:[%s2992 + $0x28] sm:$0xf]
        %v3004 = vld [vmem:[%s2992 + $0x2c] sm:$0xf]
        %v3005 = vld [vmem:[%s2992 + $0x30] sm:$0xf]
        %v3006 = vld [vmem:[%s2992 + $0x34] sm:$0xf]
        %v3007 = vld [vmem:[%s2992 + $0x38] sm:$0xf]
        %v3008 = vld [vmem:[%s2992 + $0x3c] sm:$0xf]
        %v3025 = vunpack.c.l.b16 %v2993
        %v3026 = vunpack.c.l.b16 %v2994
        %v3027 = vunpack.c.l.b16 %v2995
        %v3028 = vunpack.c.l.b16 %v2996
        %v3029 = vunpack.c.l.b16 %v2997
        %v3030 = vunpack.c.l.b16 %v2998
        %v3031 = vunpack.c.l.b16 %v2999
        %v3032 = vunpack.c.l.b16 %v3000
        %v3033 = vunpack.c.l.b16 %v3001
        %v3034 = vunpack.c.l.b16 %v3002
        %v3035 = vunpack.c.l.b16 %v3003
        %v3036 = vunpack.c.l.b16 %v3004
        %v3037 = vunpack.c.l.b16 %v3005
        %v3038 = vunpack.c.l.b16 %v3006
        %v3039 = vunpack.c.l.b16 %v3007
        %v3040 = vunpack.c.l.b16 %v3008
        %v3041 = vpack.c.b16 %v3026, %v3025
        %v3042 = vpack.c.b16 %v3028, %v3027
        %v3043 = vpack.c.b16 %v3030, %v3029
        %v3044 = vpack.c.b16 %v3032, %v3031
        %v3045 = vpack.c.b16 %v3034, %v3033
        %v3046 = vpack.c.b16 %v3036, %v3035
        %v3047 = vpack.c.b16 %v3038, %v3037
        %v3048 = vpack.c.b16 %v3040, %v3039
        %3057 = vmatprep.subr.bf16.mxu0 0
        %3058 = vmatpush1.bf16.msra.mxu0 %v3041
        %3059 = vmatprep.subr.bf16.mxu0 0
        %3060 = vmatpush1.bf16.msra.mxu0 %v3042
        %3061 = vmatprep.subr.bf16.mxu0 0
        %3062 = vmatpush1.bf16.msra.mxu0 %v3043
        %3063 = vmatprep.subr.bf16.mxu0 0
        %3064 = vmatpush1.bf16.msra.mxu0 %v3044
        %3065 = vmatprep.subr.bf16.mxu0 0
        %3066 = vmatpush1.bf16.msra.mxu0 %v3045
        %3067 = vmatprep.subr.bf16.mxu0 0
        %3068 = vmatpush1.bf16.msra.mxu0 %v3046
        %3069 = vmatprep.subr.bf16.mxu0 0
        %3070 = vmatpush1.bf16.msra.mxu0 %v3047
        %3071 = vmatprep.subr.bf16.mxu0 0
        %3072 = vmatpush1.bf16.msra.mxu0 %v3048
        %3073 = vmatprep.subr.bf16.mxu0 0
        %3074 = vmatpush1.bf16.msra.mxu0 0
        %3075 = vmatprep.subr.bf16.mxu0 0
        %3076 = vmatpush1.bf16.msra.mxu0 0
        %3077 = vmatprep.subr.bf16.mxu0 0
        %3078 = vmatpush1.bf16.msra.mxu0 0
        %3079 = vmatprep.subr.bf16.mxu0 0
        %3080 = vmatpush1.bf16.msra.mxu0 0
        %3081 = vmatprep.subr.bf16.mxu0 0
        %3082 = vmatpush1.bf16.msra.mxu0 0
        %3083 = vmatprep.subr.bf16.mxu0 0
        %3084 = vmatpush1.bf16.msra.mxu0 0
        %3085 = vmatprep.subr.bf16.mxu0 0
        %3086 = vmatpush1.bf16.msra.mxu0 0
        %3087 = vmatprep.subr.bf16.mxu0 0
        %3088 = vmatpush1.bf16.msra.mxu0 0
        %3089 = vmatprep.mubr.bf16.mxu0 0
        %3090 = vmatmul.mubr.bf16.gmra.mrb[0].mxu0 %v2988
        %v3091 = vpop.f32.mrb[0].mxu0
        %v3092 = vadd.f32 0.0, %v3091
        %v3093 = vpop.f32.mrb[0].mxu0
        %v3094 = vpop.f32.mrb[0].mxu0
        %v3095 = vadd.f32 0.0, %v3094
        %v3096 = vpop.f32.mrb[0].mxu0
        %3097 = vmatprep.mubr.bf16.mxu0 0
        %3098 = vmatmul.mubr.bf16.gmra.mrb[0].mxu0 %v2989
        %v3099 = vpop.f32.mrb[0].mxu0
        %v3100 = vadd.f32 0.0, %v3099
        %v3101 = vpop.f32.mrb[0].mxu0
        %v3102 = vpop.f32.mrb[0].mxu0
        %v3103 = vadd.f32 0.0, %v3102
        %v3104 = vpop.f32.mrb[0].mxu0
        %3105 = vmatprep.mubr.bf16.mxu0 0
        %3106 = vmatmul.mubr.bf16.gmra.mrb[0].mxu0 %v2990
        %v3107 = vpop.f32.mrb[0].mxu0
        %v3108 = vadd.f32 0.0, %v3107
        %v3109 = vpop.f32.mrb[0].mxu0
        %v3110 = vpop.f32.mrb[0].mxu0
        %v3111 = vadd.f32 0.0, %v3110
        %v3112 = vpop.f32.mrb[0].mxu0
        %3113 = vmatprep.mubr.bf16.mxu0 0
        %3114 = vmatmul.mubr.bf16.gmra.mrb[0].mxu0 %v2991
        %v3115 = vpop.f32.mrb[0].mxu0
        %v3116 = vadd.f32 0.0, %v3115
        %v3117 = vpop.f32.mrb[0].mxu0
        %v3118 = vpop.f32.mrb[0].mxu0
        %v3119 = vadd.f32 0.0, %v3118
        %v3120 = vpop.f32.mrb[0].mxu0
        %3121 = vdwg.mxu0
        %v3122 = vadd.f32 %v2957, %v3092
        %v3123 = vadd.f32 %v2958, %v3095
        %v3124 = vadd.f32 %v2959, %v3100
        %v3125 = vadd.f32 %v2960, %v3103
        %v3126 = vadd.f32 %v2961, %v3108
        %v3127 = vadd.f32 %v2962, %v3111
        %v3128 = vadd.f32 %v2963, %v3116
        %v3129 = vadd.f32 %v2964, %v3119
        %v3146 = vrot.slane %v2968, 1
        %v3147 = vrot.slane %v2969, 1
        %v3148 = vsel %vm255, %v3146, %v3147
        %v3149 = vrot.slane %v2970, 1
        %v3150 = vrot.slane %v2971, 1
        %v3151 = vsel %vm255, %v3149, %v3150
        %v3152 = vrot.slane %v2972, 1
        %v3153 = vrot.slane %v2973, 1
        %v3154 = vsel %vm255, %v3152, %v3153
        %v3155 = vrot.slane %v2974, 1
        %v3156 = vrot.slane %v2975, 1
        %v3157 = vsel %vm255, %v3155, %v3156
        %v3158 = vrot.slane %v2976, 1
        %v3159 = vrot.slane %v2977, 1
        %v3160 = vsel %vm255, %v3158, %v3159
        %v3161 = vrot.slane %v2978, 1
        %v3162 = vrot.slane %v2979, 1
        %v3163 = vsel %vm255, %v3161, %v3162
        %v3164 = vrot.slane %v2980, 1
        %v3165 = vrot.slane %v2981, 1
        %v3166 = vsel %vm255, %v3164, %v3165
        %v3167 = vrot.slane %v2982, 1
        %v3168 = vrot.slane %v2983, 1
        %v3169 = vsel %vm255, %v3167, %v3168
        %v3178 = vpack.c.bf16 %v3151, %v3148
        %v3179 = vpack.c.bf16 %v3157, %v3154
        %v3180 = vpack.c.bf16 %v3163, %v3160
        %v3181 = vpack.c.bf16 %v3169, %v3166
        %s3182 = scalar_lea.vmem %s1, 1216
        %v3183 = vld [vmem:[%s3182] sm:$0xf]
        %v3184 = vld [vmem:[%s3182 + $0x4] sm:$0xf]
        %v3185 = vld [vmem:[%s3182 + $0x8] sm:$0xf]
        %v3186 = vld [vmem:[%s3182 + $0xc] sm:$0xf]
        %v3187 = vld [vmem:[%s3182 + $0x10] sm:$0xf]
        %v3188 = vld [vmem:[%s3182 + $0x14] sm:$0xf]
        %v3189 = vld [vmem:[%s3182 + $0x18] sm:$0xf]
        %v3190 = vld [vmem:[%s3182 + $0x1c] sm:$0xf]
        %v3191 = vld [vmem:[%s3182 + $0x20] sm:$0xf]
        %v3192 = vld [vmem:[%s3182 + $0x24] sm:$0xf]
        %v3193 = vld [vmem:[%s3182 + $0x28] sm:$0xf]
        %v3194 = vld [vmem:[%s3182 + $0x2c] sm:$0xf]
        %v3195 = vld [vmem:[%s3182 + $0x30] sm:$0xf]
        %v3196 = vld [vmem:[%s3182 + $0x34] sm:$0xf]
        %v3197 = vld [vmem:[%s3182 + $0x38] sm:$0xf]
        %v3198 = vld [vmem:[%s3182 + $0x3c] sm:$0xf]
        %v3215 = vunpack.c.l.b16 %v3183
        %v3216 = vunpack.c.l.b16 %v3184
        %v3217 = vunpack.c.l.b16 %v3185
        %v3218 = vunpack.c.l.b16 %v3186
        %v3219 = vunpack.c.l.b16 %v3187
        %v3220 = vunpack.c.l.b16 %v3188
        %v3221 = vunpack.c.l.b16 %v3189
        %v3222 = vunpack.c.l.b16 %v3190
        %v3223 = vunpack.c.l.b16 %v3191
        %v3224 = vunpack.c.l.b16 %v3192
        %v3225 = vunpack.c.l.b16 %v3193
        %v3226 = vunpack.c.l.b16 %v3194
        %v3227 = vunpack.c.l.b16 %v3195
        %v3228 = vunpack.c.l.b16 %v3196
        %v3229 = vunpack.c.l.b16 %v3197
        %v3230 = vunpack.c.l.b16 %v3198
        %v3231 = vpack.c.b16 %v3216, %v3215
        %v3232 = vpack.c.b16 %v3218, %v3217
        %v3233 = vpack.c.b16 %v3220, %v3219
        %v3234 = vpack.c.b16 %v3222, %v3221
        %v3235 = vpack.c.b16 %v3224, %v3223
        %v3236 = vpack.c.b16 %v3226, %v3225
        %v3237 = vpack.c.b16 %v3228, %v3227
        %v3238 = vpack.c.b16 %v3230, %v3229
        %3247 = vmatprep.subr.bf16.mxu0 0
        %3248 = vmatpush1.bf16.msra.mxu0 %v3231
        %3249 = vmatprep.subr.bf16.mxu0 0
        %3250 = vmatpush1.bf16.msra.mxu0 %v3232
        %3251 = vmatprep.subr.bf16.mxu0 0
        %3252 = vmatpush1.bf16.msra.mxu0 %v3233
        %3253 = vmatprep.subr.bf16.mxu0 0
        %3254 = vmatpush1.bf16.msra.mxu0 %v3234
        %3255 = vmatprep.subr.bf16.mxu0 0
        %3256 = vmatpush1.bf16.msra.mxu0 %v3235
        %3257 = vmatprep.subr.bf16.mxu0 0
        %3258 = vmatpush1.bf16.msra.mxu0 %v3236
        %3259 = vmatprep.subr.bf16.mxu0 0
        %3260 = vmatpush1.bf16.msra.mxu0 %v3237
        %3261 = vmatprep.subr.bf16.mxu0 0
        %3262 = vmatpush1.bf16.msra.mxu0 %v3238
        %3263 = vmatprep.subr.bf16.mxu0 0
        %3264 = vmatpush1.bf16.msra.mxu0 0
        %3265 = vmatprep.subr.bf16.mxu0 0
        %3266 = vmatpush1.bf16.msra.mxu0 0
        %3267 = vmatprep.subr.bf16.mxu0 0
        %3268 = vmatpush1.bf16.msra.mxu0 0
        %3269 = vmatprep.subr.bf16.mxu0 0
        %3270 = vmatpush1.bf16.msra.mxu0 0
        %3271 = vmatprep.subr.bf16.mxu0 0
        %3272 = vmatpush1.bf16.msra.mxu0 0
        %3273 = vmatprep.subr.bf16.mxu0 0
        %3274 = vmatpush1.bf16.msra.mxu0 0
        %3275 = vmatprep.subr.bf16.mxu0 0
        %3276 = vmatpush1.bf16.msra.mxu0 0
        %3277 = vmatprep.subr.bf16.mxu0 0
        %3278 = vmatpush1.bf16.msra.mxu0 0
        %3279 = vmatprep.mubr.bf16.mxu0 0
        %3280 = vmatmul.mubr.bf16.gmra.mrb[0].mxu0 %v3178
        %v3281 = vpop.f32.mrb[0].mxu0
        %v3282 = vadd.f32 0.0, %v3281
        %v3283 = vpop.f32.mrb[0].mxu0
        %v3284 = vpop.f32.mrb[0].mxu0
        %v3285 = vadd.f32 0.0, %v3284
        %v3286 = vpop.f32.mrb[0].mxu0
        %3287 = vmatprep.mubr.bf16.mxu0 0
        %3288 = vmatmul.mubr.bf16.gmra.mrb[0].mxu0 %v3179
        %v3289 = vpop.f32.mrb[0].mxu0
        %v3290 = vadd.f32 0.0, %v3289
        %v3291 = vpop.f32.mrb[0].mxu0
        %v3292 = vpop.f32.mrb[0].mxu0
        %v3293 = vadd.f32 0.0, %v3292
        %v3294 = vpop.f32.mrb[0].mxu0
        %3295 = vmatprep.mubr.bf16.mxu0 0
        %3296 = vmatmul.mubr.bf16.gmra.mrb[0].mxu0 %v3180
        %v3297 = vpop.f32.mrb[0].mxu0
        %v3298 = vadd.f32 0.0, %v3297
        %v3299 = vpop.f32.mrb[0].mxu0
        %v3300 = vpop.f32.mrb[0].mxu0
        %v3301 = vadd.f32 0.0, %v3300
        %v3302 = vpop.f32.mrb[0].mxu0
        %3303 = vmatprep.mubr.bf16.mxu0 0
        %3304 = vmatmul.mubr.bf16.gmra.mrb[0].mxu0 %v3181
        %v3305 = vpop.f32.mrb[0].mxu0
        %v3306 = vadd.f32 0.0, %v3305
        %v3307 = vpop.f32.mrb[0].mxu0
        %v3308 = vpop.f32.mrb[0].mxu0
        %v3309 = vadd.f32 0.0, %v3308
        %v3310 = vpop.f32.mrb[0].mxu0
        %3311 = vdwg.mxu0
        %v3312 = vadd.f32 %v3122, %v3282
        %v3313 = vadd.f32 %v3123, %v3285
        %v3314 = vadd.f32 %v3124, %v3290
        %v3315 = vadd.f32 %v3125, %v3293
        %v3316 = vadd.f32 %v3126, %v3298
        %v3317 = vadd.f32 %v3127, %v3301
        %v3318 = vadd.f32 %v3128, %v3306
        %v3319 = vadd.f32 %v3129, %v3309
        %v3320 = vrot.slane %v2968, 2
        %v3321 = vrot.slane %v2969, 2
        %v3322 = vsel %vm535, %v3320, %v3321
        %v3323 = vrot.slane %v2970, 2
        %v3324 = vrot.slane %v2971, 2
        %v3325 = vsel %vm535, %v3323, %v3324
        %v3326 = vrot.slane %v2972, 2
        %v3327 = vrot.slane %v2973, 2
        %v3328 = vsel %vm535, %v3326, %v3327
        %v3329 = vrot.slane %v2974, 2
        %v3330 = vrot.slane %v2975, 2
        %v3331 = vsel %vm535, %v3329, %v3330
        %v3332 = vrot.slane %v2976, 2
        %v3333 = vrot.slane %v2977, 2
        %v3334 = vsel %vm535, %v3332, %v3333
        %v3335 = vrot.slane %v2978, 2
        %v3336 = vrot.slane %v2979, 2
        %v3337 = vsel %vm535, %v3335, %v3336
        %v3338 = vrot.slane %v2980, 2
        %v3339 = vrot.slane %v2981, 2
        %v3340 = vsel %vm535, %v3338, %v3339
        %v3341 = vrot.slane %v2982, 2
        %v3342 = vrot.slane %v2983, 2
        %v3343 = vsel %vm535, %v3341, %v3342
        %v3352 = vpack.c.bf16 %v3325, %v3322
        %v3353 = vpack.c.bf16 %v3331, %v3328
        %v3354 = vpack.c.bf16 %v3337, %v3334
        %v3355 = vpack.c.bf16 %v3343, %v3340
        %s3356 = scalar_lea.vmem %s1, 1280
        %v3357 = vld [vmem:[%s3356] sm:$0xf]
        %v3358 = vld [vmem:[%s3356 + $0x4] sm:$0xf]
        %v3359 = vld [vmem:[%s3356 + $0x8] sm:$0xf]
        %v3360 = vld [vmem:[%s3356 + $0xc] sm:$0xf]
        %v3361 = vld [vmem:[%s3356 + $0x10] sm:$0xf]
        %v3362 = vld [vmem:[%s3356 + $0x14] sm:$0xf]
        %v3363 = vld [vmem:[%s3356 + $0x18] sm:$0xf]
        %v3364 = vld [vmem:[%s3356 + $0x1c] sm:$0xf]
        %v3365 = vld [vmem:[%s3356 + $0x20] sm:$0xf]
        %v3366 = vld [vmem:[%s3356 + $0x24] sm:$0xf]
        %v3367 = vld [vmem:[%s3356 + $0x28] sm:$0xf]
        %v3368 = vld [vmem:[%s3356 + $0x2c] sm:$0xf]
        %v3369 = vld [vmem:[%s3356 + $0x30] sm:$0xf]
        %v3370 = vld [vmem:[%s3356 + $0x34] sm:$0xf]
        %v3371 = vld [vmem:[%s3356 + $0x38] sm:$0xf]
        %v3372 = vld [vmem:[%s3356 + $0x3c] sm:$0xf]
        %v3389 = vunpack.c.l.b16 %v3357
        %v3390 = vunpack.c.l.b16 %v3358
        %v3391 = vunpack.c.l.b16 %v3359
        %v3392 = vunpack.c.l.b16 %v3360
        %v3393 = vunpack.c.l.b16 %v3361
        %v3394 = vunpack.c.l.b16 %v3362
        %v3395 = vunpack.c.l.b16 %v3363
        %v3396 = vunpack.c.l.b16 %v3364
        %v3397 = vunpack.c.l.b16 %v3365
        %v3398 = vunpack.c.l.b16 %v3366
        %v3399 = vunpack.c.l.b16 %v3367
        %v3400 = vunpack.c.l.b16 %v3368
        %v3401 = vunpack.c.l.b16 %v3369
        %v3402 = vunpack.c.l.b16 %v3370
        %v3403 = vunpack.c.l.b16 %v3371
        %v3404 = vunpack.c.l.b16 %v3372
        %v3405 = vpack.c.b16 %v3390, %v3389
        %v3406 = vpack.c.b16 %v3392, %v3391
        %v3407 = vpack.c.b16 %v3394, %v3393
        %v3408 = vpack.c.b16 %v3396, %v3395
        %v3409 = vpack.c.b16 %v3398, %v3397
        %v3410 = vpack.c.b16 %v3400, %v3399
        %v3411 = vpack.c.b16 %v3402, %v3401
        %v3412 = vpack.c.b16 %v3404, %v3403
        %3421 = vmatprep.subr.bf16.mxu0 0
        %3422 = vmatpush1.bf16.msra.mxu0 %v3405
        %3423 = vmatprep.subr.bf16.mxu0 0
        %3424 = vmatpush1.bf16.msra.mxu0 %v3406
        %3425 = vmatprep.subr.bf16.mxu0 0
        %3426 = vmatpush1.bf16.msra.mxu0 %v3407
        %3427 = vmatprep.subr.bf16.mxu0 0
        %3428 = vmatpush1.bf16.msra.mxu0 %v3408
        %3429 = vmatprep.subr.bf16.mxu0 0
        %3430 = vmatpush1.bf16.msra.mxu0 %v3409
        %3431 = vmatprep.subr.bf16.mxu0 0
        %3432 = vmatpush1.bf16.msra.mxu0 %v3410
        %3433 = vmatprep.subr.bf16.mxu0 0
        %3434 = vmatpush1.bf16.msra.mxu0 %v3411
        %3435 = vmatprep.subr.bf16.mxu0 0
        %3436 = vmatpush1.bf16.msra.mxu0 %v3412
        %3437 = vmatprep.subr.bf16.mxu0 0
        %3438 = vmatpush1.bf16.msra.mxu0 0
        %3439 = vmatprep.subr.bf16.mxu0 0
        %3440 = vmatpush1.bf16.msra.mxu0 0
        %3441 = vmatprep.subr.bf16.mxu0 0
        %3442 = vmatpush1.bf16.msra.mxu0 0
        %3443 = vmatprep.subr.bf16.mxu0 0
        %3444 = vmatpush1.bf16.msra.mxu0 0
        %3445 = vmatprep.subr.bf16.mxu0 0
        %3446 = vmatpush1.bf16.msra.mxu0 0
        %3447 = vmatprep.subr.bf16.mxu0 0
        %3448 = vmatpush1.bf16.msra.mxu0 0
        %3449 = vmatprep.subr.bf16.mxu0 0
        %3450 = vmatpush1.bf16.msra.mxu0 0
        %3451 = vmatprep.subr.bf16.mxu0 0
        %3452 = vmatpush1.bf16.msra.mxu0 0
        %3453 = vmatprep.mubr.bf16.mxu0 0
        %3454 = vmatmul.mubr.bf16.gmra.mrb[0].mxu0 %v3352
        %v3455 = vpop.f32.mrb[0].mxu0
        %v3456 = vadd.f32 0.0, %v3455
        %v3457 = vpop.f32.mrb[0].mxu0
        %v3458 = vpop.f32.mrb[0].mxu0
        %v3459 = vadd.f32 0.0, %v3458
        %v3460 = vpop.f32.mrb[0].mxu0
        %3461 = vmatprep.mubr.bf16.mxu0 0
        %3462 = vmatmul.mubr.bf16.gmra.mrb[0].mxu0 %v3353
        %v3463 = vpop.f32.mrb[0].mxu0
        %v3464 = vadd.f32 0.0, %v3463
        %v3465 = vpop.f32.mrb[0].mxu0
        %v3466 = vpop.f32.mrb[0].mxu0
        %v3467 = vadd.f32 0.0, %v3466
        %v3468 = vpop.f32.mrb[0].mxu0
        %3469 = vmatprep.mubr.bf16.mxu0 0
        %3470 = vmatmul.mubr.bf16.gmra.mrb[0].mxu0 %v3354
        %v3471 = vpop.f32.mrb[0].mxu0
        %v3472 = vadd.f32 0.0, %v3471
        %v3473 = vpop.f32.mrb[0].mxu0
        %v3474 = vpop.f32.mrb[0].mxu0
        %v3475 = vadd.f32 0.0, %v3474
        %v3476 = vpop.f32.mrb[0].mxu0
        %3477 = vmatprep.mubr.bf16.mxu0 0
        %3478 = vmatmul.mubr.bf16.gmra.mrb[0].mxu0 %v3355
        %v3479 = vpop.f32.mrb[0].mxu0
        %v3480 = vadd.f32 0.0, %v3479
        %v3481 = vpop.f32.mrb[0].mxu0
        %v3482 = vpop.f32.mrb[0].mxu0
        %v3483 = vadd.f32 0.0, %v3482
        %v3484 = vpop.f32.mrb[0].mxu0
        %3485 = vdwg.mxu0
        %v3486 = vadd.f32 %v3312, %v3456
        %v3487 = vadd.f32 %v3313, %v3459
        %v3488 = vadd.f32 %v3314, %v3464
        %v3489 = vadd.f32 %v3315, %v3467
        %v3490 = vadd.f32 %v3316, %v3472
        %v3491 = vadd.f32 %v3317, %v3475
        %v3492 = vadd.f32 %v3318, %v3480
        %v3493 = vadd.f32 %v3319, %v3483
        %v3494 = vpack.c.bf16 %v2972, %v2970
        %v3495 = vpack.c.bf16 %v2976, %v2974
        %v3496 = vpack.c.bf16 %v2980, %v2978
        %v3497 = vpack.c.bf16 %v2984, %v2982
        %s3498 = scalar_lea.vmem %s1, 1344
        %v3499 = vld [vmem:[%s3498] sm:$0xf]
        %v3500 = vld [vmem:[%s3498 + $0x4] sm:$0xf]
        %v3501 = vld [vmem:[%s3498 + $0x8] sm:$0xf]
        %v3502 = vld [vmem:[%s3498 + $0xc] sm:$0xf]
        %v3503 = vld [vmem:[%s3498 + $0x10] sm:$0xf]
        %v3504 = vld [vmem:[%s3498 + $0x14] sm:$0xf]
        %v3505 = vld [vmem:[%s3498 + $0x18] sm:$0xf]
        %v3506 = vld [vmem:[%s3498 + $0x1c] sm:$0xf]
        %v3507 = vld [vmem:[%s3498 + $0x20] sm:$0xf]
        %v3508 = vld [vmem:[%s3498 + $0x24] sm:$0xf]
        %v3509 = vld [vmem:[%s3498 + $0x28] sm:$0xf]
        %v3510 = vld [vmem:[%s3498 + $0x2c] sm:$0xf]
        %v3511 = vld [vmem:[%s3498 + $0x30] sm:$0xf]
        %v3512 = vld [vmem:[%s3498 + $0x34] sm:$0xf]
        %v3513 = vld [vmem:[%s3498 + $0x38] sm:$0xf]
        %v3514 = vld [vmem:[%s3498 + $0x3c] sm:$0xf]
        %v3531 = vunpack.c.l.b16 %v3499
        %v3532 = vunpack.c.l.b16 %v3500
        %v3533 = vunpack.c.l.b16 %v3501
        %v3534 = vunpack.c.l.b16 %v3502
        %v3535 = vunpack.c.l.b16 %v3503
        %v3536 = vunpack.c.l.b16 %v3504
        %v3537 = vunpack.c.l.b16 %v3505
        %v3538 = vunpack.c.l.b16 %v3506
        %v3539 = vunpack.c.l.b16 %v3507
        %v3540 = vunpack.c.l.b16 %v3508
        %v3541 = vunpack.c.l.b16 %v3509
        %v3542 = vunpack.c.l.b16 %v3510
        %v3543 = vunpack.c.l.b16 %v3511
        %v3544 = vunpack.c.l.b16 %v3512
        %v3545 = vunpack.c.l.b16 %v3513
        %v3546 = vunpack.c.l.b16 %v3514
        %v3547 = vpack.c.b16 %v3532, %v3531
        %v3548 = vpack.c.b16 %v3534, %v3533
        %v3549 = vpack.c.b16 %v3536, %v3535
        %v3550 = vpack.c.b16 %v3538, %v3537
        %v3551 = vpack.c.b16 %v3540, %v3539
        %v3552 = vpack.c.b16 %v3542, %v3541
        %v3553 = vpack.c.b16 %v3544, %v3543
        %v3554 = vpack.c.b16 %v3546, %v3545
        %3563 = vmatprep.subr.bf16.mxu0 0
        %3564 = vmatpush1.bf16.msra.mxu0 %v3547
        %3565 = vmatprep.subr.bf16.mxu0 0
        %3566 = vmatpush1.bf16.msra.mxu0 %v3548
        %3567 = vmatprep.subr.bf16.mxu0 0
        %3568 = vmatpush1.bf16.msra.mxu0 %v3549
        %3569 = vmatprep.subr.bf16.mxu0 0
        %3570 = vmatpush1.bf16.msra.mxu0 %v3550
        %3571 = vmatprep.subr.bf16.mxu0 0
        %3572 = vmatpush1.bf16.msra.mxu0 %v3551
        %3573 = vmatprep.subr.bf16.mxu0 0
        %3574 = vmatpush1.bf16.msra.mxu0 %v3552
        %3575 = vmatprep.subr.bf16.mxu0 0
        %3576 = vmatpush1.bf16.msra.mxu0 %v3553
        %3577 = vmatprep.subr.bf16.mxu0 0
        %3578 = vmatpush1.bf16.msra.mxu0 %v3554
        %3579 = vmatprep.subr.bf16.mxu0 0
        %3580 = vmatpush1.bf16.msra.mxu0 0
        %3581 = vmatprep.subr.bf16.mxu0 0
        %3582 = vmatpush1.bf16.msra.mxu0 0
        %3583 = vmatprep.subr.bf16.mxu0 0
        %3584 = vmatpush1.bf16.msra.mxu0 0
        %3585 = vmatprep.subr.bf16.mxu0 0
        %3586 = vmatpush1.bf16.msra.mxu0 0
        %3587 = vmatprep.subr.bf16.mxu0 0
        %3588 = vmatpush1.bf16.msra.mxu0 0
        %3589 = vmatprep.subr.bf16.mxu0 0
        %3590 = vmatpush1.bf16.msra.mxu0 0
        %3591 = vmatprep.subr.bf16.mxu0 0
        %3592 = vmatpush1.bf16.msra.mxu0 0
        %3593 = vmatprep.subr.bf16.mxu0 0
        %3594 = vmatpush1.bf16.msra.mxu0 0
        %3595 = vmatprep.mubr.bf16.mxu0 0
        %3596 = vmatmul.mubr.bf16.gmra.mrb[0].mxu0 %v3494
        %v3597 = vpop.f32.mrb[0].mxu0
        %v3598 = vadd.f32 0.0, %v3597
        %v3599 = vpop.f32.mrb[0].mxu0
        %v3600 = vpop.f32.mrb[0].mxu0
        %v3601 = vadd.f32 0.0, %v3600
        %v3602 = vpop.f32.mrb[0].mxu0
        %3603 = vmatprep.mubr.bf16.mxu0 0
        %3604 = vmatmul.mubr.bf16.gmra.mrb[0].mxu0 %v3495
        %v3605 = vpop.f32.mrb[0].mxu0
        %v3606 = vadd.f32 0.0, %v3605
        %v3607 = vpop.f32.mrb[0].mxu0
        %v3608 = vpop.f32.mrb[0].mxu0
        %v3609 = vadd.f32 0.0, %v3608
        %v3610 = vpop.f32.mrb[0].mxu0
        %3611 = vmatprep.mubr.bf16.mxu0 0
        %3612 = vmatmul.mubr.bf16.gmra.mrb[0].mxu0 %v3496
        %v3613 = vpop.f32.mrb[0].mxu0
        %v3614 = vadd.f32 0.0, %v3613
        %v3615 = vpop.f32.mrb[0].mxu0
        %v3616 = vpop.f32.mrb[0].mxu0
        %v3617 = vadd.f32 0.0, %v3616
        %v3618 = vpop.f32.mrb[0].mxu0
        %3619 = vmatprep.mubr.bf16.mxu0 0
        %3620 = vmatmul.mubr.bf16.gmra.mrb[0].mxu0 %v3497
        %v3621 = vpop.f32.mrb[0].mxu0
        %v3622 = vadd.f32 0.0, %v3621
        %v3623 = vpop.f32.mrb[0].mxu0
        %v3624 = vpop.f32.mrb[0].mxu0
        %v3625 = vadd.f32 0.0, %v3624
        %v3626 = vpop.f32.mrb[0].mxu0
        %3627 = vdwg.mxu0
        %v3628 = vadd.f32 %v3486, %v3598
        %v3629 = vadd.f32 %v3487, %v3601
        %v3630 = vadd.f32 %v3488, %v3606
        %v3631 = vadd.f32 %v3489, %v3609
        %v3632 = vadd.f32 %v3490, %v3614
        %v3633 = vadd.f32 %v3491, %v3617
        %v3634 = vadd.f32 %v3492, %v3622
        %v3635 = vadd.f32 %v3493, %v3625
        %v3638 = vrot.slane %v2984, 1
        %v3639 = vrot.slane %v2985, 1
        %v3640 = vsel %vm255, %v3638, %v3639
        %v3642 = vpack.c.bf16 %v3154, %v3151
        %v3643 = vpack.c.bf16 %v3160, %v3157
        %v3644 = vpack.c.bf16 %v3166, %v3163
        %v3645 = vpack.c.bf16 %v3640, %v3169
        %s3646 = scalar_lea.vmem %s1, 1408
        %v3647 = vld [vmem:[%s3646] sm:$0xf]
        %v3648 = vld [vmem:[%s3646 + $0x4] sm:$0xf]
        %v3649 = vld [vmem:[%s3646 + $0x8] sm:$0xf]
        %v3650 = vld [vmem:[%s3646 + $0xc] sm:$0xf]
        %v3651 = vld [vmem:[%s3646 + $0x10] sm:$0xf]
        %v3652 = vld [vmem:[%s3646 + $0x14] sm:$0xf]
        %v3653 = vld [vmem:[%s3646 + $0x18] sm:$0xf]
        %v3654 = vld [vmem:[%s3646 + $0x1c] sm:$0xf]
        %v3655 = vld [vmem:[%s3646 + $0x20] sm:$0xf]
        %v3656 = vld [vmem:[%s3646 + $0x24] sm:$0xf]
        %v3657 = vld [vmem:[%s3646 + $0x28] sm:$0xf]
        %v3658 = vld [vmem:[%s3646 + $0x2c] sm:$0xf]
        %v3659 = vld [vmem:[%s3646 + $0x30] sm:$0xf]
        %v3660 = vld [vmem:[%s3646 + $0x34] sm:$0xf]
        %v3661 = vld [vmem:[%s3646 + $0x38] sm:$0xf]
        %v3662 = vld [vmem:[%s3646 + $0x3c] sm:$0xf]
        %v3679 = vunpack.c.l.b16 %v3647
        %v3680 = vunpack.c.l.b16 %v3648
        %v3681 = vunpack.c.l.b16 %v3649
        %v3682 = vunpack.c.l.b16 %v3650
        %v3683 = vunpack.c.l.b16 %v3651
        %v3684 = vunpack.c.l.b16 %v3652
        %v3685 = vunpack.c.l.b16 %v3653
        %v3686 = vunpack.c.l.b16 %v3654
        %v3687 = vunpack.c.l.b16 %v3655
        %v3688 = vunpack.c.l.b16 %v3656
        %v3689 = vunpack.c.l.b16 %v3657
        %v3690 = vunpack.c.l.b16 %v3658
        %v3691 = vunpack.c.l.b16 %v3659
        %v3692 = vunpack.c.l.b16 %v3660
        %v3693 = vunpack.c.l.b16 %v3661
        %v3694 = vunpack.c.l.b16 %v3662
        %v3695 = vpack.c.b16 %v3680, %v3679
        %v3696 = vpack.c.b16 %v3682, %v3681
        %v3697 = vpack.c.b16 %v3684, %v3683
        %v3698 = vpack.c.b16 %v3686, %v3685
        %v3699 = vpack.c.b16 %v3688, %v3687
        %v3700 = vpack.c.b16 %v3690, %v3689
        %v3701 = vpack.c.b16 %v3692, %v3691
        %v3702 = vpack.c.b16 %v3694, %v3693
        %3711 = vmatprep.subr.bf16.mxu0 0
        %3712 = vmatpush1.bf16.msra.mxu0 %v3695
        %3713 = vmatprep.subr.bf16.mxu0 0
        %3714 = vmatpush1.bf16.msra.mxu0 %v3696
        %3715 = vmatprep.subr.bf16.mxu0 0
        %3716 = vmatpush1.bf16.msra.mxu0 %v3697
        %3717 = vmatprep.subr.bf16.mxu0 0
        %3718 = vmatpush1.bf16.msra.mxu0 %v3698
        %3719 = vmatprep.subr.bf16.mxu0 0
        %3720 = vmatpush1.bf16.msra.mxu0 %v3699
        %3721 = vmatprep.subr.bf16.mxu0 0
        %3722 = vmatpush1.bf16.msra.mxu0 %v3700
        %3723 = vmatprep.subr.bf16.mxu0 0
        %3724 = vmatpush1.bf16.msra.mxu0 %v3701
        %3725 = vmatprep.subr.bf16.mxu0 0
        %3726 = vmatpush1.bf16.msra.mxu0 %v3702
        %3727 = vmatprep.subr.bf16.mxu0 0
        %3728 = vmatpush1.bf16.msra.mxu0 0
        %3729 = vmatprep.subr.bf16.mxu0 0
        %3730 = vmatpush1.bf16.msra.mxu0 0
        %3731 = vmatprep.subr.bf16.mxu0 0
        %3732 = vmatpush1.bf16.msra.mxu0 0
        %3733 = vmatprep.subr.bf16.mxu0 0
        %3734 = vmatpush1.bf16.msra.mxu0 0
        %3735 = vmatprep.subr.bf16.mxu0 0
        %3736 = vmatpush1.bf16.msra.mxu0 0
        %3737 = vmatprep.subr.bf16.mxu0 0
        %3738 = vmatpush1.bf16.msra.mxu0 0
        %3739 = vmatprep.subr.bf16.mxu0 0
        %3740 = vmatpush1.bf16.msra.mxu0 0
        %3741 = vmatprep.subr.bf16.mxu0 0
        %3742 = vmatpush1.bf16.msra.mxu0 0
        %3743 = vmatprep.mubr.bf16.mxu0 0
        %3744 = vmatmul.mubr.bf16.gmra.mrb[0].mxu0 %v3642
        %v3745 = vpop.f32.mrb[0].mxu0
        %v3746 = vadd.f32 0.0, %v3745
        %v3747 = vpop.f32.mrb[0].mxu0
        %v3748 = vpop.f32.mrb[0].mxu0
        %v3749 = vadd.f32 0.0, %v3748
        %v3750 = vpop.f32.mrb[0].mxu0
        %3751 = vmatprep.mubr.bf16.mxu0 0
        %3752 = vmatmul.mubr.bf16.gmra.mrb[0].mxu0 %v3643
        %v3753 = vpop.f32.mrb[0].mxu0
        %v3754 = vadd.f32 0.0, %v3753
        %v3755 = vpop.f32.mrb[0].mxu0
        %v3756 = vpop.f32.mrb[0].mxu0
        %v3757 = vadd.f32 0.0, %v3756
        %v3758 = vpop.f32.mrb[0].mxu0
        %3759 = vmatprep.mubr.bf16.mxu0 0
        %3760 = vmatmul.mubr.bf16.gmra.mrb[0].mxu0 %v3644
        %v3761 = vpop.f32.mrb[0].mxu0
        %v3762 = vadd.f32 0.0, %v3761
        %v3763 = vpop.f32.mrb[0].mxu0
        %v3764 = vpop.f32.mrb[0].mxu0
        %v3765 = vadd.f32 0.0, %v3764
        %v3766 = vpop.f32.mrb[0].mxu0
        %3767 = vmatprep.mubr.bf16.mxu0 0
        %3768 = vmatmul.mubr.bf16.gmra.mrb[0].mxu0 %v3645
        %v3769 = vpop.f32.mrb[0].mxu0
        %v3770 = vadd.f32 0.0, %v3769
        %v3771 = vpop.f32.mrb[0].mxu0
        %v3772 = vpop.f32.mrb[0].mxu0
        %v3773 = vadd.f32 0.0, %v3772
        %v3774 = vpop.f32.mrb[0].mxu0
        %3775 = vdwg.mxu0
        %v3776 = vadd.f32 %v3628, %v3746
        %v3777 = vadd.f32 %v3629, %v3749
        %v3778 = vadd.f32 %v3630, %v3754
        %v3779 = vadd.f32 %v3631, %v3757
        %v3780 = vadd.f32 %v3632, %v3762
        %v3781 = vadd.f32 %v3633, %v3765
        %v3782 = vadd.f32 %v3634, %v3770
        %v3783 = vadd.f32 %v3635, %v3773
        %v3784 = vrot.slane %v2984, 2
        %v3785 = vrot.slane %v2985, 2
        %v3786 = vsel %vm535, %v3784, %v3785
        %v3788 = vpack.c.bf16 %v3328, %v3325
        %v3789 = vpack.c.bf16 %v3334, %v3331
        %v3790 = vpack.c.bf16 %v3340, %v3337
        %v3791 = vpack.c.bf16 %v3786, %v3343
        %s3792 = scalar_lea.vmem %s1, 1472
        %v3793 = vld [vmem:[%s3792] sm:$0xf]
        %v3794 = vld [vmem:[%s3792 + $0x4] sm:$0xf]
        %v3795 = vld [vmem:[%s3792 + $0x8] sm:$0xf]
        %v3796 = vld [vmem:[%s3792 + $0xc] sm:$0xf]
        %v3797 = vld [vmem:[%s3792 + $0x10] sm:$0xf]
        %v3798 = vld [vmem:[%s3792 + $0x14] sm:$0xf]
        %v3799 = vld [vmem:[%s3792 + $0x18] sm:$0xf]
        %v3800 = vld [vmem:[%s3792 + $0x1c] sm:$0xf]
        %v3801 = vld [vmem:[%s3792 + $0x20] sm:$0xf]
        %v3802 = vld [vmem:[%s3792 + $0x24] sm:$0xf]
        %v3803 = vld [vmem:[%s3792 + $0x28] sm:$0xf]
        %v3804 = vld [vmem:[%s3792 + $0x2c] sm:$0xf]
        %v3805 = vld [vmem:[%s3792 + $0x30] sm:$0xf]
        %v3806 = vld [vmem:[%s3792 + $0x34] sm:$0xf]
        %v3807 = vld [vmem:[%s3792 + $0x38] sm:$0xf]
        %v3808 = vld [vmem:[%s3792 + $0x3c] sm:$0xf]
        %v3825 = vunpack.c.l.b16 %v3793
        %v3826 = vunpack.c.l.b16 %v3794
        %v3827 = vunpack.c.l.b16 %v3795
        %v3828 = vunpack.c.l.b16 %v3796
        %v3829 = vunpack.c.l.b16 %v3797
        %v3830 = vunpack.c.l.b16 %v3798
        %v3831 = vunpack.c.l.b16 %v3799
        %v3832 = vunpack.c.l.b16 %v3800
        %v3833 = vunpack.c.l.b16 %v3801
        %v3834 = vunpack.c.l.b16 %v3802
        %v3835 = vunpack.c.l.b16 %v3803
        %v3836 = vunpack.c.l.b16 %v3804
        %v3837 = vunpack.c.l.b16 %v3805
        %v3838 = vunpack.c.l.b16 %v3806
        %v3839 = vunpack.c.l.b16 %v3807
        %v3840 = vunpack.c.l.b16 %v3808
        %v3841 = vpack.c.b16 %v3826, %v3825
        %v3842 = vpack.c.b16 %v3828, %v3827
        %v3843 = vpack.c.b16 %v3830, %v3829
        %v3844 = vpack.c.b16 %v3832, %v3831
        %v3845 = vpack.c.b16 %v3834, %v3833
        %v3846 = vpack.c.b16 %v3836, %v3835
        %v3847 = vpack.c.b16 %v3838, %v3837
        %v3848 = vpack.c.b16 %v3840, %v3839
        %3857 = vmatprep.subr.bf16.mxu0 0
        %3858 = vmatpush1.bf16.msra.mxu0 %v3841
        %3859 = vmatprep.subr.bf16.mxu0 0
        %3860 = vmatpush1.bf16.msra.mxu0 %v3842
        %3861 = vmatprep.subr.bf16.mxu0 0
        %3862 = vmatpush1.bf16.msra.mxu0 %v3843
        %3863 = vmatprep.subr.bf16.mxu0 0
        %3864 = vmatpush1.bf16.msra.mxu0 %v3844
        %3865 = vmatprep.subr.bf16.mxu0 0
        %3866 = vmatpush1.bf16.msra.mxu0 %v3845
        %3867 = vmatprep.subr.bf16.mxu0 0
        %3868 = vmatpush1.bf16.msra.mxu0 %v3846
        %3869 = vmatprep.subr.bf16.mxu0 0
        %3870 = vmatpush1.bf16.msra.mxu0 %v3847
        %3871 = vmatprep.subr.bf16.mxu0 0
        %3872 = vmatpush1.bf16.msra.mxu0 %v3848
        %3873 = vmatprep.subr.bf16.mxu0 0
        %3874 = vmatpush1.bf16.msra.mxu0 0
        %3875 = vmatprep.subr.bf16.mxu0 0
        %3876 = vmatpush1.bf16.msra.mxu0 0
        %3877 = vmatprep.subr.bf16.mxu0 0
        %3878 = vmatpush1.bf16.msra.mxu0 0
        %3879 = vmatprep.subr.bf16.mxu0 0
        %3880 = vmatpush1.bf16.msra.mxu0 0
        %3881 = vmatprep.subr.bf16.mxu0 0
        %3882 = vmatpush1.bf16.msra.mxu0 0
        %3883 = vmatprep.subr.bf16.mxu0 0
        %3884 = vmatpush1.bf16.msra.mxu0 0
        %3885 = vmatprep.subr.bf16.mxu0 0
        %3886 = vmatpush1.bf16.msra.mxu0 0
        %3887 = vmatprep.subr.bf16.mxu0 0
        %3888 = vmatpush1.bf16.msra.mxu0 0
        %3889 = vmatprep.mubr.bf16.mxu0 0
        %3890 = vmatmul.mubr.bf16.gmra.mrb[0].mxu0 %v3788
        %v3891 = vpop.f32.mrb[0].mxu0
        %v3892 = vadd.f32 0.0, %v3891
        %v3893 = vpop.f32.mrb[0].mxu0
        %v3894 = vpop.f32.mrb[0].mxu0
        %v3895 = vadd.f32 0.0, %v3894
        %v3896 = vpop.f32.mrb[0].mxu0
        %3897 = vmatprep.mubr.bf16.mxu0 0
        %3898 = vmatmul.mubr.bf16.gmra.mrb[0].mxu0 %v3789
        %v3899 = vpop.f32.mrb[0].mxu0
        %v3900 = vadd.f32 0.0, %v3899
        %v3901 = vpop.f32.mrb[0].mxu0
        %v3902 = vpop.f32.mrb[0].mxu0
        %v3903 = vadd.f32 0.0, %v3902
        %v3904 = vpop.f32.mrb[0].mxu0
        %3905 = vmatprep.mubr.bf16.mxu0 0
        %3906 = vmatmul.mubr.bf16.gmra.mrb[0].mxu0 %v3790
        %v3907 = vpop.f32.mrb[0].mxu0
        %v3908 = vadd.f32 0.0, %v3907
        %v3909 = vpop.f32.mrb[0].mxu0
        %v3910 = vpop.f32.mrb[0].mxu0
        %v3911 = vadd.f32 0.0, %v3910
        %v3912 = vpop.f32.mrb[0].mxu0
        %3913 = vmatprep.mubr.bf16.mxu0 0
        %3914 = vmatmul.mubr.bf16.gmra.mrb[0].mxu0 %v3791
        %v3915 = vpop.f32.mrb[0].mxu0
        %v3916 = vadd.f32 0.0, %v3915
        %v3917 = vpop.f32.mrb[0].mxu0
        %v3918 = vpop.f32.mrb[0].mxu0
        %v3919 = vadd.f32 0.0, %v3918
        %v3920 = vpop.f32.mrb[0].mxu0
        %3921 = vdwg.mxu0
        %v3922 = vadd.f32 %v3776, %v3892
        %v3923 = vadd.f32 %v3777, %v3895
        %v3924 = vadd.f32 %v3778, %v3900
        %v3925 = vadd.f32 %v3779, %v3903
        %v3926 = vadd.f32 %v3780, %v3908
        %v3927 = vadd.f32 %v3781, %v3911
        %v3928 = vadd.f32 %v3782, %v3916
        %v3929 = vadd.f32 %v3783, %v3919
        %v3930 = vpack.c.bf16 %v2986, %v2984
        %s3931 = scalar_lea.vmem %s1, 1536
        %v3932 = vld [vmem:[%s3931] sm:$0xf]
        %v3933 = vld [vmem:[%s3931 + $0x4] sm:$0xf]
        %v3934 = vld [vmem:[%s3931 + $0x8] sm:$0xf]
        %v3935 = vld [vmem:[%s3931 + $0xc] sm:$0xf]
        %v3936 = vld [vmem:[%s3931 + $0x10] sm:$0xf]
        %v3937 = vld [vmem:[%s3931 + $0x14] sm:$0xf]
        %v3938 = vld [vmem:[%s3931 + $0x18] sm:$0xf]
        %v3939 = vld [vmem:[%s3931 + $0x1c] sm:$0xf]
        %v3940 = vld [vmem:[%s3931 + $0x20] sm:$0xf]
        %v3941 = vld [vmem:[%s3931 + $0x24] sm:$0xf]
        %v3942 = vld [vmem:[%s3931 + $0x28] sm:$0xf]
        %v3943 = vld [vmem:[%s3931 + $0x2c] sm:$0xf]
        %v3944 = vld [vmem:[%s3931 + $0x30] sm:$0xf]
        %v3945 = vld [vmem:[%s3931 + $0x34] sm:$0xf]
        %v3946 = vld [vmem:[%s3931 + $0x38] sm:$0xf]
        %v3947 = vld [vmem:[%s3931 + $0x3c] sm:$0xf]
        %v3964 = vunpack.c.l.b16 %v3932
        %v3965 = vunpack.c.l.b16 %v3933
        %v3966 = vunpack.c.l.b16 %v3934
        %v3967 = vunpack.c.l.b16 %v3935
        %v3968 = vunpack.c.l.b16 %v3936
        %v3969 = vunpack.c.l.b16 %v3937
        %v3970 = vunpack.c.l.b16 %v3938
        %v3971 = vunpack.c.l.b16 %v3939
        %v3972 = vunpack.c.l.b16 %v3940
        %v3973 = vunpack.c.l.b16 %v3941
        %v3974 = vunpack.c.l.b16 %v3942
        %v3975 = vunpack.c.l.b16 %v3943
        %v3976 = vunpack.c.l.b16 %v3944
        %v3977 = vunpack.c.l.b16 %v3945
        %v3978 = vunpack.c.l.b16 %v3946
        %v3979 = vunpack.c.l.b16 %v3947
        %v3980 = vpack.c.b16 %v3965, %v3964
        %v3981 = vpack.c.b16 %v3967, %v3966
        %v3982 = vpack.c.b16 %v3969, %v3968
        %v3983 = vpack.c.b16 %v3971, %v3970
        %v3984 = vpack.c.b16 %v3973, %v3972
        %v3985 = vpack.c.b16 %v3975, %v3974
        %v3986 = vpack.c.b16 %v3977, %v3976
        %v3987 = vpack.c.b16 %v3979, %v3978
        %3996 = vmatprep.subr.bf16.mxu0 0
        %3997 = vmatpush1.bf16.msra.mxu0 %v3980
        %3998 = vmatprep.subr.bf16.mxu0 0
        %3999 = vmatpush1.bf16.msra.mxu0 %v3981
        %4000 = vmatprep.subr.bf16.mxu0 0
        %4001 = vmatpush1.bf16.msra.mxu0 %v3982
        %4002 = vmatprep.subr.bf16.mxu0 0
        %4003 = vmatpush1.bf16.msra.mxu0 %v3983
        %4004 = vmatprep.subr.bf16.mxu0 0
        %4005 = vmatpush1.bf16.msra.mxu0 %v3984
        %4006 = vmatprep.subr.bf16.mxu0 0
        %4007 = vmatpush1.bf16.msra.mxu0 %v3985
        %4008 = vmatprep.subr.bf16.mxu0 0
        %4009 = vmatpush1.bf16.msra.mxu0 %v3986
        %4010 = vmatprep.subr.bf16.mxu0 0
        %4011 = vmatpush1.bf16.msra.mxu0 %v3987
        %4012 = vmatprep.subr.bf16.mxu0 0
        %4013 = vmatpush1.bf16.msra.mxu0 0
        %4014 = vmatprep.subr.bf16.mxu0 0
        %4015 = vmatpush1.bf16.msra.mxu0 0
        %4016 = vmatprep.subr.bf16.mxu0 0
        %4017 = vmatpush1.bf16.msra.mxu0 0
        %4018 = vmatprep.subr.bf16.mxu0 0
        %4019 = vmatpush1.bf16.msra.mxu0 0
        %4020 = vmatprep.subr.bf16.mxu0 0
        %4021 = vmatpush1.bf16.msra.mxu0 0
        %4022 = vmatprep.subr.bf16.mxu0 0
        %4023 = vmatpush1.bf16.msra.mxu0 0
        %4024 = vmatprep.subr.bf16.mxu0 0
        %4025 = vmatpush1.bf16.msra.mxu0 0
        %4026 = vmatprep.subr.bf16.mxu0 0
        %4027 = vmatpush1.bf16.msra.mxu0 0
        %4028 = vmatprep.mubr.bf16.mxu0 0
        %4029 = vmatmul.mubr.bf16.gmra.mrb[0].mxu0 %v2989
        %v4030 = vpop.f32.mrb[0].mxu0
        %v4031 = vadd.f32 0.0, %v4030
        %v4032 = vpop.f32.mrb[0].mxu0
        %v4033 = vpop.f32.mrb[0].mxu0
        %v4034 = vadd.f32 0.0, %v4033
        %v4035 = vpop.f32.mrb[0].mxu0
        %4036 = vmatprep.mubr.bf16.mxu0 0
        %4037 = vmatmul.mubr.bf16.gmra.mrb[0].mxu0 %v2990
        %v4038 = vpop.f32.mrb[0].mxu0
        %v4039 = vadd.f32 0.0, %v4038
        %v4040 = vpop.f32.mrb[0].mxu0
        %v4041 = vpop.f32.mrb[0].mxu0
        %v4042 = vadd.f32 0.0, %v4041
        %v4043 = vpop.f32.mrb[0].mxu0
        %4044 = vmatprep.mubr.bf16.mxu0 0
        %4045 = vmatmul.mubr.bf16.gmra.mrb[0].mxu0 %v2991
        %v4046 = vpop.f32.mrb[0].mxu0
        %v4047 = vadd.f32 0.0, %v4046
        %v4048 = vpop.f32.mrb[0].mxu0
        %v4049 = vpop.f32.mrb[0].mxu0
        %v4050 = vadd.f32 0.0, %v4049
        %v4051 = vpop.f32.mrb[0].mxu0
        %4052 = vmatprep.mubr.bf16.mxu0 0
        %4053 = vmatmul.mubr.bf16.gmra.mrb[0].mxu0 %v3930
        %v4054 = vpop.f32.mrb[0].mxu0
        %v4055 = vadd.f32 0.0, %v4054
        %v4056 = vpop.f32.mrb[0].mxu0
        %v4057 = vpop.f32.mrb[0].mxu0
        %v4058 = vadd.f32 0.0, %v4057
        %v4059 = vpop.f32.mrb[0].mxu0
        %4060 = vdwg.mxu0
        %v4061 = vadd.f32 %v3922, %v4031
        %v4062 = vadd.f32 %v3923, %v4034
        %v4063 = vadd.f32 %v3924, %v4039
        %v4064 = vadd.f32 %v3925, %v4042
        %v4065 = vadd.f32 %v3926, %v4047
        %v4066 = vadd.f32 %v3927, %v4050
        %v4067 = vadd.f32 %v3928, %v4055
        %v4068 = vadd.f32 %v3929, %v4058
        %v4071 = vrot.slane %v2986, 1
        %v4072 = vrot.slane %v2987, 1
        %v4073 = vsel %vm255, %v4071, %v4072
        %v4075 = vpack.c.bf16 %v4073, %v3640
        %s4076 = scalar_lea.vmem %s1, 1600
        %v4077 = vld [vmem:[%s4076] sm:$0xf]
        %v4078 = vld [vmem:[%s4076 + $0x4] sm:$0xf]
        %v4079 = vld [vmem:[%s4076 + $0x8] sm:$0xf]
        %v4080 = vld [vmem:[%s4076 + $0xc] sm:$0xf]
        %v4081 = vld [vmem:[%s4076 + $0x10] sm:$0xf]
        %v4082 = vld [vmem:[%s4076 + $0x14] sm:$0xf]
        %v4083 = vld [vmem:[%s4076 + $0x18] sm:$0xf]
        %v4084 = vld [vmem:[%s4076 + $0x1c] sm:$0xf]
        %v4085 = vld [vmem:[%s4076 + $0x20] sm:$0xf]
        %v4086 = vld [vmem:[%s4076 + $0x24] sm:$0xf]
        %v4087 = vld [vmem:[%s4076 + $0x28] sm:$0xf]
        %v4088 = vld [vmem:[%s4076 + $0x2c] sm:$0xf]
        %v4089 = vld [vmem:[%s4076 + $0x30] sm:$0xf]
        %v4090 = vld [vmem:[%s4076 + $0x34] sm:$0xf]
        %v4091 = vld [vmem:[%s4076 + $0x38] sm:$0xf]
        %v4092 = vld [vmem:[%s4076 + $0x3c] sm:$0xf]
        %v4109 = vunpack.c.l.b16 %v4077
        %v4110 = vunpack.c.l.b16 %v4078
        %v4111 = vunpack.c.l.b16 %v4079
        %v4112 = vunpack.c.l.b16 %v4080
        %v4113 = vunpack.c.l.b16 %v4081
        %v4114 = vunpack.c.l.b16 %v4082
        %v4115 = vunpack.c.l.b16 %v4083
        %v4116 = vunpack.c.l.b16 %v4084
        %v4117 = vunpack.c.l.b16 %v4085
        %v4118 = vunpack.c.l.b16 %v4086
        %v4119 = vunpack.c.l.b16 %v4087
        %v4120 = vunpack.c.l.b16 %v4088
        %v4121 = vunpack.c.l.b16 %v4089
        %v4122 = vunpack.c.l.b16 %v4090
        %v4123 = vunpack.c.l.b16 %v4091
        %v4124 = vunpack.c.l.b16 %v4092
        %v4125 = vpack.c.b16 %v4110, %v4109
        %v4126 = vpack.c.b16 %v4112, %v4111
        %v4127 = vpack.c.b16 %v4114, %v4113
        %v4128 = vpack.c.b16 %v4116, %v4115
        %v4129 = vpack.c.b16 %v4118, %v4117
        %v4130 = vpack.c.b16 %v4120, %v4119
        %v4131 = vpack.c.b16 %v4122, %v4121
        %v4132 = vpack.c.b16 %v4124, %v4123
        %4141 = vmatprep.subr.bf16.mxu0 0
        %4142 = vmatpush1.bf16.msra.mxu0 %v4125
        %4143 = vmatprep.subr.bf16.mxu0 0
        %4144 = vmatpush1.bf16.msra.mxu0 %v4126
        %4145 = vmatprep.subr.bf16.mxu0 0
        %4146 = vmatpush1.bf16.msra.mxu0 %v4127
        %4147 = vmatprep.subr.bf16.mxu0 0
        %4148 = vmatpush1.bf16.msra.mxu0 %v4128
        %4149 = vmatprep.subr.bf16.mxu0 0
        %4150 = vmatpush1.bf16.msra.mxu0 %v4129
        %4151 = vmatprep.subr.bf16.mxu0 0
        %4152 = vmatpush1.bf16.msra.mxu0 %v4130
        %4153 = vmatprep.subr.bf16.mxu0 0
        %4154 = vmatpush1.bf16.msra.mxu0 %v4131
        %4155 = vmatprep.subr.bf16.mxu0 0
        %4156 = vmatpush1.bf16.msra.mxu0 %v4132
        %4157 = vmatprep.subr.bf16.mxu0 0
        %4158 = vmatpush1.bf16.msra.mxu0 0
        %4159 = vmatprep.subr.bf16.mxu0 0
        %4160 = vmatpush1.bf16.msra.mxu0 0
        %4161 = vmatprep.subr.bf16.mxu0 0
        %4162 = vmatpush1.bf16.msra.mxu0 0
        %4163 = vmatprep.subr.bf16.mxu0 0
        %4164 = vmatpush1.bf16.msra.mxu0 0
        %4165 = vmatprep.subr.bf16.mxu0 0
        %4166 = vmatpush1.bf16.msra.mxu0 0
        %4167 = vmatprep.subr.bf16.mxu0 0
        %4168 = vmatpush1.bf16.msra.mxu0 0
        %4169 = vmatprep.subr.bf16.mxu0 0
        %4170 = vmatpush1.bf16.msra.mxu0 0
        %4171 = vmatprep.subr.bf16.mxu0 0
        %4172 = vmatpush1.bf16.msra.mxu0 0
        %4173 = vmatprep.mubr.bf16.mxu0 0
        %4174 = vmatmul.mubr.bf16.gmra.mrb[0].mxu0 %v3179
        %v4175 = vpop.f32.mrb[0].mxu0
        %v4176 = vadd.f32 0.0, %v4175
        %v4177 = vpop.f32.mrb[0].mxu0
        %v4178 = vpop.f32.mrb[0].mxu0
        %v4179 = vadd.f32 0.0, %v4178
        %v4180 = vpop.f32.mrb[0].mxu0
        %4181 = vmatprep.mubr.bf16.mxu0 0
        %4182 = vmatmul.mubr.bf16.gmra.mrb[0].mxu0 %v3180
        %v4183 = vpop.f32.mrb[0].mxu0
        %v4184 = vadd.f32 0.0, %v4183
        %v4185 = vpop.f32.mrb[0].mxu0
        %v4186 = vpop.f32.mrb[0].mxu0
        %v4187 = vadd.f32 0.0, %v4186
        %v4188 = vpop.f32.mrb[0].mxu0
        %4189 = vmatprep.mubr.bf16.mxu0 0
        %4190 = vmatmul.mubr.bf16.gmra.mrb[0].mxu0 %v3181
        %v4191 = vpop.f32.mrb[0].mxu0
        %v4192 = vadd.f32 0.0, %v4191
        %v4193 = vpop.f32.mrb[0].mxu0
        %v4194 = vpop.f32.mrb[0].mxu0
        %v4195 = vadd.f32 0.0, %v4194
        %v4196 = vpop.f32.mrb[0].mxu0
        %4197 = vmatprep.mubr.bf16.mxu0 0
        %4198 = vmatmul.mubr.bf16.gmra.mrb[0].mxu0 %v4075
        %v4199 = vpop.f32.mrb[0].mxu0
        %v4200 = vadd.f32 0.0, %v4199
        %v4201 = vpop.f32.mrb[0].mxu0
        %v4202 = vpop.f32.mrb[0].mxu0
        %v4203 = vadd.f32 0.0, %v4202
        %v4204 = vpop.f32.mrb[0].mxu0
        %4205 = vdwg.mxu0
        %v4206 = vadd.f32 %v4061, %v4176
        %v4207 = vadd.f32 %v4062, %v4179
        %v4208 = vadd.f32 %v4063, %v4184
        %v4209 = vadd.f32 %v4064, %v4187
        %v4210 = vadd.f32 %v4065, %v4192
        %v4211 = vadd.f32 %v4066, %v4195
        %v4212 = vadd.f32 %v4067, %v4200
        %v4213 = vadd.f32 %v4068, %v4203
        %v4214 = vrot.slane %v2986, 2
        %v4215 = vrot.slane %v2987, 2
        %v4216 = vsel %vm535, %v4214, %v4215
        %v4218 = vpack.c.bf16 %v4216, %v3786
        %s4219 = scalar_lea.vmem %s1, 1664
        %v4220 = vld [vmem:[%s4219] sm:$0xf]
        %v4221 = vld [vmem:[%s4219 + $0x4] sm:$0xf]
        %v4222 = vld [vmem:[%s4219 + $0x8] sm:$0xf]
        %v4223 = vld [vmem:[%s4219 + $0xc] sm:$0xf]
        %v4224 = vld [vmem:[%s4219 + $0x10] sm:$0xf]
        %v4225 = vld [vmem:[%s4219 + $0x14] sm:$0xf]
        %v4226 = vld [vmem:[%s4219 + $0x18] sm:$0xf]
        %v4227 = vld [vmem:[%s4219 + $0x1c] sm:$0xf]
        %v4228 = vld [vmem:[%s4219 + $0x20] sm:$0xf]
        %v4229 = vld [vmem:[%s4219 + $0x24] sm:$0xf]
        %v4230 = vld [vmem:[%s4219 + $0x28] sm:$0xf]
        %v4231 = vld [vmem:[%s4219 + $0x2c] sm:$0xf]
        %v4232 = vld [vmem:[%s4219 + $0x30] sm:$0xf]
        %v4233 = vld [vmem:[%s4219 + $0x34] sm:$0xf]
        %v4234 = vld [vmem:[%s4219 + $0x38] sm:$0xf]
        %v4235 = vld [vmem:[%s4219 + $0x3c] sm:$0xf]
        %v4252 = vunpack.c.l.b16 %v4220
        %v4253 = vunpack.c.l.b16 %v4221
        %v4254 = vunpack.c.l.b16 %v4222
        %v4255 = vunpack.c.l.b16 %v4223
        %v4256 = vunpack.c.l.b16 %v4224
        %v4257 = vunpack.c.l.b16 %v4225
        %v4258 = vunpack.c.l.b16 %v4226
        %v4259 = vunpack.c.l.b16 %v4227
        %v4260 = vunpack.c.l.b16 %v4228
        %v4261 = vunpack.c.l.b16 %v4229
        %v4262 = vunpack.c.l.b16 %v4230
        %v4263 = vunpack.c.l.b16 %v4231
        %v4264 = vunpack.c.l.b16 %v4232
        %v4265 = vunpack.c.l.b16 %v4233
        %v4266 = vunpack.c.l.b16 %v4234
        %v4267 = vunpack.c.l.b16 %v4235
        %v4268 = vpack.c.b16 %v4253, %v4252
        %v4269 = vpack.c.b16 %v4255, %v4254
        %v4270 = vpack.c.b16 %v4257, %v4256
        %v4271 = vpack.c.b16 %v4259, %v4258
        %v4272 = vpack.c.b16 %v4261, %v4260
        %v4273 = vpack.c.b16 %v4263, %v4262
        %v4274 = vpack.c.b16 %v4265, %v4264
        %v4275 = vpack.c.b16 %v4267, %v4266
        %4284 = vmatprep.subr.bf16.mxu0 0
        %4285 = vmatpush1.bf16.msra.mxu0 %v4268
        %4286 = vmatprep.subr.bf16.mxu0 0
        %4287 = vmatpush1.bf16.msra.mxu0 %v4269
        %4288 = vmatprep.subr.bf16.mxu0 0
        %4289 = vmatpush1.bf16.msra.mxu0 %v4270
        %4290 = vmatprep.subr.bf16.mxu0 0
        %4291 = vmatpush1.bf16.msra.mxu0 %v4271
        %4292 = vmatprep.subr.bf16.mxu0 0
        %4293 = vmatpush1.bf16.msra.mxu0 %v4272
        %4294 = vmatprep.subr.bf16.mxu0 0
        %4295 = vmatpush1.bf16.msra.mxu0 %v4273
        %4296 = vmatprep.subr.bf16.mxu0 0
        %4297 = vmatpush1.bf16.msra.mxu0 %v4274
        %4298 = vmatprep.subr.bf16.mxu0 0
        %4299 = vmatpush1.bf16.msra.mxu0 %v4275
        %4300 = vmatprep.subr.bf16.mxu0 0
        %4301 = vmatpush1.bf16.msra.mxu0 0
        %4302 = vmatprep.subr.bf16.mxu0 0
        %4303 = vmatpush1.bf16.msra.mxu0 0
        %4304 = vmatprep.subr.bf16.mxu0 0
        %4305 = vmatpush1.bf16.msra.mxu0 0
        %4306 = vmatprep.subr.bf16.mxu0 0
        %4307 = vmatpush1.bf16.msra.mxu0 0
        %4308 = vmatprep.subr.bf16.mxu0 0
        %4309 = vmatpush1.bf16.msra.mxu0 0
        %4310 = vmatprep.subr.bf16.mxu0 0
        %4311 = vmatpush1.bf16.msra.mxu0 0
        %4312 = vmatprep.subr.bf16.mxu0 0
        %4313 = vmatpush1.bf16.msra.mxu0 0
        %4314 = vmatprep.subr.bf16.mxu0 0
        %4315 = vmatpush1.bf16.msra.mxu0 0
        %4316 = vmatprep.mubr.bf16.mxu0 0
        %4317 = vmatmul.mubr.bf16.gmra.mrb[0].mxu0 %v3353
        %v4318 = vpop.f32.mrb[0].mxu0
        %v4319 = vadd.f32 0.0, %v4318
        %v4320 = vpop.f32.mrb[0].mxu0
        %v4321 = vpop.f32.mrb[0].mxu0
        %v4322 = vadd.f32 0.0, %v4321
        %v4323 = vpop.f32.mrb[0].mxu0
        %4324 = vmatprep.mubr.bf16.mxu0 0
        %4325 = vmatmul.mubr.bf16.gmra.mrb[0].mxu0 %v3354
        %v4326 = vpop.f32.mrb[0].mxu0
        %v4327 = vadd.f32 0.0, %v4326
        %v4328 = vpop.f32.mrb[0].mxu0
        %v4329 = vpop.f32.mrb[0].mxu0
        %v4330 = vadd.f32 0.0, %v4329
        %v4331 = vpop.f32.mrb[0].mxu0
        %4332 = vmatprep.mubr.bf16.mxu0 0
        %4333 = vmatmul.mubr.bf16.gmra.mrb[0].mxu0 %v3355
        %v4334 = vpop.f32.mrb[0].mxu0
        %v4335 = vadd.f32 0.0, %v4334
        %v4336 = vpop.f32.mrb[0].mxu0
        %v4337 = vpop.f32.mrb[0].mxu0
        %v4338 = vadd.f32 0.0, %v4337
        %v4339 = vpop.f32.mrb[0].mxu0
        %4340 = vmatprep.mubr.bf16.mxu0 0
        %4341 = vmatmul.mubr.bf16.gmra.mrb[0].mxu0 %v4218
        %v4342 = vpop.f32.mrb[0].mxu0
        %v4343 = vadd.f32 0.0, %v4342
        %v4344 = vpop.f32.mrb[0].mxu0
        %v4345 = vpop.f32.mrb[0].mxu0
        %v4346 = vadd.f32 0.0, %v4345
        %v4347 = vpop.f32.mrb[0].mxu0
        %4348 = vdwg.mxu0
        %v4349 = vadd.f32 %v4206, %v4319
        %v4350 = vadd.f32 %v4207, %v4322
        %v4351 = vadd.f32 %v4208, %v4327
        %v4352 = vadd.f32 %v4209, %v4330
        %v4353 = vadd.f32 %v4210, %v4335
        %v4354 = vadd.f32 %v4211, %v4338
        %v4355 = vadd.f32 %v4212, %v4343
        %v4356 = vadd.f32 %v4213, %v4346
        %4357 = vst [vmem:[%s183] sm:$0xff] %v4349
        %4358 = vst [vmem:[%s183 + $0x8] sm:$0xff] %v4350
        %4359 = vst [vmem:[%s183 + $0x10] sm:$0xff] %v4351
        %4360 = vst [vmem:[%s183 + $0x18] sm:$0xff] %v4352
        %4361 = vst [vmem:[%s183 + $0x20] sm:$0xff] %v4353
        %4362 = vst [vmem:[%s183 + $0x28] sm:$0xff] %v4354
        %4363 = vst [vmem:[%s183 + $0x30] sm:$0xff] %v4355
        %4364 = vst [vmem:[%s183 + $0x38] sm:$0xff] %v4356
        %v4365 = vadd.f32 %v4349, %v4350
        %v4366 = vadd.f32 %v4365, %v4351
        %v4367 = vadd.f32 %v4366, %v4352
        %v4368 = vadd.f32 %v4367, %v4353
        %v4369 = vadd.f32 %v4368, %v4354
        %v4370 = vadd.f32 %v4369, %v4355
        %v4371 = vadd.f32 %v4370, %v4356
        %v4372 = vrot.slane %v4371, 4
        %v4373 = vadd.f32 %v4371, %v4372
        %v4374 = vrot.slane %v4373, 2
        %v4375 = vadd.f32 %v4373, %v4374
        %v4376 = vrot.slane %v4375, 1
        %v4377 = vadd.f32 %v4375, %v4376
        %4378 = vst [vmem:[%s190] sm:$0x1] %v4377
        %v4379 = vmul.f32 %v4349, %v4349
        %v4380 = vmul.f32 %v4350, %v4350
        %v4381 = vmul.f32 %v4351, %v4351
        %v4382 = vmul.f32 %v4352, %v4352
        %v4383 = vmul.f32 %v4353, %v4353
        %v4384 = vmul.f32 %v4354, %v4354
        %v4385 = vmul.f32 %v4355, %v4355
        %v4386 = vmul.f32 %v4356, %v4356
        %v4387 = vadd.f32 %v4379, %v4380
        %v4388 = vadd.f32 %v4387, %v4381
        %v4389 = vadd.f32 %v4388, %v4382
        %v4390 = vadd.f32 %v4389, %v4383
        %v4391 = vadd.f32 %v4390, %v4384
        %v4392 = vadd.f32 %v4391, %v4385
        %v4393 = vadd.f32 %v4392, %v4386
        %v4394 = vrot.slane %v4393, 4
        %v4395 = vadd.f32 %v4393, %v4394
        %v4396 = vrot.slane %v4395, 2
        %v4397 = vadd.f32 %v4395, %v4396
        %v4398 = vrot.slane %v4397, 1
        %v4399 = vadd.f32 %v4397, %v4398
        %4400 = vst [vmem:[%s190 + $0x1] sm:$0x1] %v4399
        %s4401 = sand.u32 %s90, 1
        %s4402 = scalar_lea.sflag [#allocation3], %s4401
        %s4403 = sand.u32 %s90, 1
        %s4404 = smul.addr %s4403, 64
        %s4405 = scalar_lea.vmem [#allocation2], %s4404
        %s4406 = sand.u32 %s118, 1
        %s4407 = scalar_lea.sflag [#allocation5], %s4406
        %s4408 = sand.u32 %s118, 1
        %s4409 = smul.addr %s4408, 2
        %s4410 = scalar_lea.vmem [#allocation4], %s4409
        // Predicated region
        $region29: #{tpu_custom_call.1} parent=27 // pred_check
          %p4411 = pneg %p100
        $region30: #{tpu_custom_call.1} parent=27 // pred_check_branch
          %4413 = sbr.rel (%p4411) target = $region32
        $region31: #{tpu_custom_call.1} parent=27 // pred_region
          %s4415 = ssub.s32 1024, 1024
          %4416 = vsyncadd %s4402, %s4415
          %s4417 = smul.addr %s26, 8
          %s4418 = smul.addr %s25, 32
          %s4419 = sadd.s32 %s4417, %s4418
          %s4420 = smul.addr %s4419, 128
          %s4421 = scalar_lea.hbm %s2, %s4420
          %s4422 = sshll.u32 %s4405, 4
          %s4423 = int_to_ptr.vmem [resolvable:$true] %s4422
          %4428 = dma.vmem_to_hbm [thread:$0]  %s4423, 1024, %s4421, %s4402, 128, 128, 8
        $region32: #{tpu_custom_call.1} parent=27 // pred_fallthru
          _
        // Predicated region
        $region33: #{tpu_custom_call.1} parent=27 // pred_check
          %p4429 = pneg %p128
        $region34: #{tpu_custom_call.1} parent=27 // pred_check_branch
          %4431 = sbr.rel (%p4429) target = $region36
        $region35: #{tpu_custom_call.1} parent=27 // pred_region
          %s4433 = ssub.s32 32, 32
          %4434 = vsyncadd %s4407, %s4433
          %s4435 = smul.addr %s25, 4
          %s4436 = sadd.s32 %s26, %s4435
          %s4437 = smul.addr %s4436, 32
          %s4438 = scalar_lea.hbm %s3, %s4437
          %s4440 = sshll.u32 %s4410, 4
          %s4441 = int_to_ptr.vmem [resolvable:$true] %s4440
          %4443 = dma.vmem_to_hbm [thread:$0]  %s4441, 32, %s4438, %s4407
        $region36: #{tpu_custom_call.1} parent=27 // pred_fallthru
          _
      $region28: #{tpu_custom_call.1} parent=5 // pred_fallthru
        _
      %p4444 = scmp.le.s32.totalorder 2, %s16
      // Predicated region
      $region37: #{tpu_custom_call.1} parent=5 // pred_check
        %p4445 = pneg %p4444
      $region38: #{tpu_custom_call.1} parent=5 // pred_check_branch
        %4447 = sbr.rel (%p4445) target = $region40
      $region39: #{tpu_custom_call.1} parent=5 // pred_region
        %s4448 = ssub.s32 %s16, 2
        // Predicated region
        $region41: #{tpu_custom_call.1} parent=39 // pred_check
          %p4449 = pneg %p106
        $region42: #{tpu_custom_call.1} parent=39 // pred_check_branch
          %4451 = sbr.rel (%p4449) target = $region44
        $region43: #{tpu_custom_call.1} parent=39 // pred_region
          %s4452 = sand.u32 %s91, 1
          %s4453 = scalar_lea.sflag [#allocation3], %s4452
          %s4454 = sand.u32 %s91, 1
          %s4455 = smul.addr %s4454, 64
          %s4456 = scalar_lea.vmem [#allocation2], %s4455
          %4457 = dma.done %s4453, 1024
        $region44: #{tpu_custom_call.1} parent=39 // pred_fallthru
          _
        // Predicated region
        $region45: #{tpu_custom_call.1} parent=39 // pred_check
          %p4458 = pneg %p134
        $region46: #{tpu_custom_call.1} parent=39 // pred_check_branch
          %4460 = sbr.rel (%p4458) target = $region48
        $region47: #{tpu_custom_call.1} parent=39 // pred_region
          %s4461 = sand.u32 %s119, 1
          %s4462 = scalar_lea.sflag [#allocation5], %s4461
          %s4463 = sand.u32 %s119, 1
          %s4464 = smul.addr %s4463, 2
          %s4465 = scalar_lea.vmem [#allocation4], %s4464
          %4466 = dma.done %s4462, 32
        $region48: #{tpu_custom_call.1} parent=39 // pred_fallthru
          _
      $region40: #{tpu_custom_call.1} parent=5 // pred_fallthru
        _
    $region6: #{tpu_custom_call.1} parent=1 // loop_footer
      %s20 = sadd.s32 1, %s16
    $region7: #{tpu_custom_call.1} parent=1 // loop_footer_branch
      %15 = sbr.rel target = $region3
    $region8: #{tpu_custom_call.1} parent=1 // loop_exit
      _
    %4467 = vsyncpa [#allocation3], 1
    %s4468 = scalar_lea.sflag [#allocation3], 1
    %4469 = vsyncpa %s4468, 1
    %4470 = vsyncpa [#allocation5], 1
    %s4471 = scalar_lea.sflag [#allocation5], 1
    %4472 = vsyncpa %s4471, 1

</llo_original>
